<compile_context>
chip_gen: v7x
topology: tpu7x:2x2x1
jax: 0.10.0
libtpu: 0.0.40
codegen_flags: <defaults>
</compile_context>

<pallas_src>
import functools

import jax
import jax.numpy as jnp
from jax.experimental import pallas as pl
from jax.experimental.pallas import tpu as pltpu

NCLS_PAD = 128  # lane-padded class dimension used inside the kernel


def lstm_kernel(emb_ref, len_ref, wih_ref, b_ref, whh_ref, wout_ref, bout_ref,
                out_ref, gx_ref, *, hidden_dim, seq_len):
    H = hidden_dim
    T = seq_len
    B = emb_ref.shape[1]
    E = emb_ref.shape[2]

    # ---- Pre-pass: input projection for all timesteps in one bf16 MXU matmul
    # (f32 accumulation).  (T, B, E) -> (T*B, E) is a layout no-op on the f32 input
    # (B % 8 == 0 sublane tile, E lane-aligned); the bf16 cast happens after the
    # reshape, at the dot call site.  Gate order is PyTorch's i, f, g, o; the i/f/o
    # columns of W_ih^T / W_hh^T / bias were pre-scaled by 0.5 in the wrapper.
    x_all = emb_ref[...].reshape(T * B, E).astype(jnp.bfloat16)
    gx_ref[...] = (jnp.dot(x_all, wih_ref[...],
                           preferred_element_type=jnp.float32)
                   + b_ref[...]).reshape(T, B, 4 * H)            # f32 scratch

    lengths = len_ref[...]          # (B, 1) int32, loaded once

    def step(t, carry):
        h, c = carry                # f32 state; elementwise math stays f32 (v5e-safe)
        # Recurrent matmul: bf16 LHS cast at the call site; RHS read from the VMEM
        # ref *inside* the step so it is streamed per-matmul instead of living in
        # vregs (a hoisted f32 (256,1024) value is the entire register file).
        gates = gx_ref[t] + jnp.dot(h.astype(jnp.bfloat16), whh_ref[...],
                                    preferred_element_type=jnp.float32)
        # sigmoid(x) == 0.5*tanh(0.5*x) + 0.5; the inner 0.5*x is folded into weights.
        i_g = 0.5 * jnp.tanh(gates[:, 0:H]) + 0.5
        f_g = 0.5 * jnp.tanh(gates[:, H:2 * H]) + 0.5
        g_g = jnp.tanh(gates[:, 2 * H:3 * H])
        o_g = 0.5 * jnp.tanh(gates[:, 3 * H:4 * H]) + 0.5
        c_new = f_g * c + i_g * g_g
        h_new = o_g * jnp.tanh(c_new)
        valid = t < lengths                      # (B, 1) bool; freeze past true length
        return (jnp.where(valid, h_new, h), jnp.where(valid, c_new, c))

    h0 = jnp.zeros((B, H), jnp.float32)
    c0 = jnp.zeros((B, H), jnp.float32)
    h_last, _ = jax.lax.fori_loop(0, T, step, (h0, c0), unroll=True)

    # ---- Output head + log_softmax over the lane-padded class dim.
    logits = (jnp.dot(h_last.astype(jnp.bfloat16), wout_ref[...],
                      preferred_element_type=jnp.float32)
              + bout_ref[...])                   # (B, NCLS_PAD); pad cols = -1e30
    mx = jnp.max(logits, axis=-1, keepdims=True)
    sh = logits - mx
    lse = jnp.log(jnp.sum(jnp.exp(sh), axis=-1, keepdims=True))
    out_ref[...] = sh - lse


def lstm_forward(params, token_ids, lengths):
    """Pallas equivalent of LSTM.forward(inputs, lengths)."""
    emb_table = params["embedding"]          # (V, E)
    w_ih = params["w_ih"]                    # (4H, E)
    w_hh = params["w_hh"]                    # (4H, H)
    bias = params["b_ih"] + params["b_hh"]   # (4H,)
    w_out = params["w_out"]                  # (C, H)
    b_out = params["b_out"]                  # (C,)

    num_class, H = w_out.shape
    E = w_ih.shape[1]
    B, T = token_ids.shape

    # Glue (layout plumbing only): embedding gather, time-major, f32 (cast to bf16
    # inside the kernel after the layout-no-op reshape).
    emb = emb_table[token_ids.T].astype(jnp.float32)      # (T, B, E)
    len_col = lengths.astype(jnp.int32).reshape(B, 1)     # (B, 1)

    # Fold the sigmoid pre-scale (0.5) into the i/f/o gate columns (gate order
    # i, f, g, o).  0.5 is a power of two so this is exact, also after the bf16 cast.
    gate_scale = jnp.concatenate(
        [jnp.full((2 * H,), 0.5), jnp.ones((H,)), jnp.full((H,), 0.5)]
    ).astype(jnp.float32)                                                # (4H,)
    wih_t = (w_ih.T * gate_scale[None, :]).astype(jnp.bfloat16)          # (E, 4H)
    whh_t = (w_hh.T * gate_scale[None, :]).astype(jnp.bfloat16)          # (H, 4H)
    b_row = (bias * gate_scale).astype(jnp.float32)[None, :]             # (1, 4H)

    wout_pad = (jnp.zeros((H, NCLS_PAD), jnp.float32)
                .at[:, :num_class].set(w_out.T)).astype(jnp.bfloat16)    # (H, 128)
    bout_pad = jnp.full((1, NCLS_PAD), -1e30, jnp.float32).at[0, :num_class].set(b_out)

    # Batch is a tiled "parallel" grid axis (one tile at B=8).  For large-batch
    # inference raise B_TILE to >=128 (v5e) / >=256 (v6e/v7x), and split into two
    # tiles on v7x so both TensorCores get work; re-budget the f32 gx scratch
    # (T*B_TILE*4H*4 bytes) against vmem_limit_bytes when doing so.
    B_TILE = B
    assert B % B_TILE == 0 and B_TILE % 8 == 0
    # TODO(synk): weight-stationary MXU driving (pltpu.matmul_push_rhs /
    # matmul_acc_lhs) to amortize W_hh across the 12 unrolled steps when the batch
    # tile stays tiny (M=8); verify staging capacity in the bundle dump first.
    # TODO(synk): with grid=(1,) weight double-buffering is ~1.7 MiB of dead VMEM;
    # switch the five weight/bias BlockSpecs to pipeline_mode=pl.Buffered(1) once
    # B_TILE / grid are scaled up and VMEM actually becomes tight.

    grid_spec = pltpu.PrefetchScalarGridSpec(
        num_scalar_prefetch=0,
        grid=(B // B_TILE,),
        in_specs=[
            pl.BlockSpec((T, B_TILE, E), lambda b: (0, b, 0)),     # embeddings (f32)
            pl.BlockSpec((B_TILE, 1), lambda b: (b, 0)),           # lengths
            pl.BlockSpec((E, 4 * H), lambda b: (0, 0)),            # W_ih^T (bf16, scaled)
            pl.BlockSpec((1, 4 * H), lambda b: (0, 0)),            # bias   (f32, scaled)
            pl.BlockSpec((H, 4 * H), lambda b: (0, 0)),            # W_hh^T (bf16, scaled)
            pl.BlockSpec((H, NCLS_PAD), lambda b: (0, 0)),         # W_out^T (bf16, padded)
            pl.BlockSpec((1, NCLS_PAD), lambda b: (0, 0)),         # b_out   (f32, padded)
        ],
        out_specs=pl.BlockSpec((B_TILE, NCLS_PAD), lambda b: (b, 0)),
        scratch_shapes=[
            pltpu.VMEM((T, B_TILE, 4 * H), jnp.float32),   # precomputed x-projection
        ],
    )

    out_pad = pl.pallas_call(
        functools.partial(lstm_kernel, hidden_dim=H, seq_len=T),
        out_shape=jax.ShapeDtypeStruct((B, NCLS_PAD), jnp.float32),
        grid_spec=grid_spec,
        compiler_params=pltpu.CompilerParams(
            dimension_semantics=("parallel",),
            vmem_limit_bytes=32 * 1024 * 1024),
    )(emb, len_col, wih_t, b_row, whh_t, wout_pad, bout_pad)

    return out_pad[:, :num_class]            # (B, num_class) log-probs


def reference_forward(params, token_ids, lengths):
    """Pure-JAX f32 reference reproducing the PyTorch forward semantics."""
    emb = params["embedding"][token_ids].astype(jnp.float32)  # (B, T, E)
    B, T, _ = emb.shape
    w_ih, w_hh = params["w_ih"], params["w_hh"]
    bias = params["b_ih"] + params["b_hh"]
    H = w_hh.shape[1]

    def step(carry, inp):
        h, c = carry
        xt, mt = inp
        gates = xt @ w_ih.T + h @ w_hh.T + bias
        i = jax.nn.sigmoid(gates[:, :H])
        f = jax.nn.sigmoid(gates[:, H:2 * H])
        g = jnp.tanh(gates[:, 2 * H:3 * H])
        o = jax.nn.sigmoid(gates[:, 3 * H:])
        c_new = f * c + i * g
        h_new = o * jnp.tanh(c_new)
        m = mt[:, None]
        return (m * h_new + (1 - m) * h, m * c_new + (1 - m) * c), None

    mask = (jnp.arange(T)[None, :] < lengths[:, None]).astype(jnp.float32)  # (B, T)
    h0 = jnp.zeros((B, H), jnp.float32)
    (h_last, _), _ = jax.lax.scan(
        step, (h0, h0), (jnp.swapaxes(emb, 0, 1), jnp.swapaxes(mask, 0, 1)))
    logits = h_last @ params["w_out"].T + params["b_out"]
    return jax.nn.log_softmax(logits, axis=-1)


def init_params(key, vocab_size, embedding_dim, hidden_dim, num_class):
    ks = jax.random.split(key, 7)
    bound = 1.0 / jnp.sqrt(hidden_dim)
    u = lambda k, shape: jax.random.uniform(k, shape, jnp.float32, -bound, bound)
    return {
        "embedding": jax.random.normal(ks[0], (vocab_size, embedding_dim), jnp.float32),
        "w_ih": u(ks[1], (4 * hidden_dim, embedding_dim)),
        "w_hh": u(ks[2], (4 * hidden_dim, hidden_dim)),
        "b_ih": u(ks[3], (4 * hidden_dim,)),
        "b_hh": u(ks[4], (4 * hidden_dim,)),
        "w_out": u(ks[5], (num_class, hidden_dim)),
        "b_out": u(ks[6], (num_class,)),
    }


if __name__ == "__main__":
    vocab_size = 100
    embedding_dim = 128
    hidden_dim = 256
    num_class = 2
    B, T = 8, 12

    key = jax.random.PRNGKey(0)
    k_par, k_tok, k_len = jax.random.split(key, 3)

    params = init_params(k_par, vocab_size, embedding_dim, hidden_dim, num_class)
    token_ids = jax.random.randint(k_tok, (B, T), 0, vocab_size, dtype=jnp.int32)
    lengths = jax.random.randint(k_len, (B,), 3, T + 1, dtype=jnp.int32)

    run = jax.jit(lstm_forward)
    log_probs = jax.block_until_ready(run(params, token_ids, lengths))
    ref = jax.block_until_ready(reference_forward(params, token_ids, lengths))

    assert log_probs.shape == (B, num_class)
    # bf16 MXU operands (f32 accumulation) => looser tolerance vs the f32 reference.
    assert jnp.allclose(log_probs, ref, atol=5e-2, rtol=5e-2), (
        f"max abs err {jnp.max(jnp.abs(log_probs - ref))}")
    print("KERNEL_OK")
</pallas_src>

<mosaic_0001>
module attributes {stable_mosaic.version = 11 : i64} {
  func.func @lstm_kernel(%arg0: i32, %arg1: memref<12x8x128xf32, #tpu.memory_space<vmem>>, %arg2: memref<8x1xi32, #tpu.memory_space<vmem>>, %arg3: memref<128x1024xbf16, #tpu.memory_space<vmem>>, %arg4: memref<1x1024xf32, #tpu.memory_space<vmem>>, %arg5: memref<256x1024xbf16, #tpu.memory_space<vmem>>, %arg6: memref<256x128xbf16, #tpu.memory_space<vmem>>, %arg7: memref<1x128xf32, #tpu.memory_space<vmem>>, %arg8: memref<8x128xf32, #tpu.memory_space<vmem>>, %arg9: memref<12x8x1024xf32, #tpu.memory_space<vmem>>) attributes {dimension_semantics = [#tpu.dimension_semantics<parallel>], iteration_bounds = array<i64: 1>, scalar_prefetch = 0 : i64, scratch_operands = 1 : i64, tpu.core_type = #tpu.core_type<tc>, window_params = [{transform_indices = @transform_0, window_bounds = array<i64: 12, 8, 128>}, {transform_indices = @transform_1, window_bounds = array<i64: 8, 1>}, {pipeline_mode = #tpu.pipeline_mode<synchronous>, transform_indices = @transform_2, window_bounds = array<i64: 128, 1024>}, {pipeline_mode = #tpu.pipeline_mode<synchronous>, transform_indices = @transform_3, window_bounds = array<i64: 1, 1024>}, {pipeline_mode = #tpu.pipeline_mode<synchronous>, transform_indices = @transform_4, window_bounds = array<i64: 256, 1024>}, {pipeline_mode = #tpu.pipeline_mode<synchronous>, transform_indices = @transform_5, window_bounds = array<i64: 256, 128>}, {pipeline_mode = #tpu.pipeline_mode<synchronous>, transform_indices = @transform_6, window_bounds = array<i64: 1, 128>}, {transform_indices = @transform_7, window_bounds = array<i64: 8, 128>}]} {
    %c0 = arith.constant 0 : index
    %c0_0 = arith.constant 0 : index
    %c0_1 = arith.constant 0 : index
    %0 = vector.load %arg1[%c0, %c0_0, %c0_1] : memref<12x8x128xf32, #tpu.memory_space<vmem>>, vector<12x8x128xf32>
    %1 = vector.shape_cast %0 : vector<12x8x128xf32> to vector<96x128xf32>
    %2 = arith.truncf %1 : vector<96x128xf32> to vector<96x128xbf16>
    %c0_2 = arith.constant 0 : index
    %c0_3 = arith.constant 0 : index
    %3 = vector.load %arg3[%c0_2, %c0_3] : memref<128x1024xbf16, #tpu.memory_space<vmem>>, vector<128x1024xbf16>
    %cst = arith.constant dense<0.000000e+00> : vector<96x1024xf32>
    %4 = tpu.matmul %2, %3, %cst {dimension_numbers = #tpu.dot_dimension_numbers<[1], [0], [0], [1], [0, 0, 1, 1], [], []>} : vector<96x128xbf16>, vector<128x1024xbf16>, vector<96x1024xf32> -> vector<96x1024xf32>
    %c0_4 = arith.constant 0 : index
    %c0_5 = arith.constant 0 : index
    %5 = vector.load %arg4[%c0_4, %c0_5] : memref<1x1024xf32, #tpu.memory_space<vmem>>, vector<1x1024xf32>
    %6 = vector.broadcast %5 : vector<1x1024xf32> to vector<96x1024xf32>
    %7 = arith.addf %4, %6 : vector<96x1024xf32>
    %8 = vector.shape_cast %7 : vector<96x1024xf32> to vector<12x8x1024xf32>
    %c0_6 = arith.constant 0 : index
    %c0_7 = arith.constant 0 : index
    %c0_8 = arith.constant 0 : index
    %9 = vector.load %arg9[%c0_6, %c0_7, %c0_8] : memref<12x8x1024xf32, #tpu.memory_space<vmem>>, vector<12x8x1024xf32>
    tpu.vector_store %arg9[%c0_6, %c0_7, %c0_8], %8 {strides = array<i32>} : memref<12x8x1024xf32, #tpu.memory_space<vmem>>, vector<12x8x1024xf32>,
    %c0_9 = arith.constant 0 : index
    %c0_10 = arith.constant 0 : index
    %10 = vector.load %arg2[%c0_9, %c0_10] : memref<8x1xi32, #tpu.memory_space<vmem>>, vector<8x1xi32>
    %cst_11 = arith.constant 0.000000e+00 : f32
    %11 = vector.broadcast %cst_11 : f32 to vector<8x256xf32>
    %cst_12 = arith.constant 0.000000e+00 : f32
    %12 = vector.broadcast %cst_12 : f32 to vector<8x256xf32>
    %c0_i32 = arith.constant 0 : i32
    %13 = arith.index_cast %c0_i32 : i32 to index
    %c0_13 = arith.constant 0 : index
    %c0_14 = arith.constant 0 : index
    %14 = vector.load %arg9[%13, %c0_13, %c0_14] : memref<12x8x1024xf32, #tpu.memory_space<vmem>>, vector<1x8x1024xf32>
    %15 = vector.shape_cast %14 : vector<1x8x1024xf32> to vector<8x1024xf32>
    %16 = arith.truncf %11 : vector<8x256xf32> to vector<8x256xbf16>
    %c0_15 = arith.constant 0 : index
    %c0_16 = arith.constant 0 : index
    %17 = vector.load %arg5[%c0_15, %c0_16] : memref<256x1024xbf16, #tpu.memory_space<vmem>>, vector<256x1024xbf16>
    %cst_17 = arith.constant dense<0.000000e+00> : vector<8x1024xf32>
    %18 = tpu.matmul %16, %17, %cst_17 {dimension_numbers = #tpu.dot_dimension_numbers<[1], [0], [0], [1], [0, 0, 1, 1], [], []>} : vector<8x256xbf16>, vector<256x1024xbf16>, vector<8x1024xf32> -> vector<8x1024xf32>
    %19 = arith.addf %15, %18 : vector<8x1024xf32>
    %20 = vector.extract_strided_slice %19 {offsets = [0, 0], sizes = [8, 256], strides = [1, 1]} : vector<8x1024xf32> to vector<8x256xf32>
    %21 = math.tanh %20 : vector<8x256xf32>
    %cst_18 = arith.constant 5.000000e-01 : f32
    %22 = vector.broadcast %cst_18 : f32 to vector<8x256xf32>
    %23 = arith.mulf %22, %21 : vector<8x256xf32>
    %cst_19 = arith.constant 5.000000e-01 : f32
    %24 = vector.broadcast %cst_19 : f32 to vector<8x256xf32>
    %25 = arith.addf %23, %24 : vector<8x256xf32>
    %26 = vector.extract_strided_slice %19 {offsets = [0, 256], sizes = [8, 256], strides = [1, 1]} : vector<8x1024xf32> to vector<8x256xf32>
    %27 = math.tanh %26 : vector<8x256xf32>
    %cst_20 = arith.constant 5.000000e-01 : f32
    %28 = vector.broadcast %cst_20 : f32 to vector<8x256xf32>
    %29 = arith.mulf %28, %27 : vector<8x256xf32>
    %cst_21 = arith.constant 5.000000e-01 : f32
    %30 = vector.broadcast %cst_21 : f32 to vector<8x256xf32>
    %31 = arith.addf %29, %30 : vector<8x256xf32>
    %32 = vector.extract_strided_slice %19 {offsets = [0, 512], sizes = [8, 256], strides = [1, 1]} : vector<8x1024xf32> to vector<8x256xf32>
    %33 = math.tanh %32 : vector<8x256xf32>
    %34 = vector.extract_strided_slice %19 {offsets = [0, 768], sizes = [8, 256], strides = [1, 1]} : vector<8x1024xf32> to vector<8x256xf32>
    %35 = math.tanh %34 : vector<8x256xf32>
    %cst_22 = arith.constant 5.000000e-01 : f32
    %36 = vector.broadcast %cst_22 : f32 to vector<8x256xf32>
    %37 = arith.mulf %36, %35 : vector<8x256xf32>
    %cst_23 = arith.constant 5.000000e-01 : f32
    %38 = vector.broadcast %cst_23 : f32 to vector<8x256xf32>
    %39 = arith.addf %37, %38 : vector<8x256xf32>
    %40 = arith.mulf %31, %12 : vector<8x256xf32>
    %41 = arith.mulf %25, %33 : vector<8x256xf32>
    %42 = arith.addf %40, %41 : vector<8x256xf32>
    %43 = math.tanh %42 : vector<8x256xf32>
    %44 = arith.mulf %39, %43 : vector<8x256xf32>
    %45 = vector.broadcast %c0_i32 : i32 to vector<8x1xi32>
    %46 = arith.cmpi slt, %45, %10 : vector<8x1xi32>
    %47 = vector.shape_cast %46 : vector<8x1xi1> to vector<8x1xi1>
    %48 = vector.broadcast %47 : vector<8x1xi1> to vector<8x256xi1>
    %49 = arith.select %48, %44, %11 : vector<8x256xi1>, vector<8x256xf32>
    %50 = vector.shape_cast %46 : vector<8x1xi1> to vector<8x1xi1>
    %51 = vector.broadcast %50 : vector<8x1xi1> to vector<8x256xi1>
    %52 = arith.select %51, %42, %12 : vector<8x256xi1>, vector<8x256xf32>
    %c1_i32 = arith.constant 1 : i32
    %53 = arith.index_cast %c1_i32 : i32 to index
    %c0_24 = arith.constant 0 : index
    %c0_25 = arith.constant 0 : index
    %54 = vector.load %arg9[%53, %c0_24, %c0_25] : memref<12x8x1024xf32, #tpu.memory_space<vmem>>, vector<1x8x1024xf32>
    %55 = vector.shape_cast %54 : vector<1x8x1024xf32> to vector<8x1024xf32>
    %56 = arith.truncf %49 : vector<8x256xf32> to vector<8x256xbf16>
    %c0_26 = arith.constant 0 : index
    %c0_27 = arith.constant 0 : index
    %57 = vector.load %arg5[%c0_26, %c0_27] : memref<256x1024xbf16, #tpu.memory_space<vmem>>, vector<256x1024xbf16>
    %cst_28 = arith.constant dense<0.000000e+00> : vector<8x1024xf32>
    %58 = tpu.matmul %56, %57, %cst_28 {dimension_numbers = #tpu.dot_dimension_numbers<[1], [0], [0], [1], [0, 0, 1, 1], [], []>} : vector<8x256xbf16>, vector<256x1024xbf16>, vector<8x1024xf32> -> vector<8x1024xf32>
    %59 = arith.addf %55, %58 : vector<8x1024xf32>
    %60 = vector.extract_strided_slice %59 {offsets = [0, 0], sizes = [8, 256], strides = [1, 1]} : vector<8x1024xf32> to vector<8x256xf32>
    %61 = math.tanh %60 : vector<8x256xf32>
    %cst_29 = arith.constant 5.000000e-01 : f32
    %62 = vector.broadcast %cst_29 : f32 to vector<8x256xf32>
    %63 = arith.mulf %62, %61 : vector<8x256xf32>
    %cst_30 = arith.constant 5.000000e-01 : f32
    %64 = vector.broadcast %cst_30 : f32 to vector<8x256xf32>
    %65 = arith.addf %63, %64 : vector<8x256xf32>
    %66 = vector.extract_strided_slice %59 {offsets = [0, 256], sizes = [8, 256], strides = [1, 1]} : vector<8x1024xf32> to vector<8x256xf32>
    %67 = math.tanh %66 : vector<8x256xf32>
    %cst_31 = arith.constant 5.000000e-01 : f32
    %68 = vector.broadcast %cst_31 : f32 to vector<8x256xf32>
    %69 = arith.mulf %68, %67 : vector<8x256xf32>
    %cst_32 = arith.constant 5.000000e-01 : f32
    %70 = vector.broadcast %cst_32 : f32 to vector<8x256xf32>
    %71 = arith.addf %69, %70 : vector<8x256xf32>
    %72 = vector.extract_strided_slice %59 {offsets = [0, 512], sizes = [8, 256], strides = [1, 1]} : vector<8x1024xf32> to vector<8x256xf32>
    %73 = math.tanh %72 : vector<8x256xf32>
    %74 = vector.extract_strided_slice %59 {offsets = [0, 768], sizes = [8, 256], strides = [1, 1]} : vector<8x1024xf32> to vector<8x256xf32>
    %75 = math.tanh %74 : vector<8x256xf32>
    %cst_33 = arith.constant 5.000000e-01 : f32
    %76 = vector.broadcast %cst_33 : f32 to vector<8x256xf32>
    %77 = arith.mulf %76, %75 : vector<8x256xf32>
    %cst_34 = arith.constant 5.000000e-01 : f32
    %78 = vector.broadcast %cst_34 : f32 to vector<8x256xf32>
    %79 = arith.addf %77, %78 : vector<8x256xf32>
    %80 = arith.mulf %71, %52 : vector<8x256xf32>
    %81 = arith.mulf %65, %73 : vector<8x256xf32>
    %82 = arith.addf %80, %81 : vector<8x256xf32>
    %83 = math.tanh %82 : vector<8x256xf32>
    %84 = arith.mulf %79, %83 : vector<8x256xf32>
    %85 = vector.broadcast %c1_i32 : i32 to vector<8x1xi32>
    %86 = arith.cmpi slt, %85, %10 : vector<8x1xi32>
    %87 = vector.shape_cast %86 : vector<8x1xi1> to vector<8x1xi1>
    %88 = vector.broadcast %87 : vector<8x1xi1> to vector<8x256xi1>
    %89 = arith.select %88, %84, %49 : vector<8x256xi1>, vector<8x256xf32>
    %90 = vector.shape_cast %86 : vector<8x1xi1> to vector<8x1xi1>
    %91 = vector.broadcast %90 : vector<8x1xi1> to vector<8x256xi1>
    %92 = arith.select %91, %82, %52 : vector<8x256xi1>, vector<8x256xf32>
    %c2_i32 = arith.constant 2 : i32
    %93 = arith.index_cast %c2_i32 : i32 to index
    %c0_35 = arith.constant 0 : index
    %c0_36 = arith.constant 0 : index
    %94 = vector.load %arg9[%93, %c0_35, %c0_36] : memref<12x8x1024xf32, #tpu.memory_space<vmem>>, vector<1x8x1024xf32>
    %95 = vector.shape_cast %94 : vector<1x8x1024xf32> to vector<8x1024xf32>
    %96 = arith.truncf %89 : vector<8x256xf32> to vector<8x256xbf16>
    %c0_37 = arith.constant 0 : index
    %c0_38 = arith.constant 0 : index
    %97 = vector.load %arg5[%c0_37, %c0_38] : memref<256x1024xbf16, #tpu.memory_space<vmem>>, vector<256x1024xbf16>
    %cst_39 = arith.constant dense<0.000000e+00> : vector<8x1024xf32>
    %98 = tpu.matmul %96, %97, %cst_39 {dimension_numbers = #tpu.dot_dimension_numbers<[1], [0], [0], [1], [0, 0, 1, 1], [], []>} : vector<8x256xbf16>, vector<256x1024xbf16>, vector<8x1024xf32> -> vector<8x1024xf32>
    %99 = arith.addf %95, %98 : vector<8x1024xf32>
    %100 = vector.extract_strided_slice %99 {offsets = [0, 0], sizes = [8, 256], strides = [1, 1]} : vector<8x1024xf32> to vector<8x256xf32>
    %101 = math.tanh %100 : vector<8x256xf32>
    %cst_40 = arith.constant 5.000000e-01 : f32
    %102 = vector.broadcast %cst_40 : f32 to vector<8x256xf32>
    %103 = arith.mulf %102, %101 : vector<8x256xf32>
    %cst_41 = arith.constant 5.000000e-01 : f32
    %104 = vector.broadcast %cst_41 : f32 to vector<8x256xf32>
    %105 = arith.addf %103, %104 : vector<8x256xf32>
    %106 = vector.extract_strided_slice %99 {offsets = [0, 256], sizes = [8, 256], strides = [1, 1]} : vector<8x1024xf32> to vector<8x256xf32>
    %107 = math.tanh %106 : vector<8x256xf32>
    %cst_42 = arith.constant 5.000000e-01 : f32
    %108 = vector.broadcast %cst_42 : f32 to vector<8x256xf32>
    %109 = arith.mulf %108, %107 : vector<8x256xf32>
    %cst_43 = arith.constant 5.000000e-01 : f32
    %110 = vector.broadcast %cst_43 : f32 to vector<8x256xf32>
    %111 = arith.addf %109, %110 : vector<8x256xf32>
    %112 = vector.extract_strided_slice %99 {offsets = [0, 512], sizes = [8, 256], strides = [1, 1]} : vector<8x1024xf32> to vector<8x256xf32>
    %113 = math.tanh %112 : vector<8x256xf32>
    %114 = vector.extract_strided_slice %99 {offsets = [0, 768], sizes = [8, 256], strides = [1, 1]} : vector<8x1024xf32> to vector<8x256xf32>
    %115 = math.tanh %114 : vector<8x256xf32>
    %cst_44 = arith.constant 5.000000e-01 : f32
    %116 = vector.broadcast %cst_44 : f32 to vector<8x256xf32>
    %117 = arith.mulf %116, %115 : vector<8x256xf32>
    %cst_45 = arith.constant 5.000000e-01 : f32
    %118 = vector.broadcast %cst_45 : f32 to vector<8x256xf32>
    %119 = arith.addf %117, %118 : vector<8x256xf32>
    %120 = arith.mulf %111, %92 : vector<8x256xf32>
    %121 = arith.mulf %105, %113 : vector<8x256xf32>
    %122 = arith.addf %120, %121 : vector<8x256xf32>
    %123 = math.tanh %122 : vector<8x256xf32>
    %124 = arith.mulf %119, %123 : vector<8x256xf32>
    %125 = vector.broadcast %c2_i32 : i32 to vector<8x1xi32>
    %126 = arith.cmpi slt, %125, %10 : vector<8x1xi32>
    %127 = vector.shape_cast %126 : vector<8x1xi1> to vector<8x1xi1>
    %128 = vector.broadcast %127 : vector<8x1xi1> to vector<8x256xi1>
    %129 = arith.select %128, %124, %89 : vector<8x256xi1>, vector<8x256xf32>
    %130 = vector.shape_cast %126 : vector<8x1xi1> to vector<8x1xi1>
    %131 = vector.broadcast %130 : vector<8x1xi1> to vector<8x256xi1>
    %132 = arith.select %131, %122, %92 : vector<8x256xi1>, vector<8x256xf32>
    %c3_i32 = arith.constant 3 : i32
    %133 = arith.index_cast %c3_i32 : i32 to index
    %c0_46 = arith.constant 0 : index
    %c0_47 = arith.constant 0 : index
    %134 = vector.load %arg9[%133, %c0_46, %c0_47] : memref<12x8x1024xf32, #tpu.memory_space<vmem>>, vector<1x8x1024xf32>
    %135 = vector.shape_cast %134 : vector<1x8x1024xf32> to vector<8x1024xf32>
    %136 = arith.truncf %129 : vector<8x256xf32> to vector<8x256xbf16>
    %c0_48 = arith.constant 0 : index
    %c0_49 = arith.constant 0 : index
    %137 = vector.load %arg5[%c0_48, %c0_49] : memref<256x1024xbf16, #tpu.memory_space<vmem>>, vector<256x1024xbf16>
    %cst_50 = arith.constant dense<0.000000e+00> : vector<8x1024xf32>
    %138 = tpu.matmul %136, %137, %cst_50 {dimension_numbers = #tpu.dot_dimension_numbers<[1], [0], [0], [1], [0, 0, 1, 1], [], []>} : vector<8x256xbf16>, vector<256x1024xbf16>, vector<8x1024xf32> -> vector<8x1024xf32>
    %139 = arith.addf %135, %138 : vector<8x1024xf32>
    %140 = vector.extract_strided_slice %139 {offsets = [0, 0], sizes = [8, 256], strides = [1, 1]} : vector<8x1024xf32> to vector<8x256xf32>
    %141 = math.tanh %140 : vector<8x256xf32>
    %cst_51 = arith.constant 5.000000e-01 : f32
    %142 = vector.broadcast %cst_51 : f32 to vector<8x256xf32>
    %143 = arith.mulf %142, %141 : vector<8x256xf32>
    %cst_52 = arith.constant 5.000000e-01 : f32
    %144 = vector.broadcast %cst_52 : f32 to vector<8x256xf32>
    %145 = arith.addf %143, %144 : vector<8x256xf32>
    %146 = vector.extract_strided_slice %139 {offsets = [0, 256], sizes = [8, 256], strides = [1, 1]} : vector<8x1024xf32> to vector<8x256xf32>
    %147 = math.tanh %146 : vector<8x256xf32>
    %cst_53 = arith.constant 5.000000e-01 : f32
    %148 = vector.broadcast %cst_53 : f32 to vector<8x256xf32>
    %149 = arith.mulf %148, %147 : vector<8x256xf32>
    %cst_54 = arith.constant 5.000000e-01 : f32
    %150 = vector.broadcast %cst_54 : f32 to vector<8x256xf32>
    %151 = arith.addf %149, %150 : vector<8x256xf32>
    %152 = vector.extract_strided_slice %139 {offsets = [0, 512], sizes = [8, 256], strides = [1, 1]} : vector<8x1024xf32> to vector<8x256xf32>
    %153 = math.tanh %152 : vector<8x256xf32>
    %154 = vector.extract_strided_slice %139 {offsets = [0, 768], sizes = [8, 256], strides = [1, 1]} : vector<8x1024xf32> to vector<8x256xf32>
    %155 = math.tanh %154 : vector<8x256xf32>
    %cst_55 = arith.constant 5.000000e-01 : f32
    %156 = vector.broadcast %cst_55 : f32 to vector<8x256xf32>
    %157 = arith.mulf %156, %155 : vector<8x256xf32>
    %cst_56 = arith.constant 5.000000e-01 : f32
    %158 = vector.broadcast %cst_56 : f32 to vector<8x256xf32>
    %159 = arith.addf %157, %158 : vector<8x256xf32>
    %160 = arith.mulf %151, %132 : vector<8x256xf32>
    %161 = arith.mulf %145, %153 : vector<8x256xf32>
    %162 = arith.addf %160, %161 : vector<8x256xf32>
    %163 = math.tanh %162 : vector<8x256xf32>
    %164 = arith.mulf %159, %163 : vector<8x256xf32>
    %165 = vector.broadcast %c3_i32 : i32 to vector<8x1xi32>
    %166 = arith.cmpi slt, %165, %10 : vector<8x1xi32>
    %167 = vector.shape_cast %166 : vector<8x1xi1> to vector<8x1xi1>
    %168 = vector.broadcast %167 : vector<8x1xi1> to vector<8x256xi1>
    %169 = arith.select %168, %164, %129 : vector<8x256xi1>, vector<8x256xf32>
    %170 = vector.shape_cast %166 : vector<8x1xi1> to vector<8x1xi1>
    %171 = vector.broadcast %170 : vector<8x1xi1> to vector<8x256xi1>
    %172 = arith.select %171, %162, %132 : vector<8x256xi1>, vector<8x256xf32>
    %c4_i32 = arith.constant 4 : i32
    %173 = arith.index_cast %c4_i32 : i32 to index
    %c0_57 = arith.constant 0 : index
    %c0_58 = arith.constant 0 : index
    %174 = vector.load %arg9[%173, %c0_57, %c0_58] : memref<12x8x1024xf32, #tpu.memory_space<vmem>>, vector<1x8x1024xf32>
    %175 = vector.shape_cast %174 : vector<1x8x1024xf32> to vector<8x1024xf32>
    %176 = arith.truncf %169 : vector<8x256xf32> to vector<8x256xbf16>
    %c0_59 = arith.constant 0 : index
    %c0_60 = arith.constant 0 : index
    %177 = vector.load %arg5[%c0_59, %c0_60] : memref<256x1024xbf16, #tpu.memory_space<vmem>>, vector<256x1024xbf16>
    %cst_61 = arith.constant dense<0.000000e+00> : vector<8x1024xf32>
    %178 = tpu.matmul %176, %177, %cst_61 {dimension_numbers = #tpu.dot_dimension_numbers<[1], [0], [0], [1], [0, 0, 1, 1], [], []>} : vector<8x256xbf16>, vector<256x1024xbf16>, vector<8x1024xf32> -> vector<8x1024xf32>
    %179 = arith.addf %175, %178 : vector<8x1024xf32>
    %180 = vector.extract_strided_slice %179 {offsets = [0, 0], sizes = [8, 256], strides = [1, 1]} : vector<8x1024xf32> to vector<8x256xf32>
    %181 = math.tanh %180 : vector<8x256xf32>
    %cst_62 = arith.constant 5.000000e-01 : f32
    %182 = vector.broadcast %cst_62 : f32 to vector<8x256xf32>
    %183 = arith.mulf %182, %181 : vector<8x256xf32>
    %cst_63 = arith.constant 5.000000e-01 : f32
    %184 = vector.broadcast %cst_63 : f32 to vector<8x256xf32>
    %185 = arith.addf %183, %184 : vector<8x256xf32>
    %186 = vector.extract_strided_slice %179 {offsets = [0, 256], sizes = [8, 256], strides = [1, 1]} : vector<8x1024xf32> to vector<8x256xf32>
    %187 = math.tanh %186 : vector<8x256xf32>
    %cst_64 = arith.constant 5.000000e-01 : f32
    %188 = vector.broadcast %cst_64 : f32 to vector<8x256xf32>
    %189 = arith.mulf %188, %187 : vector<8x256xf32>
    %cst_65 = arith.constant 5.000000e-01 : f32
    %190 = vector.broadcast %cst_65 : f32 to vector<8x256xf32>
    %191 = arith.addf %189, %190 : vector<8x256xf32>
    %192 = vector.extract_strided_slice %179 {offsets = [0, 512], sizes = [8, 256], strides = [1, 1]} : vector<8x1024xf32> to vector<8x256xf32>
    %193 = math.tanh %192 : vector<8x256xf32>
    %194 = vector.extract_strided_slice %179 {offsets = [0, 768], sizes = [8, 256], strides = [1, 1]} : vector<8x1024xf32> to vector<8x256xf32>
    %195 = math.tanh %194 : vector<8x256xf32>
    %cst_66 = arith.constant 5.000000e-01 : f32
    %196 = vector.broadcast %cst_66 : f32 to vector<8x256xf32>
    %197 = arith.mulf %196, %195 : vector<8x256xf32>
    %cst_67 = arith.constant 5.000000e-01 : f32
    %198 = vector.broadcast %cst_67 : f32 to vector<8x256xf32>
    %199 = arith.addf %197, %198 : vector<8x256xf32>
    %200 = arith.mulf %191, %172 : vector<8x256xf32>
    %201 = arith.mulf %185, %193 : vector<8x256xf32>
    %202 = arith.addf %200, %201 : vector<8x256xf32>
    %203 = math.tanh %202 : vector<8x256xf32>
    %204 = arith.mulf %199, %203 : vector<8x256xf32>
    %205 = vector.broadcast %c4_i32 : i32 to vector<8x1xi32>
    %206 = arith.cmpi slt, %205, %10 : vector<8x1xi32>
    %207 = vector.shape_cast %206 : vector<8x1xi1> to vector<8x1xi1>
    %208 = vector.broadcast %207 : vector<8x1xi1> to vector<8x256xi1>
    %209 = arith.select %208, %204, %169 : vector<8x256xi1>, vector<8x256xf32>
    %210 = vector.shape_cast %206 : vector<8x1xi1> to vector<8x1xi1>
    %211 = vector.broadcast %210 : vector<8x1xi1> to vector<8x256xi1>
    %212 = arith.select %211, %202, %172 : vector<8x256xi1>, vector<8x256xf32>
    %c5_i32 = arith.constant 5 : i32
    %213 = arith.index_cast %c5_i32 : i32 to index
    %c0_68 = arith.constant 0 : index
    %c0_69 = arith.constant 0 : index
    %214 = vector.load %arg9[%213, %c0_68, %c0_69] : memref<12x8x1024xf32, #tpu.memory_space<vmem>>, vector<1x8x1024xf32>
    %215 = vector.shape_cast %214 : vector<1x8x1024xf32> to vector<8x1024xf32>
    %216 = arith.truncf %209 : vector<8x256xf32> to vector<8x256xbf16>
    %c0_70 = arith.constant 0 : index
    %c0_71 = arith.constant 0 : index
    %217 = vector.load %arg5[%c0_70, %c0_71] : memref<256x1024xbf16, #tpu.memory_space<vmem>>, vector<256x1024xbf16>
    %cst_72 = arith.constant dense<0.000000e+00> : vector<8x1024xf32>
    %218 = tpu.matmul %216, %217, %cst_72 {dimension_numbers = #tpu.dot_dimension_numbers<[1], [0], [0], [1], [0, 0, 1, 1], [], []>} : vector<8x256xbf16>, vector<256x1024xbf16>, vector<8x1024xf32> -> vector<8x1024xf32>
    %219 = arith.addf %215, %218 : vector<8x1024xf32>
    %220 = vector.extract_strided_slice %219 {offsets = [0, 0], sizes = [8, 256], strides = [1, 1]} : vector<8x1024xf32> to vector<8x256xf32>
    %221 = math.tanh %220 : vector<8x256xf32>
    %cst_73 = arith.constant 5.000000e-01 : f32
    %222 = vector.broadcast %cst_73 : f32 to vector<8x256xf32>
    %223 = arith.mulf %222, %221 : vector<8x256xf32>
    %cst_74 = arith.constant 5.000000e-01 : f32
    %224 = vector.broadcast %cst_74 : f32 to vector<8x256xf32>
    %225 = arith.addf %223, %224 : vector<8x256xf32>
    %226 = vector.extract_strided_slice %219 {offsets = [0, 256], sizes = [8, 256], strides = [1, 1]} : vector<8x1024xf32> to vector<8x256xf32>
    %227 = math.tanh %226 : vector<8x256xf32>
    %cst_75 = arith.constant 5.000000e-01 : f32
    %228 = vector.broadcast %cst_75 : f32 to vector<8x256xf32>
    %229 = arith.mulf %228, %227 : vector<8x256xf32>
    %cst_76 = arith.constant 5.000000e-01 : f32
    %230 = vector.broadcast %cst_76 : f32 to vector<8x256xf32>
    %231 = arith.addf %229, %230 : vector<8x256xf32>
    %232 = vector.extract_strided_slice %219 {offsets = [0, 512], sizes = [8, 256], strides = [1, 1]} : vector<8x1024xf32> to vector<8x256xf32>
    %233 = math.tanh %232 : vector<8x256xf32>
    %234 = vector.extract_strided_slice %219 {offsets = [0, 768], sizes = [8, 256], strides = [1, 1]} : vector<8x1024xf32> to vector<8x256xf32>
    %235 = math.tanh %234 : vector<8x256xf32>
    %cst_77 = arith.constant 5.000000e-01 : f32
    %236 = vector.broadcast %cst_77 : f32 to vector<8x256xf32>
    %237 = arith.mulf %236, %235 : vector<8x256xf32>
    %cst_78 = arith.constant 5.000000e-01 : f32
    %238 = vector.broadcast %cst_78 : f32 to vector<8x256xf32>
    %239 = arith.addf %237, %238 : vector<8x256xf32>
    %240 = arith.mulf %231, %212 : vector<8x256xf32>
    %241 = arith.mulf %225, %233 : vector<8x256xf32>
    %242 = arith.addf %240, %241 : vector<8x256xf32>
    %243 = math.tanh %242 : vector<8x256xf32>
    %244 = arith.mulf %239, %243 : vector<8x256xf32>
    %245 = vector.broadcast %c5_i32 : i32 to vector<8x1xi32>
    %246 = arith.cmpi slt, %245, %10 : vector<8x1xi32>
    %247 = vector.shape_cast %246 : vector<8x1xi1> to vector<8x1xi1>
    %248 = vector.broadcast %247 : vector<8x1xi1> to vector<8x256xi1>
    %249 = arith.select %248, %244, %209 : vector<8x256xi1>, vector<8x256xf32>
    %250 = vector.shape_cast %246 : vector<8x1xi1> to vector<8x1xi1>
    %251 = vector.broadcast %250 : vector<8x1xi1> to vector<8x256xi1>
    %252 = arith.select %251, %242, %212 : vector<8x256xi1>, vector<8x256xf32>
    %c6_i32 = arith.constant 6 : i32
    %253 = arith.index_cast %c6_i32 : i32 to index
    %c0_79 = arith.constant 0 : index
    %c0_80 = arith.constant 0 : index
    %254 = vector.load %arg9[%253, %c0_79, %c0_80] : memref<12x8x1024xf32, #tpu.memory_space<vmem>>, vector<1x8x1024xf32>
    %255 = vector.shape_cast %254 : vector<1x8x1024xf32> to vector<8x1024xf32>
    %256 = arith.truncf %249 : vector<8x256xf32> to vector<8x256xbf16>
    %c0_81 = arith.constant 0 : index
    %c0_82 = arith.constant 0 : index
    %257 = vector.load %arg5[%c0_81, %c0_82] : memref<256x1024xbf16, #tpu.memory_space<vmem>>, vector<256x1024xbf16>
    %cst_83 = arith.constant dense<0.000000e+00> : vector<8x1024xf32>
    %258 = tpu.matmul %256, %257, %cst_83 {dimension_numbers = #tpu.dot_dimension_numbers<[1], [0], [0], [1], [0, 0, 1, 1], [], []>} : vector<8x256xbf16>, vector<256x1024xbf16>, vector<8x1024xf32> -> vector<8x1024xf32>
    %259 = arith.addf %255, %258 : vector<8x1024xf32>
    %260 = vector.extract_strided_slice %259 {offsets = [0, 0], sizes = [8, 256], strides = [1, 1]} : vector<8x1024xf32> to vector<8x256xf32>
    %261 = math.tanh %260 : vector<8x256xf32>
    %cst_84 = arith.constant 5.000000e-01 : f32
    %262 = vector.broadcast %cst_84 : f32 to vector<8x256xf32>
    %263 = arith.mulf %262, %261 : vector<8x256xf32>
    %cst_85 = arith.constant 5.000000e-01 : f32
    %264 = vector.broadcast %cst_85 : f32 to vector<8x256xf32>
    %265 = arith.addf %263, %264 : vector<8x256xf32>
    %266 = vector.extract_strided_slice %259 {offsets = [0, 256], sizes = [8, 256], strides = [1, 1]} : vector<8x1024xf32> to vector<8x256xf32>
    %267 = math.tanh %266 : vector<8x256xf32>
    %cst_86 = arith.constant 5.000000e-01 : f32
    %268 = vector.broadcast %cst_86 : f32 to vector<8x256xf32>
    %269 = arith.mulf %268, %267 : vector<8x256xf32>
    %cst_87 = arith.constant 5.000000e-01 : f32
    %270 = vector.broadcast %cst_87 : f32 to vector<8x256xf32>
    %271 = arith.addf %269, %270 : vector<8x256xf32>
    %272 = vector.extract_strided_slice %259 {offsets = [0, 512], sizes = [8, 256], strides = [1, 1]} : vector<8x1024xf32> to vector<8x256xf32>
    %273 = math.tanh %272 : vector<8x256xf32>
    %274 = vector.extract_strided_slice %259 {offsets = [0, 768], sizes = [8, 256], strides = [1, 1]} : vector<8x1024xf32> to vector<8x256xf32>
    %275 = math.tanh %274 : vector<8x256xf32>
    %cst_88 = arith.constant 5.000000e-01 : f32
    %276 = vector.broadcast %cst_88 : f32 to vector<8x256xf32>
    %277 = arith.mulf %276, %275 : vector<8x256xf32>
    %cst_89 = arith.constant 5.000000e-01 : f32
    %278 = vector.broadcast %cst_89 : f32 to vector<8x256xf32>
    %279 = arith.addf %277, %278 : vector<8x256xf32>
    %280 = arith.mulf %271, %252 : vector<8x256xf32>
    %281 = arith.mulf %265, %273 : vector<8x256xf32>
    %282 = arith.addf %280, %281 : vector<8x256xf32>
    %283 = math.tanh %282 : vector<8x256xf32>
    %284 = arith.mulf %279, %283 : vector<8x256xf32>
    %285 = vector.broadcast %c6_i32 : i32 to vector<8x1xi32>
    %286 = arith.cmpi slt, %285, %10 : vector<8x1xi32>
    %287 = vector.shape_cast %286 : vector<8x1xi1> to vector<8x1xi1>
    %288 = vector.broadcast %287 : vector<8x1xi1> to vector<8x256xi1>
    %289 = arith.select %288, %284, %249 : vector<8x256xi1>, vector<8x256xf32>
    %290 = vector.shape_cast %286 : vector<8x1xi1> to vector<8x1xi1>
    %291 = vector.broadcast %290 : vector<8x1xi1> to vector<8x256xi1>
    %292 = arith.select %291, %282, %252 : vector<8x256xi1>, vector<8x256xf32>
    %c7_i32 = arith.constant 7 : i32
    %293 = arith.index_cast %c7_i32 : i32 to index
    %c0_90 = arith.constant 0 : index
    %c0_91 = arith.constant 0 : index
    %294 = vector.load %arg9[%293, %c0_90, %c0_91] : memref<12x8x1024xf32, #tpu.memory_space<vmem>>, vector<1x8x1024xf32>
    %295 = vector.shape_cast %294 : vector<1x8x1024xf32> to vector<8x1024xf32>
    %296 = arith.truncf %289 : vector<8x256xf32> to vector<8x256xbf16>
    %c0_92 = arith.constant 0 : index
    %c0_93 = arith.constant 0 : index
    %297 = vector.load %arg5[%c0_92, %c0_93] : memref<256x1024xbf16, #tpu.memory_space<vmem>>, vector<256x1024xbf16>
    %cst_94 = arith.constant dense<0.000000e+00> : vector<8x1024xf32>
    %298 = tpu.matmul %296, %297, %cst_94 {dimension_numbers = #tpu.dot_dimension_numbers<[1], [0], [0], [1], [0, 0, 1, 1], [], []>} : vector<8x256xbf16>, vector<256x1024xbf16>, vector<8x1024xf32> -> vector<8x1024xf32>
    %299 = arith.addf %295, %298 : vector<8x1024xf32>
    %300 = vector.extract_strided_slice %299 {offsets = [0, 0], sizes = [8, 256], strides = [1, 1]} : vector<8x1024xf32> to vector<8x256xf32>
    %301 = math.tanh %300 : vector<8x256xf32>
    %cst_95 = arith.constant 5.000000e-01 : f32
    %302 = vector.broadcast %cst_95 : f32 to vector<8x256xf32>
    %303 = arith.mulf %302, %301 : vector<8x256xf32>
    %cst_96 = arith.constant 5.000000e-01 : f32
    %304 = vector.broadcast %cst_96 : f32 to vector<8x256xf32>
    %305 = arith.addf %303, %304 : vector<8x256xf32>
    %306 = vector.extract_strided_slice %299 {offsets = [0, 256], sizes = [8, 256], strides = [1, 1]} : vector<8x1024xf32> to vector<8x256xf32>
    %307 = math.tanh %306 : vector<8x256xf32>
    %cst_97 = arith.constant 5.000000e-01 : f32
    %308 = vector.broadcast %cst_97 : f32 to vector<8x256xf32>
    %309 = arith.mulf %308, %307 : vector<8x256xf32>
    %cst_98 = arith.constant 5.000000e-01 : f32
    %310 = vector.broadcast %cst_98 : f32 to vector<8x256xf32>
    %311 = arith.addf %309, %310 : vector<8x256xf32>
    %312 = vector.extract_strided_slice %299 {offsets = [0, 512], sizes = [8, 256], strides = [1, 1]} : vector<8x1024xf32> to vector<8x256xf32>
    %313 = math.tanh %312 : vector<8x256xf32>
    %314 = vector.extract_strided_slice %299 {offsets = [0, 768], sizes = [8, 256], strides = [1, 1]} : vector<8x1024xf32> to vector<8x256xf32>
    %315 = math.tanh %314 : vector<8x256xf32>
    %cst_99 = arith.constant 5.000000e-01 : f32
    %316 = vector.broadcast %cst_99 : f32 to vector<8x256xf32>
    %317 = arith.mulf %316, %315 : vector<8x256xf32>
    %cst_100 = arith.constant 5.000000e-01 : f32
    %318 = vector.broadcast %cst_100 : f32 to vector<8x256xf32>
    %319 = arith.addf %317, %318 : vector<8x256xf32>
    %320 = arith.mulf %311, %292 : vector<8x256xf32>
    %321 = arith.mulf %305, %313 : vector<8x256xf32>
    %322 = arith.addf %320, %321 : vector<8x256xf32>
    %323 = math.tanh %322 : vector<8x256xf32>
    %324 = arith.mulf %319, %323 : vector<8x256xf32>
    %325 = vector.broadcast %c7_i32 : i32 to vector<8x1xi32>
    %326 = arith.cmpi slt, %325, %10 : vector<8x1xi32>
    %327 = vector.shape_cast %326 : vector<8x1xi1> to vector<8x1xi1>
    %328 = vector.broadcast %327 : vector<8x1xi1> to vector<8x256xi1>
    %329 = arith.select %328, %324, %289 : vector<8x256xi1>, vector<8x256xf32>
    %330 = vector.shape_cast %326 : vector<8x1xi1> to vector<8x1xi1>
    %331 = vector.broadcast %330 : vector<8x1xi1> to vector<8x256xi1>
    %332 = arith.select %331, %322, %292 : vector<8x256xi1>, vector<8x256xf32>
    %c8_i32 = arith.constant 8 : i32
    %333 = arith.index_cast %c8_i32 : i32 to index
    %c0_101 = arith.constant 0 : index
    %c0_102 = arith.constant 0 : index
    %334 = vector.load %arg9[%333, %c0_101, %c0_102] : memref<12x8x1024xf32, #tpu.memory_space<vmem>>, vector<1x8x1024xf32>
    %335 = vector.shape_cast %334 : vector<1x8x1024xf32> to vector<8x1024xf32>
    %336 = arith.truncf %329 : vector<8x256xf32> to vector<8x256xbf16>
    %c0_103 = arith.constant 0 : index
    %c0_104 = arith.constant 0 : index
    %337 = vector.load %arg5[%c0_103, %c0_104] : memref<256x1024xbf16, #tpu.memory_space<vmem>>, vector<256x1024xbf16>
    %cst_105 = arith.constant dense<0.000000e+00> : vector<8x1024xf32>
    %338 = tpu.matmul %336, %337, %cst_105 {dimension_numbers = #tpu.dot_dimension_numbers<[1], [0], [0], [1], [0, 0, 1, 1], [], []>} : vector<8x256xbf16>, vector<256x1024xbf16>, vector<8x1024xf32> -> vector<8x1024xf32>
    %339 = arith.addf %335, %338 : vector<8x1024xf32>
    %340 = vector.extract_strided_slice %339 {offsets = [0, 0], sizes = [8, 256], strides = [1, 1]} : vector<8x1024xf32> to vector<8x256xf32>
    %341 = math.tanh %340 : vector<8x256xf32>
    %cst_106 = arith.constant 5.000000e-01 : f32
    %342 = vector.broadcast %cst_106 : f32 to vector<8x256xf32>
    %343 = arith.mulf %342, %341 : vector<8x256xf32>
    %cst_107 = arith.constant 5.000000e-01 : f32
    %344 = vector.broadcast %cst_107 : f32 to vector<8x256xf32>
    %345 = arith.addf %343, %344 : vector<8x256xf32>
    %346 = vector.extract_strided_slice %339 {offsets = [0, 256], sizes = [8, 256], strides = [1, 1]} : vector<8x1024xf32> to vector<8x256xf32>
    %347 = math.tanh %346 : vector<8x256xf32>
    %cst_108 = arith.constant 5.000000e-01 : f32
    %348 = vector.broadcast %cst_108 : f32 to vector<8x256xf32>
    %349 = arith.mulf %348, %347 : vector<8x256xf32>
    %cst_109 = arith.constant 5.000000e-01 : f32
    %350 = vector.broadcast %cst_109 : f32 to vector<8x256xf32>
    %351 = arith.addf %349, %350 : vector<8x256xf32>
    %352 = vector.extract_strided_slice %339 {offsets = [0, 512], sizes = [8, 256], strides = [1, 1]} : vector<8x1024xf32> to vector<8x256xf32>
    %353 = math.tanh %352 : vector<8x256xf32>
    %354 = vector.extract_strided_slice %339 {offsets = [0, 768], sizes = [8, 256], strides = [1, 1]} : vector<8x1024xf32> to vector<8x256xf32>
    %355 = math.tanh %354 : vector<8x256xf32>
    %cst_110 = arith.constant 5.000000e-01 : f32
    %356 = vector.broadcast %cst_110 : f32 to vector<8x256xf32>
    %357 = arith.mulf %356, %355 : vector<8x256xf32>
    %cst_111 = arith.constant 5.000000e-01 : f32
    %358 = vector.broadcast %cst_111 : f32 to vector<8x256xf32>
    %359 = arith.addf %357, %358 : vector<8x256xf32>
    %360 = arith.mulf %351, %332 : vector<8x256xf32>
    %361 = arith.mulf %345, %353 : vector<8x256xf32>
    %362 = arith.addf %360, %361 : vector<8x256xf32>
    %363 = math.tanh %362 : vector<8x256xf32>
    %364 = arith.mulf %359, %363 : vector<8x256xf32>
    %365 = vector.broadcast %c8_i32 : i32 to vector<8x1xi32>
    %366 = arith.cmpi slt, %365, %10 : vector<8x1xi32>
    %367 = vector.shape_cast %366 : vector<8x1xi1> to vector<8x1xi1>
    %368 = vector.broadcast %367 : vector<8x1xi1> to vector<8x256xi1>
    %369 = arith.select %368, %364, %329 : vector<8x256xi1>, vector<8x256xf32>
    %370 = vector.shape_cast %366 : vector<8x1xi1> to vector<8x1xi1>
    %371 = vector.broadcast %370 : vector<8x1xi1> to vector<8x256xi1>
    %372 = arith.select %371, %362, %332 : vector<8x256xi1>, vector<8x256xf32>
    %c9_i32 = arith.constant 9 : i32
    %373 = arith.index_cast %c9_i32 : i32 to index
    %c0_112 = arith.constant 0 : index
    %c0_113 = arith.constant 0 : index
    %374 = vector.load %arg9[%373, %c0_112, %c0_113] : memref<12x8x1024xf32, #tpu.memory_space<vmem>>, vector<1x8x1024xf32>
    %375 = vector.shape_cast %374 : vector<1x8x1024xf32> to vector<8x1024xf32>
    %376 = arith.truncf %369 : vector<8x256xf32> to vector<8x256xbf16>
    %c0_114 = arith.constant 0 : index
    %c0_115 = arith.constant 0 : index
    %377 = vector.load %arg5[%c0_114, %c0_115] : memref<256x1024xbf16, #tpu.memory_space<vmem>>, vector<256x1024xbf16>
    %cst_116 = arith.constant dense<0.000000e+00> : vector<8x1024xf32>
    %378 = tpu.matmul %376, %377, %cst_116 {dimension_numbers = #tpu.dot_dimension_numbers<[1], [0], [0], [1], [0, 0, 1, 1], [], []>} : vector<8x256xbf16>, vector<256x1024xbf16>, vector<8x1024xf32> -> vector<8x1024xf32>
    %379 = arith.addf %375, %378 : vector<8x1024xf32>
    %380 = vector.extract_strided_slice %379 {offsets = [0, 0], sizes = [8, 256], strides = [1, 1]} : vector<8x1024xf32> to vector<8x256xf32>
    %381 = math.tanh %380 : vector<8x256xf32>
    %cst_117 = arith.constant 5.000000e-01 : f32
    %382 = vector.broadcast %cst_117 : f32 to vector<8x256xf32>
    %383 = arith.mulf %382, %381 : vector<8x256xf32>
    %cst_118 = arith.constant 5.000000e-01 : f32
    %384 = vector.broadcast %cst_118 : f32 to vector<8x256xf32>
    %385 = arith.addf %383, %384 : vector<8x256xf32>
    %386 = vector.extract_strided_slice %379 {offsets = [0, 256], sizes = [8, 256], strides = [1, 1]} : vector<8x1024xf32> to vector<8x256xf32>
    %387 = math.tanh %386 : vector<8x256xf32>
    %cst_119 = arith.constant 5.000000e-01 : f32
    %388 = vector.broadcast %cst_119 : f32 to vector<8x256xf32>
    %389 = arith.mulf %388, %387 : vector<8x256xf32>
    %cst_120 = arith.constant 5.000000e-01 : f32
    %390 = vector.broadcast %cst_120 : f32 to vector<8x256xf32>
    %391 = arith.addf %389, %390 : vector<8x256xf32>
    %392 = vector.extract_strided_slice %379 {offsets = [0, 512], sizes = [8, 256], strides = [1, 1]} : vector<8x1024xf32> to vector<8x256xf32>
    %393 = math.tanh %392 : vector<8x256xf32>
    %394 = vector.extract_strided_slice %379 {offsets = [0, 768], sizes = [8, 256], strides = [1, 1]} : vector<8x1024xf32> to vector<8x256xf32>
    %395 = math.tanh %394 : vector<8x256xf32>
    %cst_121 = arith.constant 5.000000e-01 : f32
    %396 = vector.broadcast %cst_121 : f32 to vector<8x256xf32>
    %397 = arith.mulf %396, %395 : vector<8x256xf32>
    %cst_122 = arith.constant 5.000000e-01 : f32
    %398 = vector.broadcast %cst_122 : f32 to vector<8x256xf32>
    %399 = arith.addf %397, %398 : vector<8x256xf32>
    %400 = arith.mulf %391, %372 : vector<8x256xf32>
    %401 = arith.mulf %385, %393 : vector<8x256xf32>
    %402 = arith.addf %400, %401 : vector<8x256xf32>
    %403 = math.tanh %402 : vector<8x256xf32>
    %404 = arith.mulf %399, %403 : vector<8x256xf32>
    %405 = vector.broadcast %c9_i32 : i32 to vector<8x1xi32>
    %406 = arith.cmpi slt, %405, %10 : vector<8x1xi32>
    %407 = vector.shape_cast %406 : vector<8x1xi1> to vector<8x1xi1>
    %408 = vector.broadcast %407 : vector<8x1xi1> to vector<8x256xi1>
    %409 = arith.select %408, %404, %369 : vector<8x256xi1>, vector<8x256xf32>
    %410 = vector.shape_cast %406 : vector<8x1xi1> to vector<8x1xi1>
    %411 = vector.broadcast %410 : vector<8x1xi1> to vector<8x256xi1>
    %412 = arith.select %411, %402, %372 : vector<8x256xi1>, vector<8x256xf32>
    %c10_i32 = arith.constant 10 : i32
    %413 = arith.index_cast %c10_i32 : i32 to index
    %c0_123 = arith.constant 0 : index
    %c0_124 = arith.constant 0 : index
    %414 = vector.load %arg9[%413, %c0_123, %c0_124] : memref<12x8x1024xf32, #tpu.memory_space<vmem>>, vector<1x8x1024xf32>
    %415 = vector.shape_cast %414 : vector<1x8x1024xf32> to vector<8x1024xf32>
    %416 = arith.truncf %409 : vector<8x256xf32> to vector<8x256xbf16>
    %c0_125 = arith.constant 0 : index
    %c0_126 = arith.constant 0 : index
    %417 = vector.load %arg5[%c0_125, %c0_126] : memref<256x1024xbf16, #tpu.memory_space<vmem>>, vector<256x1024xbf16>
    %cst_127 = arith.constant dense<0.000000e+00> : vector<8x1024xf32>
    %418 = tpu.matmul %416, %417, %cst_127 {dimension_numbers = #tpu.dot_dimension_numbers<[1], [0], [0], [1], [0, 0, 1, 1], [], []>} : vector<8x256xbf16>, vector<256x1024xbf16>, vector<8x1024xf32> -> vector<8x1024xf32>
    %419 = arith.addf %415, %418 : vector<8x1024xf32>
    %420 = vector.extract_strided_slice %419 {offsets = [0, 0], sizes = [8, 256], strides = [1, 1]} : vector<8x1024xf32> to vector<8x256xf32>
    %421 = math.tanh %420 : vector<8x256xf32>
    %cst_128 = arith.constant 5.000000e-01 : f32
    %422 = vector.broadcast %cst_128 : f32 to vector<8x256xf32>
    %423 = arith.mulf %422, %421 : vector<8x256xf32>
    %cst_129 = arith.constant 5.000000e-01 : f32
    %424 = vector.broadcast %cst_129 : f32 to vector<8x256xf32>
    %425 = arith.addf %423, %424 : vector<8x256xf32>
    %426 = vector.extract_strided_slice %419 {offsets = [0, 256], sizes = [8, 256], strides = [1, 1]} : vector<8x1024xf32> to vector<8x256xf32>
    %427 = math.tanh %426 : vector<8x256xf32>
    %cst_130 = arith.constant 5.000000e-01 : f32
    %428 = vector.broadcast %cst_130 : f32 to vector<8x256xf32>
    %429 = arith.mulf %428, %427 : vector<8x256xf32>
    %cst_131 = arith.constant 5.000000e-01 : f32
    %430 = vector.broadcast %cst_131 : f32 to vector<8x256xf32>
    %431 = arith.addf %429, %430 : vector<8x256xf32>
    %432 = vector.extract_strided_slice %419 {offsets = [0, 512], sizes = [8, 256], strides = [1, 1]} : vector<8x1024xf32> to vector<8x256xf32>
    %433 = math.tanh %432 : vector<8x256xf32>
    %434 = vector.extract_strided_slice %419 {offsets = [0, 768], sizes = [8, 256], strides = [1, 1]} : vector<8x1024xf32> to vector<8x256xf32>
    %435 = math.tanh %434 : vector<8x256xf32>
    %cst_132 = arith.constant 5.000000e-01 : f32
    %436 = vector.broadcast %cst_132 : f32 to vector<8x256xf32>
    %437 = arith.mulf %436, %435 : vector<8x256xf32>
    %cst_133 = arith.constant 5.000000e-01 : f32
    %438 = vector.broadcast %cst_133 : f32 to vector<8x256xf32>
    %439 = arith.addf %437, %438 : vector<8x256xf32>
    %440 = arith.mulf %431, %412 : vector<8x256xf32>
    %441 = arith.mulf %425, %433 : vector<8x256xf32>
    %442 = arith.addf %440, %441 : vector<8x256xf32>
    %443 = math.tanh %442 : vector<8x256xf32>
    %444 = arith.mulf %439, %443 : vector<8x256xf32>
    %445 = vector.broadcast %c10_i32 : i32 to vector<8x1xi32>
    %446 = arith.cmpi slt, %445, %10 : vector<8x1xi32>
    %447 = vector.shape_cast %446 : vector<8x1xi1> to vector<8x1xi1>
    %448 = vector.broadcast %447 : vector<8x1xi1> to vector<8x256xi1>
    %449 = arith.select %448, %444, %409 : vector<8x256xi1>, vector<8x256xf32>
    %450 = vector.shape_cast %446 : vector<8x1xi1> to vector<8x1xi1>
    %451 = vector.broadcast %450 : vector<8x1xi1> to vector<8x256xi1>
    %452 = arith.select %451, %442, %412 : vector<8x256xi1>, vector<8x256xf32>
    %c11_i32 = arith.constant 11 : i32
    %453 = arith.index_cast %c11_i32 : i32 to index
    %c0_134 = arith.constant 0 : index
    %c0_135 = arith.constant 0 : index
    %454 = vector.load %arg9[%453, %c0_134, %c0_135] : memref<12x8x1024xf32, #tpu.memory_space<vmem>>, vector<1x8x1024xf32>
    %455 = vector.shape_cast %454 : vector<1x8x1024xf32> to vector<8x1024xf32>
    %456 = arith.truncf %449 : vector<8x256xf32> to vector<8x256xbf16>
    %c0_136 = arith.constant 0 : index
    %c0_137 = arith.constant 0 : index
    %457 = vector.load %arg5[%c0_136, %c0_137] : memref<256x1024xbf16, #tpu.memory_space<vmem>>, vector<256x1024xbf16>
    %cst_138 = arith.constant dense<0.000000e+00> : vector<8x1024xf32>
    %458 = tpu.matmul %456, %457, %cst_138 {dimension_numbers = #tpu.dot_dimension_numbers<[1], [0], [0], [1], [0, 0, 1, 1], [], []>} : vector<8x256xbf16>, vector<256x1024xbf16>, vector<8x1024xf32> -> vector<8x1024xf32>
    %459 = arith.addf %455, %458 : vector<8x1024xf32>
    %460 = vector.extract_strided_slice %459 {offsets = [0, 0], sizes = [8, 256], strides = [1, 1]} : vector<8x1024xf32> to vector<8x256xf32>
    %461 = math.tanh %460 : vector<8x256xf32>
    %cst_139 = arith.constant 5.000000e-01 : f32
    %462 = vector.broadcast %cst_139 : f32 to vector<8x256xf32>
    %463 = arith.mulf %462, %461 : vector<8x256xf32>
    %cst_140 = arith.constant 5.000000e-01 : f32
    %464 = vector.broadcast %cst_140 : f32 to vector<8x256xf32>
    %465 = arith.addf %463, %464 : vector<8x256xf32>
    %466 = vector.extract_strided_slice %459 {offsets = [0, 256], sizes = [8, 256], strides = [1, 1]} : vector<8x1024xf32> to vector<8x256xf32>
    %467 = math.tanh %466 : vector<8x256xf32>
    %cst_141 = arith.constant 5.000000e-01 : f32
    %468 = vector.broadcast %cst_141 : f32 to vector<8x256xf32>
    %469 = arith.mulf %468, %467 : vector<8x256xf32>
    %cst_142 = arith.constant 5.000000e-01 : f32
    %470 = vector.broadcast %cst_142 : f32 to vector<8x256xf32>
    %471 = arith.addf %469, %470 : vector<8x256xf32>
    %472 = vector.extract_strided_slice %459 {offsets = [0, 512], sizes = [8, 256], strides = [1, 1]} : vector<8x1024xf32> to vector<8x256xf32>
    %473 = math.tanh %472 : vector<8x256xf32>
    %474 = vector.extract_strided_slice %459 {offsets = [0, 768], sizes = [8, 256], strides = [1, 1]} : vector<8x1024xf32> to vector<8x256xf32>
    %475 = math.tanh %474 : vector<8x256xf32>
    %cst_143 = arith.constant 5.000000e-01 : f32
    %476 = vector.broadcast %cst_143 : f32 to vector<8x256xf32>
    %477 = arith.mulf %476, %475 : vector<8x256xf32>
    %cst_144 = arith.constant 5.000000e-01 : f32
    %478 = vector.broadcast %cst_144 : f32 to vector<8x256xf32>
    %479 = arith.addf %477, %478 : vector<8x256xf32>
    %480 = arith.mulf %471, %452 : vector<8x256xf32>
    %481 = arith.mulf %465, %473 : vector<8x256xf32>
    %482 = arith.addf %480, %481 : vector<8x256xf32>
    %483 = math.tanh %482 : vector<8x256xf32>
    %484 = arith.mulf %479, %483 : vector<8x256xf32>
    %485 = vector.broadcast %c11_i32 : i32 to vector<8x1xi32>
    %486 = arith.cmpi slt, %485, %10 : vector<8x1xi32>
    %487 = vector.shape_cast %486 : vector<8x1xi1> to vector<8x1xi1>
    %488 = vector.broadcast %487 : vector<8x1xi1> to vector<8x256xi1>
    %489 = arith.select %488, %484, %449 : vector<8x256xi1>, vector<8x256xf32>
    %490 = vector.shape_cast %486 : vector<8x1xi1> to vector<8x1xi1>
    %491 = vector.broadcast %490 : vector<8x1xi1> to vector<8x256xi1>
    %492 = arith.select %491, %482, %452 : vector<8x256xi1>, vector<8x256xf32>
    %c12_i32 = arith.constant 12 : i32
    %493 = arith.truncf %489 : vector<8x256xf32> to vector<8x256xbf16>
    %c0_145 = arith.constant 0 : index
    %c0_146 = arith.constant 0 : index
    %494 = vector.load %arg6[%c0_145, %c0_146] : memref<256x128xbf16, #tpu.memory_space<vmem>>, vector<256x128xbf16>
    %cst_147 = arith.constant dense<0.000000e+00> : vector<8x128xf32>
    %495 = tpu.matmul %493, %494, %cst_147 {dimension_numbers = #tpu.dot_dimension_numbers<[1], [0], [0], [1], [0, 0, 1, 1], [], []>} : vector<8x256xbf16>, vector<256x128xbf16>, vector<8x128xf32> -> vector<8x128xf32>
    %c0_148 = arith.constant 0 : index
    %c0_149 = arith.constant 0 : index
    %496 = vector.load %arg7[%c0_148, %c0_149] : memref<1x128xf32, #tpu.memory_space<vmem>>, vector<1x128xf32>
    %497 = vector.broadcast %496 : vector<1x128xf32> to vector<8x128xf32>
    %498 = arith.addf %495, %497 : vector<8x128xf32>
    %cst_150 = arith.constant dense<0xFF800000> : vector<8xf32>
    %499 = vector.multi_reduction <maximumf>, %498, %cst_150 [1] : vector<8x128xf32> to vector<8xf32>
    %500 = vector.shape_cast %499 : vector<8xf32> to vector<8x1xf32>
    %501 = vector.broadcast %500 : vector<8x1xf32> to vector<8x128xf32>
    %502 = arith.subf %498, %501 : vector<8x128xf32>
    %503 = math.exp %502 : vector<8x128xf32>
    %cst_151 = arith.constant dense<0.000000e+00> : vector<8xf32>
    %504 = vector.multi_reduction <add>, %503, %cst_151 [1] : vector<8x128xf32> to vector<8xf32>
    %505 = vector.shape_cast %504 : vector<8xf32> to vector<8x1xf32>
    %506 = math.log %505 : vector<8x1xf32>
    %507 = vector.broadcast %506 : vector<8x1xf32> to vector<8x128xf32>
    %508 = arith.subf %502, %507 : vector<8x128xf32>
    %c0_152 = arith.constant 0 : index
    %c0_153 = arith.constant 0 : index
    %509 = vector.load %arg8[%c0_152, %c0_153] : memref<8x128xf32, #tpu.memory_space<vmem>>, vector<8x128xf32>
    tpu.vector_store %arg8[%c0_152, %c0_153], %508 {strides = array<i32>} : memref<8x128xf32, #tpu.memory_space<vmem>>, vector<8x128xf32>,
    return
  }
  func.func @transform_0(%arg0: i32) -> (i32, i32, i32) {
    %c0_i32 = arith.constant 0 : i32
    %c0_i32_0 = arith.constant 0 : i32
    %c0_i32_1 = arith.constant 0 : i32
    return %c0_i32, %arg0, %c0_i32_0 : i32, i32, i32
  }
  func.func @transform_1(%arg0: i32) -> (i32, i32) {
    %c0_i32 = arith.constant 0 : i32
    %c0_i32_0 = arith.constant 0 : i32
    return %arg0, %c0_i32 : i32, i32
  }
  func.func @transform_2(%arg0: i32) -> (i32, i32) {
    %c0_i32 = arith.constant 0 : i32
    %c0_i32_0 = arith.constant 0 : i32
    %c0_i32_1 = arith.constant 0 : i32
    return %c0_i32, %c0_i32_0 : i32, i32
  }
  func.func @transform_3(%arg0: i32) -> (i32, i32) {
    %c0_i32 = arith.constant 0 : i32
    %c0_i32_0 = arith.constant 0 : i32
    %c0_i32_1 = arith.constant 0 : i32
    return %c0_i32, %c0_i32_0 : i32, i32
  }
  func.func @transform_4(%arg0: i32) -> (i32, i32) {
    %c0_i32 = arith.constant 0 : i32
    %c0_i32_0 = arith.constant 0 : i32
    %c0_i32_1 = arith.constant 0 : i32
    return %c0_i32, %c0_i32_0 : i32, i32
  }
  func.func @transform_5(%arg0: i32) -> (i32, i32) {
    %c0_i32 = arith.constant 0 : i32
    %c0_i32_0 = arith.constant 0 : i32
    %c0_i32_1 = arith.constant 0 : i32
    return %c0_i32, %c0_i32_0 : i32, i32
  }
  func.func @transform_6(%arg0: i32) -> (i32, i32) {
    %c0_i32 = arith.constant 0 : i32
    %c0_i32_0 = arith.constant 0 : i32
    %c0_i32_1 = arith.constant 0 : i32
    return %c0_i32, %c0_i32_0 : i32, i32
  }
  func.func @transform_7(%arg0: i32) -> (i32, i32) {
    %c0_i32 = arith.constant 0 : i32
    %c0_i32_0 = arith.constant 0 : i32
    return %arg0, %c0_i32 : i32, i32
  }
}

</mosaic_0001>

<llo_original>
// kernel: lstm_forward.1
$region0: #{lstm_forward.1}
  #allocation0 [shape = 'u32[]', space=smem, size = 0x4, offset = 0x4, fixed_abs, tag = 'smem constant byte address 0x4 - core index']
  #allocation1 [shape = 'u32[144,128]{1,0:T(1,128)}', space=vmem, size = 0x12000, scoped, tag = 'internal scratch']
  #allocation2 [shape = 'f32[12,8,1024]{2,1,0:T(8,128)}', space=vmem, size = 0x60000, scoped, tag = 'scratch operand']
  %s0 = inlined_call_operand.vmem [shape: f32[12,8,128], index: 0, kind: input, shape index: {}]
  %s1 = inlined_call_operand.vmem [shape: s32[8,1], index: 1, kind: input, shape index: {}]
  %s2 = inlined_call_operand.vmem [shape: bf16[128,1024], index: 2, kind: input, shape index: {}]
  %s3 = inlined_call_operand.vmem [shape: f32[1,1024], index: 3, kind: input, shape index: {}]
  %s4 = inlined_call_operand.vmem [shape: bf16[256,1024], index: 4, kind: input, shape index: {}]
  %s5 = inlined_call_operand.vmem [shape: bf16[256,128], index: 5, kind: input, shape index: {}]
  %s6 = inlined_call_operand.vmem [shape: f32[1,128], index: 6, kind: input, shape index: {}]
  %s7 = inlined_call_operand.vmem [shape: f32[8,128], index: 7, kind: output, shape index: {}]
  %s8 = sld [smem:[#allocation0]]
  $region38: #{lstm_forward.1} parent=0
    _
  %s10 = ssub.s32 1, %s8
  %s11 = scalar_select 0, %s10, %s8
  // Predicated region
  $region2: #{lstm_forward.1} parent=0 // pred_check
    _
  $region3: #{lstm_forward.1} parent=0 // pred_check_branch
    %13 = sbr.rel (0) target = $region5
  $region4: #{lstm_forward.1} parent=0 // pred_region
    _
  $region5: #{lstm_forward.1} parent=0 // pred_fallthru
    _
  // Predicated region
  $region6: #{lstm_forward.1} parent=0 // pred_check
    _
  $region7: #{lstm_forward.1} parent=0 // pred_check_branch
    %15 = sbr.rel (0) target = $region9
  $region8: #{lstm_forward.1} parent=0 // pred_region
    _
  $region9: #{lstm_forward.1} parent=0 // pred_fallthru
    _
  // Predicated region
  $region10: #{lstm_forward.1} parent=0 // pred_check
    _
  $region11: #{lstm_forward.1} parent=0 // pred_check_branch
    %17 = sbr.rel (0) target = $region13
  $region12: #{lstm_forward.1} parent=0 // pred_region
    _
  $region13: #{lstm_forward.1} parent=0 // pred_fallthru
    _
  // Predicated region
  $region14: #{lstm_forward.1} parent=0 // pred_check
    _
  $region15: #{lstm_forward.1} parent=0 // pred_check_branch
    %19 = sbr.rel (0) target = $region17
  $region16: #{lstm_forward.1} parent=0 // pred_region
    _
  $region17: #{lstm_forward.1} parent=0 // pred_fallthru
    _
  // Predicated region
  $region18: #{lstm_forward.1} parent=0 // pred_check
    _
  $region19: #{lstm_forward.1} parent=0 // pred_check_branch
    %21 = sbr.rel (0) target = $region21
  $region20: #{lstm_forward.1} parent=0 // pred_region
    _
  $region21: #{lstm_forward.1} parent=0 // pred_fallthru
    _
  // Predicated region
  $region22: #{lstm_forward.1} parent=0 // pred_check
    _
  $region23: #{lstm_forward.1} parent=0 // pred_check_branch
    %23 = sbr.rel (0) target = $region25
  $region24: #{lstm_forward.1} parent=0 // pred_region
    _
  $region25: #{lstm_forward.1} parent=0 // pred_fallthru
    _
  // Predicated region
  $region26: #{lstm_forward.1} parent=0 // pred_check
    _
  $region27: #{lstm_forward.1} parent=0 // pred_check_branch
    %25 = sbr.rel (0) target = $region29
  $region28: #{lstm_forward.1} parent=0 // pred_region
    _
  $region29: #{lstm_forward.1} parent=0 // pred_fallthru
    _
  %v27 = vld [vmem:[%s0] sm:$0xff]
  %v28 = vld [vmem:[%s0 + $0x8] sm:$0xff]
  %v29 = vld [vmem:[%s0 + $0x10] sm:$0xff]
  %v30 = vld [vmem:[%s0 + $0x18] sm:$0xff]
  %v31 = vld [vmem:[%s0 + $0x20] sm:$0xff]
  %v32 = vld [vmem:[%s0 + $0x28] sm:$0xff]
  %v33 = vld [vmem:[%s0 + $0x30] sm:$0xff]
  %v34 = vld [vmem:[%s0 + $0x38] sm:$0xff]
  %v35 = vld [vmem:[%s0 + $0x40] sm:$0xff]
  %v36 = vld [vmem:[%s0 + $0x48] sm:$0xff]
  %v37 = vld [vmem:[%s0 + $0x50] sm:$0xff]
  %v38 = vld [vmem:[%s0 + $0x58] sm:$0xff]
  %v39 = vpack.c.bf16 %v28, %v27
  %v40 = vpack.c.bf16 %v30, %v29
  %v41 = vpack.c.bf16 %v32, %v31
  %v42 = vpack.c.bf16 %v34, %v33
  %v43 = vpack.c.bf16 %v36, %v35
  %v44 = vpack.c.bf16 %v38, %v37
  %v45 = vld [vmem:[%s2] sm:$0xff]
  %v46 = vld [vmem:[%s2 + $0x8] sm:$0xff]
  %v47 = vld [vmem:[%s2 + $0x10] sm:$0xff]
  %v48 = vld [vmem:[%s2 + $0x18] sm:$0xff]
  %v49 = vld [vmem:[%s2 + $0x20] sm:$0xff]
  %v50 = vld [vmem:[%s2 + $0x28] sm:$0xff]
  %v51 = vld [vmem:[%s2 + $0x30] sm:$0xff]
  %v52 = vld [vmem:[%s2 + $0x38] sm:$0xff]
  %v53 = vld [vmem:[%s2 + $0x40] sm:$0xff]
  %v54 = vld [vmem:[%s2 + $0x48] sm:$0xff]
  %v55 = vld [vmem:[%s2 + $0x50] sm:$0xff]
  %v56 = vld [vmem:[%s2 + $0x58] sm:$0xff]
  %v57 = vld [vmem:[%s2 + $0x60] sm:$0xff]
  %v58 = vld [vmem:[%s2 + $0x68] sm:$0xff]
  %v59 = vld [vmem:[%s2 + $0x70] sm:$0xff]
  %v60 = vld [vmem:[%s2 + $0x78] sm:$0xff]
  %v61 = vld [vmem:[%s2 + $0x80] sm:$0xff]
  %v62 = vld [vmem:[%s2 + $0x88] sm:$0xff]
  %v63 = vld [vmem:[%s2 + $0x90] sm:$0xff]
  %v64 = vld [vmem:[%s2 + $0x98] sm:$0xff]
  %v65 = vld [vmem:[%s2 + $0xa0] sm:$0xff]
  %v66 = vld [vmem:[%s2 + $0xa8] sm:$0xff]
  %v67 = vld [vmem:[%s2 + $0xb0] sm:$0xff]
  %v68 = vld [vmem:[%s2 + $0xb8] sm:$0xff]
  %v69 = vld [vmem:[%s2 + $0xc0] sm:$0xff]
  %v70 = vld [vmem:[%s2 + $0xc8] sm:$0xff]
  %v71 = vld [vmem:[%s2 + $0xd0] sm:$0xff]
  %v72 = vld [vmem:[%s2 + $0xd8] sm:$0xff]
  %v73 = vld [vmem:[%s2 + $0xe0] sm:$0xff]
  %v74 = vld [vmem:[%s2 + $0xe8] sm:$0xff]
  %v75 = vld [vmem:[%s2 + $0xf0] sm:$0xff]
  %v76 = vld [vmem:[%s2 + $0xf8] sm:$0xff]
  %v77 = vld [vmem:[%s2 + $0x100] sm:$0xff]
  %v78 = vld [vmem:[%s2 + $0x108] sm:$0xff]
  %v79 = vld [vmem:[%s2 + $0x110] sm:$0xff]
  %v80 = vld [vmem:[%s2 + $0x118] sm:$0xff]
  %v81 = vld [vmem:[%s2 + $0x120] sm:$0xff]
  %v82 = vld [vmem:[%s2 + $0x128] sm:$0xff]
  %v83 = vld [vmem:[%s2 + $0x130] sm:$0xff]
  %v84 = vld [vmem:[%s2 + $0x138] sm:$0xff]
  %v85 = vld [vmem:[%s2 + $0x140] sm:$0xff]
  %v86 = vld [vmem:[%s2 + $0x148] sm:$0xff]
  %v87 = vld [vmem:[%s2 + $0x150] sm:$0xff]
  %v88 = vld [vmem:[%s2 + $0x158] sm:$0xff]
  %v89 = vld [vmem:[%s2 + $0x160] sm:$0xff]
  %v90 = vld [vmem:[%s2 + $0x168] sm:$0xff]
  %v91 = vld [vmem:[%s2 + $0x170] sm:$0xff]
  %v92 = vld [vmem:[%s2 + $0x178] sm:$0xff]
  %v93 = vld [vmem:[%s2 + $0x180] sm:$0xff]
  %v94 = vld [vmem:[%s2 + $0x188] sm:$0xff]
  %v95 = vld [vmem:[%s2 + $0x190] sm:$0xff]
  %v96 = vld [vmem:[%s2 + $0x198] sm:$0xff]
  %v97 = vld [vmem:[%s2 + $0x1a0] sm:$0xff]
  %v98 = vld [vmem:[%s2 + $0x1a8] sm:$0xff]
  %v99 = vld [vmem:[%s2 + $0x1b0] sm:$0xff]
  %v100 = vld [vmem:[%s2 + $0x1b8] sm:$0xff]
  %v101 = vld [vmem:[%s2 + $0x1c0] sm:$0xff]
  %v102 = vld [vmem:[%s2 + $0x1c8] sm:$0xff]
  %v103 = vld [vmem:[%s2 + $0x1d0] sm:$0xff]
  %v104 = vld [vmem:[%s2 + $0x1d8] sm:$0xff]
  %v105 = vld [vmem:[%s2 + $0x1e0] sm:$0xff]
  %v106 = vld [vmem:[%s2 + $0x1e8] sm:$0xff]
  %v107 = vld [vmem:[%s2 + $0x1f0] sm:$0xff]
  %v108 = vld [vmem:[%s2 + $0x1f8] sm:$0xff]
  %v109 = vld [vmem:[%s3] sm:$0xff]
  %v111 = vlaneseq
  %v112 = vshrl.u32 %v111, 7
  %v113 = vsub.s32 0, %v112
  %v114 = vrot.slane %v109, %v113
  %v115 = vlaneseq
  %v116 = vshrl.u32 %v115, 7
  %v117 = vsub.s32 1, %v116
  %v118 = vrot.slane %v109, %v117
  %v119 = vlaneseq
  %v120 = vshrl.u32 %v119, 7
  %v121 = vsub.s32 2, %v120
  %v122 = vrot.slane %v109, %v121
  %v123 = vlaneseq
  %v124 = vshrl.u32 %v123, 7
  %v125 = vsub.s32 3, %v124
  %v126 = vrot.slane %v109, %v125
  %v127 = vlaneseq
  %v128 = vshrl.u32 %v127, 7
  %v129 = vsub.s32 4, %v128
  %v130 = vrot.slane %v109, %v129
  %v131 = vlaneseq
  %v132 = vshrl.u32 %v131, 7
  %v133 = vsub.s32 5, %v132
  %v134 = vrot.slane %v109, %v133
  %v135 = vlaneseq
  %v136 = vshrl.u32 %v135, 7
  %v137 = vsub.s32 6, %v136
  %v138 = vrot.slane %v109, %v137
  %v139 = vlaneseq
  %v140 = vshrl.u32 %v139, 7
  %v141 = vsub.s32 7, %v140
  %v142 = vrot.slane %v109, %v141
  %v215 = vunpack.c.l.b16 %v45
  %v216 = vunpack.c.h.b16 %v45
  %v217 = vunpack.c.l.b16 %v46
  %v218 = vunpack.c.h.b16 %v46
  %v219 = vunpack.c.l.b16 %v47
  %v220 = vunpack.c.h.b16 %v47
  %v221 = vunpack.c.l.b16 %v48
  %v222 = vunpack.c.h.b16 %v48
  %v223 = vunpack.c.l.b16 %v49
  %v224 = vunpack.c.h.b16 %v49
  %v225 = vunpack.c.l.b16 %v50
  %v226 = vunpack.c.h.b16 %v50
  %v227 = vunpack.c.l.b16 %v51
  %v228 = vunpack.c.h.b16 %v51
  %v229 = vunpack.c.l.b16 %v52
  %v230 = vunpack.c.h.b16 %v52
  %v231 = vunpack.c.l.b16 %v53
  %v232 = vunpack.c.h.b16 %v53
  %v233 = vunpack.c.l.b16 %v54
  %v234 = vunpack.c.h.b16 %v54
  %v235 = vunpack.c.l.b16 %v55
  %v236 = vunpack.c.h.b16 %v55
  %v237 = vunpack.c.l.b16 %v56
  %v238 = vunpack.c.h.b16 %v56
  %v239 = vunpack.c.l.b16 %v57
  %v240 = vunpack.c.h.b16 %v57
  %v241 = vunpack.c.l.b16 %v58
  %v242 = vunpack.c.h.b16 %v58
  %v243 = vunpack.c.l.b16 %v59
  %v244 = vunpack.c.h.b16 %v59
  %v245 = vunpack.c.l.b16 %v60
  %v246 = vunpack.c.h.b16 %v60
  %v247 = vunpack.c.l.b16 %v61
  %v248 = vunpack.c.h.b16 %v61
  %v249 = vunpack.c.l.b16 %v62
  %v250 = vunpack.c.h.b16 %v62
  %v251 = vunpack.c.l.b16 %v63
  %v252 = vunpack.c.h.b16 %v63
  %v253 = vunpack.c.l.b16 %v64
  %v254 = vunpack.c.h.b16 %v64
  %v255 = vunpack.c.l.b16 %v65
  %v256 = vunpack.c.h.b16 %v65
  %v257 = vunpack.c.l.b16 %v66
  %v258 = vunpack.c.h.b16 %v66
  %v259 = vunpack.c.l.b16 %v67
  %v260 = vunpack.c.h.b16 %v67
  %v261 = vunpack.c.l.b16 %v68
  %v262 = vunpack.c.h.b16 %v68
  %v263 = vunpack.c.l.b16 %v69
  %v264 = vunpack.c.h.b16 %v69
  %v265 = vunpack.c.l.b16 %v70
  %v266 = vunpack.c.h.b16 %v70
  %v267 = vunpack.c.l.b16 %v71
  %v268 = vunpack.c.h.b16 %v71
  %v269 = vunpack.c.l.b16 %v72
  %v270 = vunpack.c.h.b16 %v72
  %v271 = vunpack.c.l.b16 %v73
  %v272 = vunpack.c.h.b16 %v73
  %v273 = vunpack.c.l.b16 %v74
  %v274 = vunpack.c.h.b16 %v74
  %v275 = vunpack.c.l.b16 %v75
  %v276 = vunpack.c.h.b16 %v75
  %v277 = vunpack.c.l.b16 %v76
  %v278 = vunpack.c.h.b16 %v76
  %v279 = vunpack.c.l.b16 %v77
  %v280 = vunpack.c.h.b16 %v77
  %v281 = vunpack.c.l.b16 %v78
  %v282 = vunpack.c.h.b16 %v78
  %v283 = vunpack.c.l.b16 %v79
  %v284 = vunpack.c.h.b16 %v79
  %v285 = vunpack.c.l.b16 %v80
  %v286 = vunpack.c.h.b16 %v80
  %v287 = vunpack.c.l.b16 %v81
  %v288 = vunpack.c.h.b16 %v81
  %v289 = vunpack.c.l.b16 %v82
  %v290 = vunpack.c.h.b16 %v82
  %v291 = vunpack.c.l.b16 %v83
  %v292 = vunpack.c.h.b16 %v83
  %v293 = vunpack.c.l.b16 %v84
  %v294 = vunpack.c.h.b16 %v84
  %v295 = vunpack.c.l.b16 %v85
  %v296 = vunpack.c.h.b16 %v85
  %v297 = vunpack.c.l.b16 %v86
  %v298 = vunpack.c.h.b16 %v86
  %v299 = vunpack.c.l.b16 %v87
  %v300 = vunpack.c.h.b16 %v87
  %v301 = vunpack.c.l.b16 %v88
  %v302 = vunpack.c.h.b16 %v88
  %v303 = vunpack.c.l.b16 %v89
  %v304 = vunpack.c.h.b16 %v89
  %v305 = vunpack.c.l.b16 %v90
  %v306 = vunpack.c.h.b16 %v90
  %v307 = vunpack.c.l.b16 %v91
  %v308 = vunpack.c.h.b16 %v91
  %v309 = vunpack.c.l.b16 %v92
  %v310 = vunpack.c.h.b16 %v92
  %v311 = vunpack.c.l.b16 %v93
  %v312 = vunpack.c.h.b16 %v93
  %v313 = vunpack.c.l.b16 %v94
  %v314 = vunpack.c.h.b16 %v94
  %v315 = vunpack.c.l.b16 %v95
  %v316 = vunpack.c.h.b16 %v95
  %v317 = vunpack.c.l.b16 %v96
  %v318 = vunpack.c.h.b16 %v96
  %v319 = vunpack.c.l.b16 %v97
  %v320 = vunpack.c.h.b16 %v97
  %v321 = vunpack.c.l.b16 %v98
  %v322 = vunpack.c.h.b16 %v98
  %v323 = vunpack.c.l.b16 %v99
  %v324 = vunpack.c.h.b16 %v99
  %v325 = vunpack.c.l.b16 %v100
  %v326 = vunpack.c.h.b16 %v100
  %v327 = vunpack.c.l.b16 %v101
  %v328 = vunpack.c.h.b16 %v101
  %v329 = vunpack.c.l.b16 %v102
  %v330 = vunpack.c.h.b16 %v102
  %v331 = vunpack.c.l.b16 %v103
  %v332 = vunpack.c.h.b16 %v103
  %v333 = vunpack.c.l.b16 %v104
  %v334 = vunpack.c.h.b16 %v104
  %v335 = vunpack.c.l.b16 %v105
  %v336 = vunpack.c.h.b16 %v105
  %v337 = vunpack.c.l.b16 %v106
  %v338 = vunpack.c.h.b16 %v106
  %v339 = vunpack.c.l.b16 %v107
  %v340 = vunpack.c.h.b16 %v107
  %v341 = vunpack.c.l.b16 %v108
  %v342 = vunpack.c.h.b16 %v108
  %v343 = vpack.c.b16 %v223, %v215
  %v344 = vpack.c.b16 %v224, %v216
  %v345 = vpack.c.b16 %v225, %v217
  %v346 = vpack.c.b16 %v226, %v218
  %v347 = vpack.c.b16 %v227, %v219
  %v348 = vpack.c.b16 %v228, %v220
  %v349 = vpack.c.b16 %v229, %v221
  %v350 = vpack.c.b16 %v230, %v222
  %v351 = vpack.c.b16 %v239, %v231
  %v352 = vpack.c.b16 %v240, %v232
  %v353 = vpack.c.b16 %v241, %v233
  %v354 = vpack.c.b16 %v242, %v234
  %v355 = vpack.c.b16 %v243, %v235
  %v356 = vpack.c.b16 %v244, %v236
  %v357 = vpack.c.b16 %v245, %v237
  %v358 = vpack.c.b16 %v246, %v238
  %v359 = vpack.c.b16 %v255, %v247
  %v360 = vpack.c.b16 %v256, %v248
  %v361 = vpack.c.b16 %v257, %v249
  %v362 = vpack.c.b16 %v258, %v250
  %v363 = vpack.c.b16 %v259, %v251
  %v364 = vpack.c.b16 %v260, %v252
  %v365 = vpack.c.b16 %v261, %v253
  %v366 = vpack.c.b16 %v262, %v254
  %v367 = vpack.c.b16 %v271, %v263
  %v368 = vpack.c.b16 %v272, %v264
  %v369 = vpack.c.b16 %v273, %v265
  %v370 = vpack.c.b16 %v274, %v266
  %v371 = vpack.c.b16 %v275, %v267
  %v372 = vpack.c.b16 %v276, %v268
  %v373 = vpack.c.b16 %v277, %v269
  %v374 = vpack.c.b16 %v278, %v270
  %v375 = vpack.c.b16 %v287, %v279
  %v376 = vpack.c.b16 %v288, %v280
  %v377 = vpack.c.b16 %v289, %v281
  %v378 = vpack.c.b16 %v290, %v282
  %v379 = vpack.c.b16 %v291, %v283
  %v380 = vpack.c.b16 %v292, %v284
  %v381 = vpack.c.b16 %v293, %v285
  %v382 = vpack.c.b16 %v294, %v286
  %v383 = vpack.c.b16 %v303, %v295
  %v384 = vpack.c.b16 %v304, %v296
  %v385 = vpack.c.b16 %v305, %v297
  %v386 = vpack.c.b16 %v306, %v298
  %v387 = vpack.c.b16 %v307, %v299
  %v388 = vpack.c.b16 %v308, %v300
  %v389 = vpack.c.b16 %v309, %v301
  %v390 = vpack.c.b16 %v310, %v302
  %v391 = vpack.c.b16 %v319, %v311
  %v392 = vpack.c.b16 %v320, %v312
  %v393 = vpack.c.b16 %v321, %v313
  %v394 = vpack.c.b16 %v322, %v314
  %v395 = vpack.c.b16 %v323, %v315
  %v396 = vpack.c.b16 %v324, %v316
  %v397 = vpack.c.b16 %v325, %v317
  %v398 = vpack.c.b16 %v326, %v318
  %v399 = vpack.c.b16 %v335, %v327
  %v400 = vpack.c.b16 %v336, %v328
  %v401 = vpack.c.b16 %v337, %v329
  %v402 = vpack.c.b16 %v338, %v330
  %v403 = vpack.c.b16 %v339, %v331
  %v404 = vpack.c.b16 %v340, %v332
  %v405 = vpack.c.b16 %v341, %v333
  %v406 = vpack.c.b16 %v342, %v334
  %471 = vmatprep.subr.bf16.mxu0 %v344
  %472 = vmatpush1.bf16.msra.mxu0 %v343
  %473 = vmatprep.subr.bf16.mxu0 %v352
  %474 = vmatpush1.bf16.msra.mxu0 %v351
  %475 = vmatprep.subr.bf16.mxu0 %v360
  %476 = vmatpush1.bf16.msra.mxu0 %v359
  %477 = vmatprep.subr.bf16.mxu0 %v368
  %478 = vmatpush1.bf16.msra.mxu0 %v367
  %479 = vmatprep.subr.bf16.mxu0 %v376
  %480 = vmatpush1.bf16.msra.mxu0 %v375
  %481 = vmatprep.subr.bf16.mxu0 %v384
  %482 = vmatpush1.bf16.msra.mxu0 %v383
  %483 = vmatprep.subr.bf16.mxu0 %v392
  %484 = vmatpush1.bf16.msra.mxu0 %v391
  %485 = vmatprep.subr.bf16.mxu0 %v400
  %486 = vmatpush1.bf16.msra.mxu0 %v399
  %487 = vmatprep.subr.bf16.mxu0 0
  %488 = vmatpush1.bf16.msra.mxu0 0
  %489 = vmatprep.subr.bf16.mxu0 0
  %490 = vmatpush1.bf16.msra.mxu0 0
  %491 = vmatprep.subr.bf16.mxu0 0
  %492 = vmatpush1.bf16.msra.mxu0 0
  %493 = vmatprep.subr.bf16.mxu0 0
  %494 = vmatpush1.bf16.msra.mxu0 0
  %495 = vmatprep.subr.bf16.mxu0 0
  %496 = vmatpush1.bf16.msra.mxu0 0
  %497 = vmatprep.subr.bf16.mxu0 0
  %498 = vmatpush1.bf16.msra.mxu0 0
  %499 = vmatprep.subr.bf16.mxu0 0
  %500 = vmatpush1.bf16.msra.mxu0 0
  %501 = vmatprep.subr.bf16.mxu0 0
  %502 = vmatpush1.bf16.msra.mxu0 0
  %503 = vmatprep.mubr.bf16.mxu0 0
  %504 = vmatmul.mubr.bf16.gmra.mrb[0].mxu0 %v39
  %v505 = vpop.f32.mrb[0].mxu0
  %v506 = vadd.f32 %v114, %v505
  %v507 = vpop.f32.mrb[0].mxu0
  %v508 = vadd.f32 %v118, %v507
  %v509 = vpop.f32.mrb[0].mxu0
  %v510 = vadd.f32 %v114, %v509
  %v511 = vpop.f32.mrb[0].mxu0
  %v512 = vadd.f32 %v118, %v511
  %513 = vmatprep.mubr.bf16.mxu0 0
  %514 = vmatmul.mubr.bf16.gmra.mrb[0].mxu0 %v40
  %v515 = vpop.f32.mrb[0].mxu0
  %v516 = vadd.f32 %v114, %v515
  %v517 = vpop.f32.mrb[0].mxu0
  %v518 = vadd.f32 %v118, %v517
  %v519 = vpop.f32.mrb[0].mxu0
  %v520 = vadd.f32 %v114, %v519
  %v521 = vpop.f32.mrb[0].mxu0
  %v522 = vadd.f32 %v118, %v521
  %523 = vmatprep.mubr.bf16.mxu0 0
  %524 = vmatmul.mubr.bf16.gmra.mrb[0].mxu0 %v41
  %v525 = vpop.f32.mrb[0].mxu0
  %v526 = vadd.f32 %v114, %v525
  %v527 = vpop.f32.mrb[0].mxu0
  %v528 = vadd.f32 %v118, %v527
  %v529 = vpop.f32.mrb[0].mxu0
  %v530 = vadd.f32 %v114, %v529
  %v531 = vpop.f32.mrb[0].mxu0
  %v532 = vadd.f32 %v118, %v531
  %533 = vmatprep.mubr.bf16.mxu0 0
  %534 = vmatmul.mubr.bf16.gmra.mrb[0].mxu0 %v42
  %v535 = vpop.f32.mrb[0].mxu0
  %v536 = vadd.f32 %v114, %v535
  %v537 = vpop.f32.mrb[0].mxu0
  %v538 = vadd.f32 %v118, %v537
  %v539 = vpop.f32.mrb[0].mxu0
  %v540 = vadd.f32 %v114, %v539
  %v541 = vpop.f32.mrb[0].mxu0
  %v542 = vadd.f32 %v118, %v541
  %543 = vmatprep.mubr.bf16.mxu0 0
  %544 = vmatmul.mubr.bf16.gmra.mrb[0].mxu0 %v43
  %v545 = vpop.f32.mrb[0].mxu0
  %v546 = vadd.f32 %v114, %v545
  %v547 = vpop.f32.mrb[0].mxu0
  %v548 = vadd.f32 %v118, %v547
  %v549 = vpop.f32.mrb[0].mxu0
  %v550 = vadd.f32 %v114, %v549
  %v551 = vpop.f32.mrb[0].mxu0
  %v552 = vadd.f32 %v118, %v551
  %553 = vmatprep.mubr.bf16.mxu0 0
  %554 = vmatmul.mubr.bf16.gmra.mrb[0].mxu0 %v44
  %v555 = vpop.f32.mrb[0].mxu0
  %v556 = vadd.f32 %v114, %v555
  %v557 = vpop.f32.mrb[0].mxu0
  %v558 = vadd.f32 %v118, %v557
  %v559 = vpop.f32.mrb[0].mxu0
  %v560 = vadd.f32 %v114, %v559
  %v561 = vpop.f32.mrb[0].mxu0
  %v562 = vadd.f32 %v118, %v561
  %563 = vdwg.mxu0
  %564 = vmatprep.subr.bf16.mxu0 %v346
  %565 = vmatpush1.bf16.msra.mxu0 %v345
  %566 = vmatprep.subr.bf16.mxu0 %v354
  %567 = vmatpush1.bf16.msra.mxu0 %v353
  %568 = vmatprep.subr.bf16.mxu0 %v362
  %569 = vmatpush1.bf16.msra.mxu0 %v361
  %570 = vmatprep.subr.bf16.mxu0 %v370
  %571 = vmatpush1.bf16.msra.mxu0 %v369
  %572 = vmatprep.subr.bf16.mxu0 %v378
  %573 = vmatpush1.bf16.msra.mxu0 %v377
  %574 = vmatprep.subr.bf16.mxu0 %v386
  %575 = vmatpush1.bf16.msra.mxu0 %v385
  %576 = vmatprep.subr.bf16.mxu0 %v394
  %577 = vmatpush1.bf16.msra.mxu0 %v393
  %578 = vmatprep.subr.bf16.mxu0 %v402
  %579 = vmatpush1.bf16.msra.mxu0 %v401
  %580 = vmatprep.subr.bf16.mxu0 0
  %581 = vmatpush1.bf16.msra.mxu0 0
  %582 = vmatprep.subr.bf16.mxu0 0
  %583 = vmatpush1.bf16.msra.mxu0 0
  %584 = vmatprep.subr.bf16.mxu0 0
  %585 = vmatpush1.bf16.msra.mxu0 0
  %586 = vmatprep.subr.bf16.mxu0 0
  %587 = vmatpush1.bf16.msra.mxu0 0
  %588 = vmatprep.subr.bf16.mxu0 0
  %589 = vmatpush1.bf16.msra.mxu0 0
  %590 = vmatprep.subr.bf16.mxu0 0
  %591 = vmatpush1.bf16.msra.mxu0 0
  %592 = vmatprep.subr.bf16.mxu0 0
  %593 = vmatpush1.bf16.msra.mxu0 0
  %594 = vmatprep.subr.bf16.mxu0 0
  %595 = vmatpush1.bf16.msra.mxu0 0
  %596 = vmatprep.mubr.bf16.mxu0 0
  %597 = vmatmul.mubr.bf16.gmra.mrb[0].mxu0 %v39
  %v598 = vpop.f32.mrb[0].mxu0
  %v599 = vadd.f32 %v122, %v598
  %v600 = vpop.f32.mrb[0].mxu0
  %v601 = vadd.f32 %v126, %v600
  %v602 = vpop.f32.mrb[0].mxu0
  %v603 = vadd.f32 %v122, %v602
  %v604 = vpop.f32.mrb[0].mxu0
  %v605 = vadd.f32 %v126, %v604
  %606 = vmatprep.mubr.bf16.mxu0 0
  %607 = vmatmul.mubr.bf16.gmra.mrb[0].mxu0 %v40
  %v608 = vpop.f32.mrb[0].mxu0
  %v609 = vadd.f32 %v122, %v608
  %v610 = vpop.f32.mrb[0].mxu0
  %v611 = vadd.f32 %v126, %v610
  %v612 = vpop.f32.mrb[0].mxu0
  %v613 = vadd.f32 %v122, %v612
  %v614 = vpop.f32.mrb[0].mxu0
  %v615 = vadd.f32 %v126, %v614
  %616 = vmatprep.mubr.bf16.mxu0 0
  %617 = vmatmul.mubr.bf16.gmra.mrb[0].mxu0 %v41
  %v618 = vpop.f32.mrb[0].mxu0
  %v619 = vadd.f32 %v122, %v618
  %v620 = vpop.f32.mrb[0].mxu0
  %v621 = vadd.f32 %v126, %v620
  %v622 = vpop.f32.mrb[0].mxu0
  %v623 = vadd.f32 %v122, %v622
  %v624 = vpop.f32.mrb[0].mxu0
  %v625 = vadd.f32 %v126, %v624
  %626 = vmatprep.mubr.bf16.mxu0 0
  %627 = vmatmul.mubr.bf16.gmra.mrb[0].mxu0 %v42
  %v628 = vpop.f32.mrb[0].mxu0
  %v629 = vadd.f32 %v122, %v628
  %v630 = vpop.f32.mrb[0].mxu0
  %v631 = vadd.f32 %v126, %v630
  %v632 = vpop.f32.mrb[0].mxu0
  %v633 = vadd.f32 %v122, %v632
  %v634 = vpop.f32.mrb[0].mxu0
  %v635 = vadd.f32 %v126, %v634
  %636 = vmatprep.mubr.bf16.mxu0 0
  %637 = vmatmul.mubr.bf16.gmra.mrb[0].mxu0 %v43
  %v638 = vpop.f32.mrb[0].mxu0
  %v639 = vadd.f32 %v122, %v638
  %v640 = vpop.f32.mrb[0].mxu0
  %v641 = vadd.f32 %v126, %v640
  %v642 = vpop.f32.mrb[0].mxu0
  %v643 = vadd.f32 %v122, %v642
  %v644 = vpop.f32.mrb[0].mxu0
  %v645 = vadd.f32 %v126, %v644
  %646 = vmatprep.mubr.bf16.mxu0 0
  %647 = vmatmul.mubr.bf16.gmra.mrb[0].mxu0 %v44
  %v648 = vpop.f32.mrb[0].mxu0
  %v649 = vadd.f32 %v122, %v648
  %v650 = vpop.f32.mrb[0].mxu0
  %v651 = vadd.f32 %v126, %v650
  %v652 = vpop.f32.mrb[0].mxu0
  %v653 = vadd.f32 %v122, %v652
  %v654 = vpop.f32.mrb[0].mxu0
  %v655 = vadd.f32 %v126, %v654
  %656 = vdwg.mxu0
  %657 = vmatprep.subr.bf16.mxu0 %v348
  %658 = vmatpush1.bf16.msra.mxu0 %v347
  %659 = vmatprep.subr.bf16.mxu0 %v356
  %660 = vmatpush1.bf16.msra.mxu0 %v355
  %661 = vmatprep.subr.bf16.mxu0 %v364
  %662 = vmatpush1.bf16.msra.mxu0 %v363
  %663 = vmatprep.subr.bf16.mxu0 %v372
  %664 = vmatpush1.bf16.msra.mxu0 %v371
  %665 = vmatprep.subr.bf16.mxu0 %v380
  %666 = vmatpush1.bf16.msra.mxu0 %v379
  %667 = vmatprep.subr.bf16.mxu0 %v388
  %668 = vmatpush1.bf16.msra.mxu0 %v387
  %669 = vmatprep.subr.bf16.mxu0 %v396
  %670 = vmatpush1.bf16.msra.mxu0 %v395
  %671 = vmatprep.subr.bf16.mxu0 %v404
  %672 = vmatpush1.bf16.msra.mxu0 %v403
  %673 = vmatprep.subr.bf16.mxu0 0
  %674 = vmatpush1.bf16.msra.mxu0 0
  %675 = vmatprep.subr.bf16.mxu0 0
  %676 = vmatpush1.bf16.msra.mxu0 0
  %677 = vmatprep.subr.bf16.mxu0 0
  %678 = vmatpush1.bf16.msra.mxu0 0
  %679 = vmatprep.subr.bf16.mxu0 0
  %680 = vmatpush1.bf16.msra.mxu0 0
  %681 = vmatprep.subr.bf16.mxu0 0
  %682 = vmatpush1.bf16.msra.mxu0 0
  %683 = vmatprep.subr.bf16.mxu0 0
  %684 = vmatpush1.bf16.msra.mxu0 0
  %685 = vmatprep.subr.bf16.mxu0 0
  %686 = vmatpush1.bf16.msra.mxu0 0
  %687 = vmatprep.subr.bf16.mxu0 0
  %688 = vmatpush1.bf16.msra.mxu0 0
  %689 = vmatprep.mubr.bf16.mxu0 0
  %690 = vmatmul.mubr.bf16.gmra.mrb[0].mxu0 %v39
  %v691 = vpop.f32.mrb[0].mxu0
  %v692 = vadd.f32 %v130, %v691
  %v693 = vpop.f32.mrb[0].mxu0
  %v694 = vadd.f32 %v134, %v693
  %v695 = vpop.f32.mrb[0].mxu0
  %v696 = vadd.f32 %v130, %v695
  %v697 = vpop.f32.mrb[0].mxu0
  %v698 = vadd.f32 %v134, %v697
  %699 = vmatprep.mubr.bf16.mxu0 0
  %700 = vmatmul.mubr.bf16.gmra.mrb[0].mxu0 %v40
  %v701 = vpop.f32.mrb[0].mxu0
  %v702 = vadd.f32 %v130, %v701
  %v703 = vpop.f32.mrb[0].mxu0
  %v704 = vadd.f32 %v134, %v703
  %v705 = vpop.f32.mrb[0].mxu0
  %v706 = vadd.f32 %v130, %v705
  %v707 = vpop.f32.mrb[0].mxu0
  %v708 = vadd.f32 %v134, %v707
  %709 = vmatprep.mubr.bf16.mxu0 0
  %710 = vmatmul.mubr.bf16.gmra.mrb[0].mxu0 %v41
  %v711 = vpop.f32.mrb[0].mxu0
  %v712 = vadd.f32 %v130, %v711
  %v713 = vpop.f32.mrb[0].mxu0
  %v714 = vadd.f32 %v134, %v713
  %v715 = vpop.f32.mrb[0].mxu0
  %v716 = vadd.f32 %v130, %v715
  %v717 = vpop.f32.mrb[0].mxu0
  %v718 = vadd.f32 %v134, %v717
  %719 = vmatprep.mubr.bf16.mxu0 0
  %720 = vmatmul.mubr.bf16.gmra.mrb[0].mxu0 %v42
  %v721 = vpop.f32.mrb[0].mxu0
  %v722 = vadd.f32 %v130, %v721
  %v723 = vpop.f32.mrb[0].mxu0
  %v724 = vadd.f32 %v134, %v723
  %v725 = vpop.f32.mrb[0].mxu0
  %v726 = vadd.f32 %v130, %v725
  %v727 = vpop.f32.mrb[0].mxu0
  %v728 = vadd.f32 %v134, %v727
  %729 = vmatprep.mubr.bf16.mxu0 0
  %730 = vmatmul.mubr.bf16.gmra.mrb[0].mxu0 %v43
  %v731 = vpop.f32.mrb[0].mxu0
  %v732 = vadd.f32 %v130, %v731
  %v733 = vpop.f32.mrb[0].mxu0
  %v734 = vadd.f32 %v134, %v733
  %v735 = vpop.f32.mrb[0].mxu0
  %v736 = vadd.f32 %v130, %v735
  %v737 = vpop.f32.mrb[0].mxu0
  %v738 = vadd.f32 %v134, %v737
  %739 = vmatprep.mubr.bf16.mxu0 0
  %740 = vmatmul.mubr.bf16.gmra.mrb[0].mxu0 %v44
  %v741 = vpop.f32.mrb[0].mxu0
  %v742 = vadd.f32 %v130, %v741
  %v743 = vpop.f32.mrb[0].mxu0
  %v744 = vadd.f32 %v134, %v743
  %v745 = vpop.f32.mrb[0].mxu0
  %v746 = vadd.f32 %v130, %v745
  %v747 = vpop.f32.mrb[0].mxu0
  %v748 = vadd.f32 %v134, %v747
  %749 = vdwg.mxu0
  %750 = vmatprep.subr.bf16.mxu0 %v350
  %751 = vmatpush1.bf16.msra.mxu0 %v349
  %752 = vmatprep.subr.bf16.mxu0 %v358
  %753 = vmatpush1.bf16.msra.mxu0 %v357
  %754 = vmatprep.subr.bf16.mxu0 %v366
  %755 = vmatpush1.bf16.msra.mxu0 %v365
  %756 = vmatprep.subr.bf16.mxu0 %v374
  %757 = vmatpush1.bf16.msra.mxu0 %v373
  %758 = vmatprep.subr.bf16.mxu0 %v382
  %759 = vmatpush1.bf16.msra.mxu0 %v381
  %760 = vmatprep.subr.bf16.mxu0 %v390
  %761 = vmatpush1.bf16.msra.mxu0 %v389
  %762 = vmatprep.subr.bf16.mxu0 %v398
  %763 = vmatpush1.bf16.msra.mxu0 %v397
  %764 = vmatprep.subr.bf16.mxu0 %v406
  %765 = vmatpush1.bf16.msra.mxu0 %v405
  %766 = vmatprep.subr.bf16.mxu0 0
  %767 = vmatpush1.bf16.msra.mxu0 0
  %768 = vmatprep.subr.bf16.mxu0 0
  %769 = vmatpush1.bf16.msra.mxu0 0
  %770 = vmatprep.subr.bf16.mxu0 0
  %771 = vmatpush1.bf16.msra.mxu0 0
  %772 = vmatprep.subr.bf16.mxu0 0
  %773 = vmatpush1.bf16.msra.mxu0 0
  %774 = vmatprep.subr.bf16.mxu0 0
  %775 = vmatpush1.bf16.msra.mxu0 0
  %776 = vmatprep.subr.bf16.mxu0 0
  %777 = vmatpush1.bf16.msra.mxu0 0
  %778 = vmatprep.subr.bf16.mxu0 0
  %779 = vmatpush1.bf16.msra.mxu0 0
  %780 = vmatprep.subr.bf16.mxu0 0
  %781 = vmatpush1.bf16.msra.mxu0 0
  %782 = vmatprep.mubr.bf16.mxu0 0
  %783 = vmatmul.mubr.bf16.gmra.mrb[0].mxu0 %v39
  %v784 = vpop.f32.mrb[0].mxu0
  %v785 = vadd.f32 %v138, %v784
  %v786 = vpop.f32.mrb[0].mxu0
  %v787 = vadd.f32 %v142, %v786
  %v788 = vpop.f32.mrb[0].mxu0
  %v789 = vadd.f32 %v138, %v788
  %v790 = vpop.f32.mrb[0].mxu0
  %v791 = vadd.f32 %v142, %v790
  %792 = vmatprep.mubr.bf16.mxu0 0
  %793 = vmatmul.mubr.bf16.gmra.mrb[0].mxu0 %v40
  %v794 = vpop.f32.mrb[0].mxu0
  %v795 = vadd.f32 %v138, %v794
  %v796 = vpop.f32.mrb[0].mxu0
  %v797 = vadd.f32 %v142, %v796
  %v798 = vpop.f32.mrb[0].mxu0
  %v799 = vadd.f32 %v138, %v798
  %v800 = vpop.f32.mrb[0].mxu0
  %v801 = vadd.f32 %v142, %v800
  %802 = vmatprep.mubr.bf16.mxu0 0
  %803 = vmatmul.mubr.bf16.gmra.mrb[0].mxu0 %v41
  %v804 = vpop.f32.mrb[0].mxu0
  %v805 = vadd.f32 %v138, %v804
  %v806 = vpop.f32.mrb[0].mxu0
  %v807 = vadd.f32 %v142, %v806
  %v808 = vpop.f32.mrb[0].mxu0
  %v809 = vadd.f32 %v138, %v808
  %v810 = vpop.f32.mrb[0].mxu0
  %v811 = vadd.f32 %v142, %v810
  %812 = vmatprep.mubr.bf16.mxu0 0
  %813 = vmatmul.mubr.bf16.gmra.mrb[0].mxu0 %v42
  %v814 = vpop.f32.mrb[0].mxu0
  %v815 = vadd.f32 %v138, %v814
  %v816 = vpop.f32.mrb[0].mxu0
  %v817 = vadd.f32 %v142, %v816
  %v818 = vpop.f32.mrb[0].mxu0
  %v819 = vadd.f32 %v138, %v818
  %v820 = vpop.f32.mrb[0].mxu0
  %v821 = vadd.f32 %v142, %v820
  %822 = vmatprep.mubr.bf16.mxu0 0
  %823 = vmatmul.mubr.bf16.gmra.mrb[0].mxu0 %v43
  %v824 = vpop.f32.mrb[0].mxu0
  %v825 = vadd.f32 %v138, %v824
  %v826 = vpop.f32.mrb[0].mxu0
  %v827 = vadd.f32 %v142, %v826
  %v828 = vpop.f32.mrb[0].mxu0
  %v829 = vadd.f32 %v138, %v828
  %v830 = vpop.f32.mrb[0].mxu0
  %v831 = vadd.f32 %v142, %v830
  %832 = vmatprep.mubr.bf16.mxu0 0
  %833 = vmatmul.mubr.bf16.gmra.mrb[0].mxu0 %v44
  %v834 = vpop.f32.mrb[0].mxu0
  %v835 = vadd.f32 %v138, %v834
  %v836 = vpop.f32.mrb[0].mxu0
  %v837 = vadd.f32 %v142, %v836
  %v838 = vpop.f32.mrb[0].mxu0
  %v839 = vadd.f32 %v138, %v838
  %v840 = vpop.f32.mrb[0].mxu0
  %v841 = vadd.f32 %v142, %v840
  %842 = vdwg.mxu0
  %843 = vst [vmem:[#allocation2] sm:$0xff] %v506
  %844 = vst [vmem:[#allocation2 + $0x8] sm:$0xff] %v508
  %845 = vst [vmem:[#allocation2 + $0x10] sm:$0xff] %v599
  %846 = vst [vmem:[#allocation2 + $0x18] sm:$0xff] %v601
  %847 = vst [vmem:[#allocation2 + $0x20] sm:$0xff] %v692
  %848 = vst [vmem:[#allocation2 + $0x28] sm:$0xff] %v694
  %849 = vst [vmem:[#allocation2 + $0x30] sm:$0xff] %v785
  %850 = vst [vmem:[#allocation2 + $0x38] sm:$0xff] %v787
  %851 = vst [vmem:[#allocation2 + $0x40] sm:$0xff] %v510
  %852 = vst [vmem:[#allocation2 + $0x48] sm:$0xff] %v512
  %853 = vst [vmem:[#allocation2 + $0x50] sm:$0xff] %v603
  %854 = vst [vmem:[#allocation2 + $0x58] sm:$0xff] %v605
  %855 = vst [vmem:[#allocation2 + $0x60] sm:$0xff] %v696
  %856 = vst [vmem:[#allocation2 + $0x68] sm:$0xff] %v698
  %857 = vst [vmem:[#allocation2 + $0x70] sm:$0xff] %v789
  %858 = vst [vmem:[#allocation2 + $0x78] sm:$0xff] %v791
  %859 = vst [vmem:[#allocation2 + $0x80] sm:$0xff] %v516
  %860 = vst [vmem:[#allocation2 + $0x88] sm:$0xff] %v518
  %861 = vst [vmem:[#allocation2 + $0x90] sm:$0xff] %v609
  %862 = vst [vmem:[#allocation2 + $0x98] sm:$0xff] %v611
  %863 = vst [vmem:[#allocation2 + $0xa0] sm:$0xff] %v702
  %864 = vst [vmem:[#allocation2 + $0xa8] sm:$0xff] %v704
  %865 = vst [vmem:[#allocation2 + $0xb0] sm:$0xff] %v795
  %866 = vst [vmem:[#allocation2 + $0xb8] sm:$0xff] %v797
  %867 = vst [vmem:[#allocation2 + $0xc0] sm:$0xff] %v520
  %868 = vst [vmem:[#allocation2 + $0xc8] sm:$0xff] %v522
  %869 = vst [vmem:[#allocation2 + $0xd0] sm:$0xff] %v613
  %870 = vst [vmem:[#allocation2 + $0xd8] sm:$0xff] %v615
  %871 = vst [vmem:[#allocation2 + $0xe0] sm:$0xff] %v706
  %872 = vst [vmem:[#allocation2 + $0xe8] sm:$0xff] %v708
  %873 = vst [vmem:[#allocation2 + $0xf0] sm:$0xff] %v799
  %874 = vst [vmem:[#allocation2 + $0xf8] sm:$0xff] %v801
  %875 = vst [vmem:[#allocation2 + $0x100] sm:$0xff] %v526
  %876 = vst [vmem:[#allocation2 + $0x108] sm:$0xff] %v528
  %877 = vst [vmem:[#allocation2 + $0x110] sm:$0xff] %v619
  %878 = vst [vmem:[#allocation2 + $0x118] sm:$0xff] %v621
  %879 = vst [vmem:[#allocation2 + $0x120] sm:$0xff] %v712
  %880 = vst [vmem:[#allocation2 + $0x128] sm:$0xff] %v714
  %881 = vst [vmem:[#allocation2 + $0x130] sm:$0xff] %v805
  %882 = vst [vmem:[#allocation2 + $0x138] sm:$0xff] %v807
  %883 = vst [vmem:[#allocation2 + $0x140] sm:$0xff] %v530
  %884 = vst [vmem:[#allocation2 + $0x148] sm:$0xff] %v532
  %885 = vst [vmem:[#allocation2 + $0x150] sm:$0xff] %v623
  %886 = vst [vmem:[#allocation2 + $0x158] sm:$0xff] %v625
  %887 = vst [vmem:[#allocation2 + $0x160] sm:$0xff] %v716
  %888 = vst [vmem:[#allocation2 + $0x168] sm:$0xff] %v718
  %889 = vst [vmem:[#allocation2 + $0x170] sm:$0xff] %v809
  %890 = vst [vmem:[#allocation2 + $0x178] sm:$0xff] %v811
  %891 = vst [vmem:[#allocation2 + $0x180] sm:$0xff] %v536
  %892 = vst [vmem:[#allocation2 + $0x188] sm:$0xff] %v538
  %893 = vst [vmem:[#allocation2 + $0x190] sm:$0xff] %v629
  %894 = vst [vmem:[#allocation2 + $0x198] sm:$0xff] %v631
  %895 = vst [vmem:[#allocation2 + $0x1a0] sm:$0xff] %v722
  %896 = vst [vmem:[#allocation2 + $0x1a8] sm:$0xff] %v724
  %897 = vst [vmem:[#allocation2 + $0x1b0] sm:$0xff] %v815
  %898 = vst [vmem:[#allocation2 + $0x1b8] sm:$0xff] %v817
  %899 = vst [vmem:[#allocation2 + $0x1c0] sm:$0xff] %v540
  %900 = vst [vmem:[#allocation2 + $0x1c8] sm:$0xff] %v542
  %901 = vst [vmem:[#allocation2 + $0x1d0] sm:$0xff] %v633
  %902 = vst [vmem:[#allocation2 + $0x1d8] sm:$0xff] %v635
  %903 = vst [vmem:[#allocation2 + $0x1e0] sm:$0xff] %v726
  %904 = vst [vmem:[#allocation2 + $0x1e8] sm:$0xff] %v728
  %905 = vst [vmem:[#allocation2 + $0x1f0] sm:$0xff] %v819
  %906 = vst [vmem:[#allocation2 + $0x1f8] sm:$0xff] %v821
  %907 = vst [vmem:[#allocation2 + $0x200] sm:$0xff] %v546
  %908 = vst [vmem:[#allocation2 + $0x208] sm:$0xff] %v548
  %909 = vst [vmem:[#allocation2 + $0x210] sm:$0xff] %v639
  %910 = vst [vmem:[#allocation2 + $0x218] sm:$0xff] %v641
  %911 = vst [vmem:[#allocation2 + $0x220] sm:$0xff] %v732
  %912 = vst [vmem:[#allocation2 + $0x228] sm:$0xff] %v734
  %913 = vst [vmem:[#allocation2 + $0x230] sm:$0xff] %v825
  %914 = vst [vmem:[#allocation2 + $0x238] sm:$0xff] %v827
  %915 = vst [vmem:[#allocation2 + $0x240] sm:$0xff] %v550
  %916 = vst [vmem:[#allocation2 + $0x248] sm:$0xff] %v552
  %917 = vst [vmem:[#allocation2 + $0x250] sm:$0xff] %v643
  %918 = vst [vmem:[#allocation2 + $0x258] sm:$0xff] %v645
  %919 = vst [vmem:[#allocation2 + $0x260] sm:$0xff] %v736
  %920 = vst [vmem:[#allocation2 + $0x268] sm:$0xff] %v738
  %921 = vst [vmem:[#allocation2 + $0x270] sm:$0xff] %v829
  %922 = vst [vmem:[#allocation2 + $0x278] sm:$0xff] %v831
  %923 = vst [vmem:[#allocation2 + $0x280] sm:$0xff] %v556
  %924 = vst [vmem:[#allocation2 + $0x288] sm:$0xff] %v558
  %925 = vst [vmem:[#allocation2 + $0x290] sm:$0xff] %v649
  %926 = vst [vmem:[#allocation2 + $0x298] sm:$0xff] %v651
  %927 = vst [vmem:[#allocation2 + $0x2a0] sm:$0xff] %v742
  %928 = vst [vmem:[#allocation2 + $0x2a8] sm:$0xff] %v744
  %929 = vst [vmem:[#allocation2 + $0x2b0] sm:$0xff] %v835
  %930 = vst [vmem:[#allocation2 + $0x2b8] sm:$0xff] %v837
  %931 = vst [vmem:[#allocation2 + $0x2c0] sm:$0xff] %v560
  %932 = vst [vmem:[#allocation2 + $0x2c8] sm:$0xff] %v562
  %933 = vst [vmem:[#allocation2 + $0x2d0] sm:$0xff] %v653
  %934 = vst [vmem:[#allocation2 + $0x2d8] sm:$0xff] %v655
  %935 = vst [vmem:[#allocation2 + $0x2e0] sm:$0xff] %v746
  %936 = vst [vmem:[#allocation2 + $0x2e8] sm:$0xff] %v748
  %937 = vst [vmem:[#allocation2 + $0x2f0] sm:$0xff] %v839
  %938 = vst [vmem:[#allocation2 + $0x2f8] sm:$0xff] %v841
  %v939 = vld [vmem:[%s1] sm:$0xff]
  %v940 = vld [vmem:[#allocation2] sm:$0xff]
  %v941 = vld [vmem:[#allocation2 + $0x8] sm:$0xff]
  %v942 = vld [vmem:[#allocation2 + $0x10] sm:$0xff]
  %v943 = vld [vmem:[#allocation2 + $0x18] sm:$0xff]
  %v944 = vld [vmem:[#allocation2 + $0x20] sm:$0xff]
  %v945 = vld [vmem:[#allocation2 + $0x28] sm:$0xff]
  %v946 = vld [vmem:[#allocation2 + $0x30] sm:$0xff]
  %v947 = vld [vmem:[#allocation2 + $0x38] sm:$0xff]
  %v948 = vld [vmem:[%s4] sm:$0xff]
  %v949 = vld [vmem:[%s4 + $0x8] sm:$0xff]
  %v950 = vld [vmem:[%s4 + $0x10] sm:$0xff]
  %v951 = vld [vmem:[%s4 + $0x18] sm:$0xff]
  %v952 = vld [vmem:[%s4 + $0x20] sm:$0xff]
  %v953 = vld [vmem:[%s4 + $0x28] sm:$0xff]
  %v954 = vld [vmem:[%s4 + $0x30] sm:$0xff]
  %v955 = vld [vmem:[%s4 + $0x38] sm:$0xff]
  %v956 = vld [vmem:[%s4 + $0x40] sm:$0xff]
  %v957 = vld [vmem:[%s4 + $0x48] sm:$0xff]
  %v958 = vld [vmem:[%s4 + $0x50] sm:$0xff]
  %v959 = vld [vmem:[%s4 + $0x58] sm:$0xff]
  %v960 = vld [vmem:[%s4 + $0x60] sm:$0xff]
  %v961 = vld [vmem:[%s4 + $0x68] sm:$0xff]
  %v962 = vld [vmem:[%s4 + $0x70] sm:$0xff]
  %v963 = vld [vmem:[%s4 + $0x78] sm:$0xff]
  %v964 = vld [vmem:[%s4 + $0x80] sm:$0xff]
  %v965 = vld [vmem:[%s4 + $0x88] sm:$0xff]
  %v966 = vld [vmem:[%s4 + $0x90] sm:$0xff]
  %v967 = vld [vmem:[%s4 + $0x98] sm:$0xff]
  %v968 = vld [vmem:[%s4 + $0xa0] sm:$0xff]
  %v969 = vld [vmem:[%s4 + $0xa8] sm:$0xff]
  %v970 = vld [vmem:[%s4 + $0xb0] sm:$0xff]
  %v971 = vld [vmem:[%s4 + $0xb8] sm:$0xff]
  %v972 = vld [vmem:[%s4 + $0xc0] sm:$0xff]
  %v973 = vld [vmem:[%s4 + $0xc8] sm:$0xff]
  %v974 = vld [vmem:[%s4 + $0xd0] sm:$0xff]
  %v975 = vld [vmem:[%s4 + $0xd8] sm:$0xff]
  %v976 = vld [vmem:[%s4 + $0xe0] sm:$0xff]
  %v977 = vld [vmem:[%s4 + $0xe8] sm:$0xff]
  %v978 = vld [vmem:[%s4 + $0xf0] sm:$0xff]
  %v979 = vld [vmem:[%s4 + $0xf8] sm:$0xff]
  %v980 = vld [vmem:[%s4 + $0x100] sm:$0xff]
  %v981 = vld [vmem:[%s4 + $0x108] sm:$0xff]
  %v982 = vld [vmem:[%s4 + $0x110] sm:$0xff]
  %v983 = vld [vmem:[%s4 + $0x118] sm:$0xff]
  %v984 = vld [vmem:[%s4 + $0x120] sm:$0xff]
  %v985 = vld [vmem:[%s4 + $0x128] sm:$0xff]
  %v986 = vld [vmem:[%s4 + $0x130] sm:$0xff]
  %v987 = vld [vmem:[%s4 + $0x138] sm:$0xff]
  %v988 = vld [vmem:[%s4 + $0x140] sm:$0xff]
  %v989 = vld [vmem:[%s4 + $0x148] sm:$0xff]
  %v990 = vld [vmem:[%s4 + $0x150] sm:$0xff]
  %v991 = vld [vmem:[%s4 + $0x158] sm:$0xff]
  %v992 = vld [vmem:[%s4 + $0x160] sm:$0xff]
  %v993 = vld [vmem:[%s4 + $0x168] sm:$0xff]
  %v994 = vld [vmem:[%s4 + $0x170] sm:$0xff]
  %v995 = vld [vmem:[%s4 + $0x178] sm:$0xff]
  %v996 = vld [vmem:[%s4 + $0x180] sm:$0xff]
  %v997 = vld [vmem:[%s4 + $0x188] sm:$0xff]
  %v998 = vld [vmem:[%s4 + $0x190] sm:$0xff]
  %v999 = vld [vmem:[%s4 + $0x198] sm:$0xff]
  %v1000 = vld [vmem:[%s4 + $0x1a0] sm:$0xff]
  %v1001 = vld [vmem:[%s4 + $0x1a8] sm:$0xff]
  %v1002 = vld [vmem:[%s4 + $0x1b0] sm:$0xff]
  %v1003 = vld [vmem:[%s4 + $0x1b8] sm:$0xff]
  %v1004 = vld [vmem:[%s4 + $0x1c0] sm:$0xff]
  %v1005 = vld [vmem:[%s4 + $0x1c8] sm:$0xff]
  %v1006 = vld [vmem:[%s4 + $0x1d0] sm:$0xff]
  %v1007 = vld [vmem:[%s4 + $0x1d8] sm:$0xff]
  %v1008 = vld [vmem:[%s4 + $0x1e0] sm:$0xff]
  %v1009 = vld [vmem:[%s4 + $0x1e8] sm:$0xff]
  %v1010 = vld [vmem:[%s4 + $0x1f0] sm:$0xff]
  %v1011 = vld [vmem:[%s4 + $0x1f8] sm:$0xff]
  %v1012 = vld [vmem:[%s4 + $0x200] sm:$0xff]
  %v1013 = vld [vmem:[%s4 + $0x208] sm:$0xff]
  %v1014 = vld [vmem:[%s4 + $0x210] sm:$0xff]
  %v1015 = vld [vmem:[%s4 + $0x218] sm:$0xff]
  %v1016 = vld [vmem:[%s4 + $0x220] sm:$0xff]
  %v1017 = vld [vmem:[%s4 + $0x228] sm:$0xff]
  %v1018 = vld [vmem:[%s4 + $0x230] sm:$0xff]
  %v1019 = vld [vmem:[%s4 + $0x238] sm:$0xff]
  %v1020 = vld [vmem:[%s4 + $0x240] sm:$0xff]
  %v1021 = vld [vmem:[%s4 + $0x248] sm:$0xff]
  %v1022 = vld [vmem:[%s4 + $0x250] sm:$0xff]
  %v1023 = vld [vmem:[%s4 + $0x258] sm:$0xff]
  %v1024 = vld [vmem:[%s4 + $0x260] sm:$0xff]
  %v1025 = vld [vmem:[%s4 + $0x268] sm:$0xff]
  %v1026 = vld [vmem:[%s4 + $0x270] sm:$0xff]
  %v1027 = vld [vmem:[%s4 + $0x278] sm:$0xff]
  %v1028 = vld [vmem:[%s4 + $0x280] sm:$0xff]
  %v1029 = vld [vmem:[%s4 + $0x288] sm:$0xff]
  %v1030 = vld [vmem:[%s4 + $0x290] sm:$0xff]
  %v1031 = vld [vmem:[%s4 + $0x298] sm:$0xff]
  %v1032 = vld [vmem:[%s4 + $0x2a0] sm:$0xff]
  %v1033 = vld [vmem:[%s4 + $0x2a8] sm:$0xff]
  %v1034 = vld [vmem:[%s4 + $0x2b0] sm:$0xff]
  %v1035 = vld [vmem:[%s4 + $0x2b8] sm:$0xff]
  %v1036 = vld [vmem:[%s4 + $0x2c0] sm:$0xff]
  %v1037 = vld [vmem:[%s4 + $0x2c8] sm:$0xff]
  %v1038 = vld [vmem:[%s4 + $0x2d0] sm:$0xff]
  %v1039 = vld [vmem:[%s4 + $0x2d8] sm:$0xff]
  %v1040 = vld [vmem:[%s4 + $0x2e0] sm:$0xff]
  %v1041 = vld [vmem:[%s4 + $0x2e8] sm:$0xff]
  %v1042 = vld [vmem:[%s4 + $0x2f0] sm:$0xff]
  %v1043 = vld [vmem:[%s4 + $0x2f8] sm:$0xff]
  %v1044 = vld [vmem:[%s4 + $0x300] sm:$0xff]
  %v1045 = vld [vmem:[%s4 + $0x308] sm:$0xff]
  %v1046 = vld [vmem:[%s4 + $0x310] sm:$0xff]
  %v1047 = vld [vmem:[%s4 + $0x318] sm:$0xff]
  %v1048 = vld [vmem:[%s4 + $0x320] sm:$0xff]
  %v1049 = vld [vmem:[%s4 + $0x328] sm:$0xff]
  %v1050 = vld [vmem:[%s4 + $0x330] sm:$0xff]
  %v1051 = vld [vmem:[%s4 + $0x338] sm:$0xff]
  %v1052 = vld [vmem:[%s4 + $0x340] sm:$0xff]
  %v1053 = vld [vmem:[%s4 + $0x348] sm:$0xff]
  %v1054 = vld [vmem:[%s4 + $0x350] sm:$0xff]
  %v1055 = vld [vmem:[%s4 + $0x358] sm:$0xff]
  %v1056 = vld [vmem:[%s4 + $0x360] sm:$0xff]
  %v1057 = vld [vmem:[%s4 + $0x368] sm:$0xff]
  %v1058 = vld [vmem:[%s4 + $0x370] sm:$0xff]
  %v1059 = vld [vmem:[%s4 + $0x378] sm:$0xff]
  %v1060 = vld [vmem:[%s4 + $0x380] sm:$0xff]
  %v1061 = vld [vmem:[%s4 + $0x388] sm:$0xff]
  %v1062 = vld [vmem:[%s4 + $0x390] sm:$0xff]
  %v1063 = vld [vmem:[%s4 + $0x398] sm:$0xff]
  %v1064 = vld [vmem:[%s4 + $0x3a0] sm:$0xff]
  %v1065 = vld [vmem:[%s4 + $0x3a8] sm:$0xff]
  %v1066 = vld [vmem:[%s4 + $0x3b0] sm:$0xff]
  %v1067 = vld [vmem:[%s4 + $0x3b8] sm:$0xff]
  %v1068 = vld [vmem:[%s4 + $0x3c0] sm:$0xff]
  %v1069 = vld [vmem:[%s4 + $0x3c8] sm:$0xff]
  %v1070 = vld [vmem:[%s4 + $0x3d0] sm:$0xff]
  %v1071 = vld [vmem:[%s4 + $0x3d8] sm:$0xff]
  %v1072 = vld [vmem:[%s4 + $0x3e0] sm:$0xff]
  %v1073 = vld [vmem:[%s4 + $0x3e8] sm:$0xff]
  %v1074 = vld [vmem:[%s4 + $0x3f0] sm:$0xff]
  %v1075 = vld [vmem:[%s4 + $0x3f8] sm:$0xff]
  %v1204 = vunpack.c.l.b16 %v948
  %v1205 = vunpack.c.h.b16 %v948
  %v1206 = vunpack.c.l.b16 %v949
  %v1207 = vunpack.c.h.b16 %v949
  %v1208 = vunpack.c.l.b16 %v950
  %v1209 = vunpack.c.h.b16 %v950
  %v1210 = vunpack.c.l.b16 %v951
  %v1211 = vunpack.c.h.b16 %v951
  %v1212 = vunpack.c.l.b16 %v952
  %v1213 = vunpack.c.h.b16 %v952
  %v1214 = vunpack.c.l.b16 %v953
  %v1215 = vunpack.c.h.b16 %v953
  %v1216 = vunpack.c.l.b16 %v954
  %v1217 = vunpack.c.h.b16 %v954
  %v1218 = vunpack.c.l.b16 %v955
  %v1219 = vunpack.c.h.b16 %v955
  %v1220 = vunpack.c.l.b16 %v956
  %v1221 = vunpack.c.h.b16 %v956
  %v1222 = vunpack.c.l.b16 %v957
  %v1223 = vunpack.c.h.b16 %v957
  %v1224 = vunpack.c.l.b16 %v958
  %v1225 = vunpack.c.h.b16 %v958
  %v1226 = vunpack.c.l.b16 %v959
  %v1227 = vunpack.c.h.b16 %v959
  %v1228 = vunpack.c.l.b16 %v960
  %v1229 = vunpack.c.h.b16 %v960
  %v1230 = vunpack.c.l.b16 %v961
  %v1231 = vunpack.c.h.b16 %v961
  %v1232 = vunpack.c.l.b16 %v962
  %v1233 = vunpack.c.h.b16 %v962
  %v1234 = vunpack.c.l.b16 %v963
  %v1235 = vunpack.c.h.b16 %v963
  %v1236 = vunpack.c.l.b16 %v964
  %v1237 = vunpack.c.h.b16 %v964
  %v1238 = vunpack.c.l.b16 %v965
  %v1239 = vunpack.c.h.b16 %v965
  %v1240 = vunpack.c.l.b16 %v966
  %v1241 = vunpack.c.h.b16 %v966
  %v1242 = vunpack.c.l.b16 %v967
  %v1243 = vunpack.c.h.b16 %v967
  %v1244 = vunpack.c.l.b16 %v968
  %v1245 = vunpack.c.h.b16 %v968
  %v1246 = vunpack.c.l.b16 %v969
  %v1247 = vunpack.c.h.b16 %v969
  %v1248 = vunpack.c.l.b16 %v970
  %v1249 = vunpack.c.h.b16 %v970
  %v1250 = vunpack.c.l.b16 %v971
  %v1251 = vunpack.c.h.b16 %v971
  %v1252 = vunpack.c.l.b16 %v972
  %v1253 = vunpack.c.h.b16 %v972
  %v1254 = vunpack.c.l.b16 %v973
  %v1255 = vunpack.c.h.b16 %v973
  %v1256 = vunpack.c.l.b16 %v974
  %v1257 = vunpack.c.h.b16 %v974
  %v1258 = vunpack.c.l.b16 %v975
  %v1259 = vunpack.c.h.b16 %v975
  %v1260 = vunpack.c.l.b16 %v976
  %v1261 = vunpack.c.h.b16 %v976
  %v1262 = vunpack.c.l.b16 %v977
  %v1263 = vunpack.c.h.b16 %v977
  %v1264 = vunpack.c.l.b16 %v978
  %v1265 = vunpack.c.h.b16 %v978
  %v1266 = vunpack.c.l.b16 %v979
  %v1267 = vunpack.c.h.b16 %v979
  %v1268 = vunpack.c.l.b16 %v980
  %v1269 = vunpack.c.h.b16 %v980
  %v1270 = vunpack.c.l.b16 %v981
  %v1271 = vunpack.c.h.b16 %v981
  %v1272 = vunpack.c.l.b16 %v982
  %v1273 = vunpack.c.h.b16 %v982
  %v1274 = vunpack.c.l.b16 %v983
  %v1275 = vunpack.c.h.b16 %v983
  %v1276 = vunpack.c.l.b16 %v984
  %v1277 = vunpack.c.h.b16 %v984
  %v1278 = vunpack.c.l.b16 %v985
  %v1279 = vunpack.c.h.b16 %v985
  %v1280 = vunpack.c.l.b16 %v986
  %v1281 = vunpack.c.h.b16 %v986
  %v1282 = vunpack.c.l.b16 %v987
  %v1283 = vunpack.c.h.b16 %v987
  %v1284 = vunpack.c.l.b16 %v988
  %v1285 = vunpack.c.h.b16 %v988
  %v1286 = vunpack.c.l.b16 %v989
  %v1287 = vunpack.c.h.b16 %v989
  %v1288 = vunpack.c.l.b16 %v990
  %v1289 = vunpack.c.h.b16 %v990
  %v1290 = vunpack.c.l.b16 %v991
  %v1291 = vunpack.c.h.b16 %v991
  %v1292 = vunpack.c.l.b16 %v992
  %v1293 = vunpack.c.h.b16 %v992
  %v1294 = vunpack.c.l.b16 %v993
  %v1295 = vunpack.c.h.b16 %v993
  %v1296 = vunpack.c.l.b16 %v994
  %v1297 = vunpack.c.h.b16 %v994
  %v1298 = vunpack.c.l.b16 %v995
  %v1299 = vunpack.c.h.b16 %v995
  %v1300 = vunpack.c.l.b16 %v996
  %v1301 = vunpack.c.h.b16 %v996
  %v1302 = vunpack.c.l.b16 %v997
  %v1303 = vunpack.c.h.b16 %v997
  %v1304 = vunpack.c.l.b16 %v998
  %v1305 = vunpack.c.h.b16 %v998
  %v1306 = vunpack.c.l.b16 %v999
  %v1307 = vunpack.c.h.b16 %v999
  %v1308 = vunpack.c.l.b16 %v1000
  %v1309 = vunpack.c.h.b16 %v1000
  %v1310 = vunpack.c.l.b16 %v1001
  %v1311 = vunpack.c.h.b16 %v1001
  %v1312 = vunpack.c.l.b16 %v1002
  %v1313 = vunpack.c.h.b16 %v1002
  %v1314 = vunpack.c.l.b16 %v1003
  %v1315 = vunpack.c.h.b16 %v1003
  %v1316 = vunpack.c.l.b16 %v1004
  %v1317 = vunpack.c.h.b16 %v1004
  %v1318 = vunpack.c.l.b16 %v1005
  %v1319 = vunpack.c.h.b16 %v1005
  %v1320 = vunpack.c.l.b16 %v1006
  %v1321 = vunpack.c.h.b16 %v1006
  %v1322 = vunpack.c.l.b16 %v1007
  %v1323 = vunpack.c.h.b16 %v1007
  %v1324 = vunpack.c.l.b16 %v1008
  %v1325 = vunpack.c.h.b16 %v1008
  %v1326 = vunpack.c.l.b16 %v1009
  %v1327 = vunpack.c.h.b16 %v1009
  %v1328 = vunpack.c.l.b16 %v1010
  %v1329 = vunpack.c.h.b16 %v1010
  %v1330 = vunpack.c.l.b16 %v1011
  %v1331 = vunpack.c.h.b16 %v1011
  %v1332 = vunpack.c.l.b16 %v1012
  %v1333 = vunpack.c.h.b16 %v1012
  %v1334 = vunpack.c.l.b16 %v1013
  %v1335 = vunpack.c.h.b16 %v1013
  %v1336 = vunpack.c.l.b16 %v1014
  %v1337 = vunpack.c.h.b16 %v1014
  %v1338 = vunpack.c.l.b16 %v1015
  %v1339 = vunpack.c.h.b16 %v1015
  %v1340 = vunpack.c.l.b16 %v1016
  %v1341 = vunpack.c.h.b16 %v1016
  %v1342 = vunpack.c.l.b16 %v1017
  %v1343 = vunpack.c.h.b16 %v1017
  %v1344 = vunpack.c.l.b16 %v1018
  %v1345 = vunpack.c.h.b16 %v1018
  %v1346 = vunpack.c.l.b16 %v1019
  %v1347 = vunpack.c.h.b16 %v1019
  %v1348 = vunpack.c.l.b16 %v1020
  %v1349 = vunpack.c.h.b16 %v1020
  %v1350 = vunpack.c.l.b16 %v1021
  %v1351 = vunpack.c.h.b16 %v1021
  %v1352 = vunpack.c.l.b16 %v1022
  %v1353 = vunpack.c.h.b16 %v1022
  %v1354 = vunpack.c.l.b16 %v1023
  %v1355 = vunpack.c.h.b16 %v1023
  %v1356 = vunpack.c.l.b16 %v1024
  %v1357 = vunpack.c.h.b16 %v1024
  %v1358 = vunpack.c.l.b16 %v1025
  %v1359 = vunpack.c.h.b16 %v1025
  %v1360 = vunpack.c.l.b16 %v1026
  %v1361 = vunpack.c.h.b16 %v1026
  %v1362 = vunpack.c.l.b16 %v1027
  %v1363 = vunpack.c.h.b16 %v1027
  %v1364 = vunpack.c.l.b16 %v1028
  %v1365 = vunpack.c.h.b16 %v1028
  %v1366 = vunpack.c.l.b16 %v1029
  %v1367 = vunpack.c.h.b16 %v1029
  %v1368 = vunpack.c.l.b16 %v1030
  %v1369 = vunpack.c.h.b16 %v1030
  %v1370 = vunpack.c.l.b16 %v1031
  %v1371 = vunpack.c.h.b16 %v1031
  %v1372 = vunpack.c.l.b16 %v1032
  %v1373 = vunpack.c.h.b16 %v1032
  %v1374 = vunpack.c.l.b16 %v1033
  %v1375 = vunpack.c.h.b16 %v1033
  %v1376 = vunpack.c.l.b16 %v1034
  %v1377 = vunpack.c.h.b16 %v1034
  %v1378 = vunpack.c.l.b16 %v1035
  %v1379 = vunpack.c.h.b16 %v1035
  %v1380 = vunpack.c.l.b16 %v1036
  %v1381 = vunpack.c.h.b16 %v1036
  %v1382 = vunpack.c.l.b16 %v1037
  %v1383 = vunpack.c.h.b16 %v1037
  %v1384 = vunpack.c.l.b16 %v1038
  %v1385 = vunpack.c.h.b16 %v1038
  %v1386 = vunpack.c.l.b16 %v1039
  %v1387 = vunpack.c.h.b16 %v1039
  %v1388 = vunpack.c.l.b16 %v1040
  %v1389 = vunpack.c.h.b16 %v1040
  %v1390 = vunpack.c.l.b16 %v1041
  %v1391 = vunpack.c.h.b16 %v1041
  %v1392 = vunpack.c.l.b16 %v1042
  %v1393 = vunpack.c.h.b16 %v1042
  %v1394 = vunpack.c.l.b16 %v1043
  %v1395 = vunpack.c.h.b16 %v1043
  %v1396 = vunpack.c.l.b16 %v1044
  %v1397 = vunpack.c.h.b16 %v1044
  %v1398 = vunpack.c.l.b16 %v1045
  %v1399 = vunpack.c.h.b16 %v1045
  %v1400 = vunpack.c.l.b16 %v1046
  %v1401 = vunpack.c.h.b16 %v1046
  %v1402 = vunpack.c.l.b16 %v1047
  %v1403 = vunpack.c.h.b16 %v1047
  %v1404 = vunpack.c.l.b16 %v1048
  %v1405 = vunpack.c.h.b16 %v1048
  %v1406 = vunpack.c.l.b16 %v1049
  %v1407 = vunpack.c.h.b16 %v1049
  %v1408 = vunpack.c.l.b16 %v1050
  %v1409 = vunpack.c.h.b16 %v1050
  %v1410 = vunpack.c.l.b16 %v1051
  %v1411 = vunpack.c.h.b16 %v1051
  %v1412 = vunpack.c.l.b16 %v1052
  %v1413 = vunpack.c.h.b16 %v1052
  %v1414 = vunpack.c.l.b16 %v1053
  %v1415 = vunpack.c.h.b16 %v1053
  %v1416 = vunpack.c.l.b16 %v1054
  %v1417 = vunpack.c.h.b16 %v1054
  %v1418 = vunpack.c.l.b16 %v1055
  %v1419 = vunpack.c.h.b16 %v1055
  %v1420 = vunpack.c.l.b16 %v1056
  %v1421 = vunpack.c.h.b16 %v1056
  %v1422 = vunpack.c.l.b16 %v1057
  %v1423 = vunpack.c.h.b16 %v1057
  %v1424 = vunpack.c.l.b16 %v1058
  %v1425 = vunpack.c.h.b16 %v1058
  %v1426 = vunpack.c.l.b16 %v1059
  %v1427 = vunpack.c.h.b16 %v1059
  %v1428 = vunpack.c.l.b16 %v1060
  %v1429 = vunpack.c.h.b16 %v1060
  %v1430 = vunpack.c.l.b16 %v1061
  %v1431 = vunpack.c.h.b16 %v1061
  %v1432 = vunpack.c.l.b16 %v1062
  %v1433 = vunpack.c.h.b16 %v1062
  %v1434 = vunpack.c.l.b16 %v1063
  %v1435 = vunpack.c.h.b16 %v1063
  %v1436 = vunpack.c.l.b16 %v1064
  %v1437 = vunpack.c.h.b16 %v1064
  %v1438 = vunpack.c.l.b16 %v1065
  %v1439 = vunpack.c.h.b16 %v1065
  %v1440 = vunpack.c.l.b16 %v1066
  %v1441 = vunpack.c.h.b16 %v1066
  %v1442 = vunpack.c.l.b16 %v1067
  %v1443 = vunpack.c.h.b16 %v1067
  %v1444 = vunpack.c.l.b16 %v1068
  %v1445 = vunpack.c.h.b16 %v1068
  %v1446 = vunpack.c.l.b16 %v1069
  %v1447 = vunpack.c.h.b16 %v1069
  %v1448 = vunpack.c.l.b16 %v1070
  %v1449 = vunpack.c.h.b16 %v1070
  %v1450 = vunpack.c.l.b16 %v1071
  %v1451 = vunpack.c.h.b16 %v1071
  %v1452 = vunpack.c.l.b16 %v1072
  %v1453 = vunpack.c.h.b16 %v1072
  %v1454 = vunpack.c.l.b16 %v1073
  %v1455 = vunpack.c.h.b16 %v1073
  %v1456 = vunpack.c.l.b16 %v1074
  %v1457 = vunpack.c.h.b16 %v1074
  %v1458 = vunpack.c.l.b16 %v1075
  %v1459 = vunpack.c.h.b16 %v1075
  %v1460 = vpack.c.b16 %v1212, %v1204
  %v1461 = vpack.c.b16 %v1213, %v1205
  %v1462 = vpack.c.b16 %v1214, %v1206
  %v1463 = vpack.c.b16 %v1215, %v1207
  %v1464 = vpack.c.b16 %v1216, %v1208
  %v1465 = vpack.c.b16 %v1217, %v1209
  %v1466 = vpack.c.b16 %v1218, %v1210
  %v1467 = vpack.c.b16 %v1219, %v1211
  %v1468 = vpack.c.b16 %v1228, %v1220
  %v1469 = vpack.c.b16 %v1229, %v1221
  %v1470 = vpack.c.b16 %v1230, %v1222
  %v1471 = vpack.c.b16 %v1231, %v1223
  %v1472 = vpack.c.b16 %v1232, %v1224
  %v1473 = vpack.c.b16 %v1233, %v1225
  %v1474 = vpack.c.b16 %v1234, %v1226
  %v1475 = vpack.c.b16 %v1235, %v1227
  %v1476 = vpack.c.b16 %v1244, %v1236
  %v1477 = vpack.c.b16 %v1245, %v1237
  %v1478 = vpack.c.b16 %v1246, %v1238
  %v1479 = vpack.c.b16 %v1247, %v1239
  %v1480 = vpack.c.b16 %v1248, %v1240
  %v1481 = vpack.c.b16 %v1249, %v1241
  %v1482 = vpack.c.b16 %v1250, %v1242
  %v1483 = vpack.c.b16 %v1251, %v1243
  %v1484 = vpack.c.b16 %v1260, %v1252
  %v1485 = vpack.c.b16 %v1261, %v1253
  %v1486 = vpack.c.b16 %v1262, %v1254
  %v1487 = vpack.c.b16 %v1263, %v1255
  %v1488 = vpack.c.b16 %v1264, %v1256
  %v1489 = vpack.c.b16 %v1265, %v1257
  %v1490 = vpack.c.b16 %v1266, %v1258
  %v1491 = vpack.c.b16 %v1267, %v1259
  %v1492 = vpack.c.b16 %v1276, %v1268
  %v1493 = vpack.c.b16 %v1277, %v1269
  %v1494 = vpack.c.b16 %v1278, %v1270
  %v1495 = vpack.c.b16 %v1279, %v1271
  %v1496 = vpack.c.b16 %v1280, %v1272
  %v1497 = vpack.c.b16 %v1281, %v1273
  %v1498 = vpack.c.b16 %v1282, %v1274
  %v1499 = vpack.c.b16 %v1283, %v1275
  %v1500 = vpack.c.b16 %v1292, %v1284
  %v1501 = vpack.c.b16 %v1293, %v1285
  %v1502 = vpack.c.b16 %v1294, %v1286
  %v1503 = vpack.c.b16 %v1295, %v1287
  %v1504 = vpack.c.b16 %v1296, %v1288
  %v1505 = vpack.c.b16 %v1297, %v1289
  %v1506 = vpack.c.b16 %v1298, %v1290
  %v1507 = vpack.c.b16 %v1299, %v1291
  %v1508 = vpack.c.b16 %v1308, %v1300
  %v1509 = vpack.c.b16 %v1309, %v1301
  %v1510 = vpack.c.b16 %v1310, %v1302
  %v1511 = vpack.c.b16 %v1311, %v1303
  %v1512 = vpack.c.b16 %v1312, %v1304
  %v1513 = vpack.c.b16 %v1313, %v1305
  %v1514 = vpack.c.b16 %v1314, %v1306
  %v1515 = vpack.c.b16 %v1315, %v1307
  %v1516 = vpack.c.b16 %v1324, %v1316
  %v1517 = vpack.c.b16 %v1325, %v1317
  %v1518 = vpack.c.b16 %v1326, %v1318
  %v1519 = vpack.c.b16 %v1327, %v1319
  %v1520 = vpack.c.b16 %v1328, %v1320
  %v1521 = vpack.c.b16 %v1329, %v1321
  %v1522 = vpack.c.b16 %v1330, %v1322
  %v1523 = vpack.c.b16 %v1331, %v1323
  %v1524 = vpack.c.b16 %v1340, %v1332
  %v1525 = vpack.c.b16 %v1341, %v1333
  %v1526 = vpack.c.b16 %v1342, %v1334
  %v1527 = vpack.c.b16 %v1343, %v1335
  %v1528 = vpack.c.b16 %v1344, %v1336
  %v1529 = vpack.c.b16 %v1345, %v1337
  %v1530 = vpack.c.b16 %v1346, %v1338
  %v1531 = vpack.c.b16 %v1347, %v1339
  %v1532 = vpack.c.b16 %v1356, %v1348
  %v1533 = vpack.c.b16 %v1357, %v1349
  %v1534 = vpack.c.b16 %v1358, %v1350
  %v1535 = vpack.c.b16 %v1359, %v1351
  %v1536 = vpack.c.b16 %v1360, %v1352
  %v1537 = vpack.c.b16 %v1361, %v1353
  %v1538 = vpack.c.b16 %v1362, %v1354
  %v1539 = vpack.c.b16 %v1363, %v1355
  %v1540 = vpack.c.b16 %v1372, %v1364
  %v1541 = vpack.c.b16 %v1373, %v1365
  %v1542 = vpack.c.b16 %v1374, %v1366
  %v1543 = vpack.c.b16 %v1375, %v1367
  %v1544 = vpack.c.b16 %v1376, %v1368
  %v1545 = vpack.c.b16 %v1377, %v1369
  %v1546 = vpack.c.b16 %v1378, %v1370
  %v1547 = vpack.c.b16 %v1379, %v1371
  %v1548 = vpack.c.b16 %v1388, %v1380
  %v1549 = vpack.c.b16 %v1389, %v1381
  %v1550 = vpack.c.b16 %v1390, %v1382
  %v1551 = vpack.c.b16 %v1391, %v1383
  %v1552 = vpack.c.b16 %v1392, %v1384
  %v1553 = vpack.c.b16 %v1393, %v1385
  %v1554 = vpack.c.b16 %v1394, %v1386
  %v1555 = vpack.c.b16 %v1395, %v1387
  %v1556 = vpack.c.b16 %v1404, %v1396
  %v1557 = vpack.c.b16 %v1405, %v1397
  %v1558 = vpack.c.b16 %v1406, %v1398
  %v1559 = vpack.c.b16 %v1407, %v1399
  %v1560 = vpack.c.b16 %v1408, %v1400
  %v1561 = vpack.c.b16 %v1409, %v1401
  %v1562 = vpack.c.b16 %v1410, %v1402
  %v1563 = vpack.c.b16 %v1411, %v1403
  %v1564 = vpack.c.b16 %v1420, %v1412
  %v1565 = vpack.c.b16 %v1421, %v1413
  %v1566 = vpack.c.b16 %v1422, %v1414
  %v1567 = vpack.c.b16 %v1423, %v1415
  %v1568 = vpack.c.b16 %v1424, %v1416
  %v1569 = vpack.c.b16 %v1425, %v1417
  %v1570 = vpack.c.b16 %v1426, %v1418
  %v1571 = vpack.c.b16 %v1427, %v1419
  %v1572 = vpack.c.b16 %v1436, %v1428
  %v1573 = vpack.c.b16 %v1437, %v1429
  %v1574 = vpack.c.b16 %v1438, %v1430
  %v1575 = vpack.c.b16 %v1439, %v1431
  %v1576 = vpack.c.b16 %v1440, %v1432
  %v1577 = vpack.c.b16 %v1441, %v1433
  %v1578 = vpack.c.b16 %v1442, %v1434
  %v1579 = vpack.c.b16 %v1443, %v1435
  %v1580 = vpack.c.b16 %v1452, %v1444
  %v1581 = vpack.c.b16 %v1453, %v1445
  %v1582 = vpack.c.b16 %v1454, %v1446
  %v1583 = vpack.c.b16 %v1455, %v1447
  %v1584 = vpack.c.b16 %v1456, %v1448
  %v1585 = vpack.c.b16 %v1457, %v1449
  %v1586 = vpack.c.b16 %v1458, %v1450
  %v1587 = vpack.c.b16 %v1459, %v1451
  %1716 = vmatprep.subr.bf16.mxu0 %v1461
  %1717 = vmatpush1.bf16.msra.mxu0 %v1460
  %1718 = vmatprep.subr.bf16.mxu0 %v1469
  %1719 = vmatpush1.bf16.msra.mxu0 %v1468
  %1720 = vmatprep.subr.bf16.mxu0 %v1477
  %1721 = vmatpush1.bf16.msra.mxu0 %v1476
  %1722 = vmatprep.subr.bf16.mxu0 %v1485
  %1723 = vmatpush1.bf16.msra.mxu0 %v1484
  %1724 = vmatprep.subr.bf16.mxu0 %v1493
  %1725 = vmatpush1.bf16.msra.mxu0 %v1492
  %1726 = vmatprep.subr.bf16.mxu0 %v1501
  %1727 = vmatpush1.bf16.msra.mxu0 %v1500
  %1728 = vmatprep.subr.bf16.mxu0 %v1509
  %1729 = vmatpush1.bf16.msra.mxu0 %v1508
  %1730 = vmatprep.subr.bf16.mxu0 %v1517
  %1731 = vmatpush1.bf16.msra.mxu0 %v1516
  %1732 = vmatprep.subr.bf16.mxu0 %v1525
  %1733 = vmatpush1.bf16.msra.mxu0 %v1524
  %1734 = vmatprep.subr.bf16.mxu0 %v1533
  %1735 = vmatpush1.bf16.msra.mxu0 %v1532
  %1736 = vmatprep.subr.bf16.mxu0 %v1541
  %1737 = vmatpush1.bf16.msra.mxu0 %v1540
  %1738 = vmatprep.subr.bf16.mxu0 %v1549
  %1739 = vmatpush1.bf16.msra.mxu0 %v1548
  %1740 = vmatprep.subr.bf16.mxu0 %v1557
  %1741 = vmatpush1.bf16.msra.mxu0 %v1556
  %1742 = vmatprep.subr.bf16.mxu0 %v1565
  %1743 = vmatpush1.bf16.msra.mxu0 %v1564
  %1744 = vmatprep.subr.bf16.mxu0 %v1573
  %1745 = vmatpush1.bf16.msra.mxu0 %v1572
  %1746 = vmatprep.subr.bf16.mxu0 %v1581
  %1747 = vmatpush1.bf16.msra.mxu0 %v1580
  %1748 = vmatprep.mubr.bf16.mxu0 0
  %1749 = vmatmul.mubr.bf16.gmra.mrb[0].mxu0 0
  %v1750 = vpop.f32.mrb[0].mxu0
  %v1751 = vadd.f32 0.0, %v1750
  %v1752 = vpop.f32.mrb[0].mxu0
  %v1753 = vadd.f32 0.0, %v1752
  %v1754 = vpop.f32.mrb[0].mxu0
  %v1755 = vpop.f32.mrb[0].mxu0
  %1756 = vdwg.mxu0
  %1757 = vmatprep.subr.bf16.mxu0 %v1463
  %1758 = vmatpush1.bf16.msra.mxu0 %v1462
  %1759 = vmatprep.subr.bf16.mxu0 %v1471
  %1760 = vmatpush1.bf16.msra.mxu0 %v1470
  %1761 = vmatprep.subr.bf16.mxu0 %v1479
  %1762 = vmatpush1.bf16.msra.mxu0 %v1478
  %1763 = vmatprep.subr.bf16.mxu0 %v1487
  %1764 = vmatpush1.bf16.msra.mxu0 %v1486
  %1765 = vmatprep.subr.bf16.mxu0 %v1495
  %1766 = vmatpush1.bf16.msra.mxu0 %v1494
  %1767 = vmatprep.subr.bf16.mxu0 %v1503
  %1768 = vmatpush1.bf16.msra.mxu0 %v1502
  %1769 = vmatprep.subr.bf16.mxu0 %v1511
  %1770 = vmatpush1.bf16.msra.mxu0 %v1510
  %1771 = vmatprep.subr.bf16.mxu0 %v1519
  %1772 = vmatpush1.bf16.msra.mxu0 %v1518
  %1773 = vmatprep.subr.bf16.mxu0 %v1527
  %1774 = vmatpush1.bf16.msra.mxu0 %v1526
  %1775 = vmatprep.subr.bf16.mxu0 %v1535
  %1776 = vmatpush1.bf16.msra.mxu0 %v1534
  %1777 = vmatprep.subr.bf16.mxu0 %v1543
  %1778 = vmatpush1.bf16.msra.mxu0 %v1542
  %1779 = vmatprep.subr.bf16.mxu0 %v1551
  %1780 = vmatpush1.bf16.msra.mxu0 %v1550
  %1781 = vmatprep.subr.bf16.mxu0 %v1559
  %1782 = vmatpush1.bf16.msra.mxu0 %v1558
  %1783 = vmatprep.subr.bf16.mxu0 %v1567
  %1784 = vmatpush1.bf16.msra.mxu0 %v1566
  %1785 = vmatprep.subr.bf16.mxu0 %v1575
  %1786 = vmatpush1.bf16.msra.mxu0 %v1574
  %1787 = vmatprep.subr.bf16.mxu0 %v1583
  %1788 = vmatpush1.bf16.msra.mxu0 %v1582
  %1789 = vmatprep.mubr.bf16.mxu0 0
  %1790 = vmatmul.mubr.bf16.gmra.mrb[0].mxu0 0
  %v1791 = vpop.f32.mrb[0].mxu0
  %v1792 = vadd.f32 0.0, %v1791
  %v1793 = vpop.f32.mrb[0].mxu0
  %v1794 = vadd.f32 0.0, %v1793
  %v1795 = vpop.f32.mrb[0].mxu0
  %v1796 = vpop.f32.mrb[0].mxu0
  %1797 = vdwg.mxu0
  %1798 = vmatprep.subr.bf16.mxu0 %v1465
  %1799 = vmatpush1.bf16.msra.mxu0 %v1464
  %1800 = vmatprep.subr.bf16.mxu0 %v1473
  %1801 = vmatpush1.bf16.msra.mxu0 %v1472
  %1802 = vmatprep.subr.bf16.mxu0 %v1481
  %1803 = vmatpush1.bf16.msra.mxu0 %v1480
  %1804 = vmatprep.subr.bf16.mxu0 %v1489
  %1805 = vmatpush1.bf16.msra.mxu0 %v1488
  %1806 = vmatprep.subr.bf16.mxu0 %v1497
  %1807 = vmatpush1.bf16.msra.mxu0 %v1496
  %1808 = vmatprep.subr.bf16.mxu0 %v1505
  %1809 = vmatpush1.bf16.msra.mxu0 %v1504
  %1810 = vmatprep.subr.bf16.mxu0 %v1513
  %1811 = vmatpush1.bf16.msra.mxu0 %v1512
  %1812 = vmatprep.subr.bf16.mxu0 %v1521
  %1813 = vmatpush1.bf16.msra.mxu0 %v1520
  %1814 = vmatprep.subr.bf16.mxu0 %v1529
  %1815 = vmatpush1.bf16.msra.mxu0 %v1528
  %1816 = vmatprep.subr.bf16.mxu0 %v1537
  %1817 = vmatpush1.bf16.msra.mxu0 %v1536
  %1818 = vmatprep.subr.bf16.mxu0 %v1545
  %1819 = vmatpush1.bf16.msra.mxu0 %v1544
  %1820 = vmatprep.subr.bf16.mxu0 %v1553
  %1821 = vmatpush1.bf16.msra.mxu0 %v1552
  %1822 = vmatprep.subr.bf16.mxu0 %v1561
  %1823 = vmatpush1.bf16.msra.mxu0 %v1560
  %1824 = vmatprep.subr.bf16.mxu0 %v1569
  %1825 = vmatpush1.bf16.msra.mxu0 %v1568
  %1826 = vmatprep.subr.bf16.mxu0 %v1577
  %1827 = vmatpush1.bf16.msra.mxu0 %v1576
  %1828 = vmatprep.subr.bf16.mxu0 %v1585
  %1829 = vmatpush1.bf16.msra.mxu0 %v1584
  %1830 = vmatprep.mubr.bf16.mxu0 0
  %1831 = vmatmul.mubr.bf16.gmra.mrb[0].mxu0 0
  %v1832 = vpop.f32.mrb[0].mxu0
  %v1833 = vadd.f32 0.0, %v1832
  %v1834 = vpop.f32.mrb[0].mxu0
  %v1835 = vadd.f32 0.0, %v1834
  %v1836 = vpop.f32.mrb[0].mxu0
  %v1837 = vpop.f32.mrb[0].mxu0
  %1838 = vdwg.mxu0
  %1839 = vmatprep.subr.bf16.mxu0 %v1467
  %1840 = vmatpush1.bf16.msra.mxu0 %v1466
  %1841 = vmatprep.subr.bf16.mxu0 %v1475
  %1842 = vmatpush1.bf16.msra.mxu0 %v1474
  %1843 = vmatprep.subr.bf16.mxu0 %v1483
  %1844 = vmatpush1.bf16.msra.mxu0 %v1482
  %1845 = vmatprep.subr.bf16.mxu0 %v1491
  %1846 = vmatpush1.bf16.msra.mxu0 %v1490
  %1847 = vmatprep.subr.bf16.mxu0 %v1499
  %1848 = vmatpush1.bf16.msra.mxu0 %v1498
  %1849 = vmatprep.subr.bf16.mxu0 %v1507
  %1850 = vmatpush1.bf16.msra.mxu0 %v1506
  %1851 = vmatprep.subr.bf16.mxu0 %v1515
  %1852 = vmatpush1.bf16.msra.mxu0 %v1514
  %1853 = vmatprep.subr.bf16.mxu0 %v1523
  %1854 = vmatpush1.bf16.msra.mxu0 %v1522
  %1855 = vmatprep.subr.bf16.mxu0 %v1531
  %1856 = vmatpush1.bf16.msra.mxu0 %v1530
  %1857 = vmatprep.subr.bf16.mxu0 %v1539
  %1858 = vmatpush1.bf16.msra.mxu0 %v1538
  %1859 = vmatprep.subr.bf16.mxu0 %v1547
  %1860 = vmatpush1.bf16.msra.mxu0 %v1546
  %1861 = vmatprep.subr.bf16.mxu0 %v1555
  %1862 = vmatpush1.bf16.msra.mxu0 %v1554
  %1863 = vmatprep.subr.bf16.mxu0 %v1563
  %1864 = vmatpush1.bf16.msra.mxu0 %v1562
  %1865 = vmatprep.subr.bf16.mxu0 %v1571
  %1866 = vmatpush1.bf16.msra.mxu0 %v1570
  %1867 = vmatprep.subr.bf16.mxu0 %v1579
  %1868 = vmatpush1.bf16.msra.mxu0 %v1578
  %1869 = vmatprep.subr.bf16.mxu0 %v1587
  %1870 = vmatpush1.bf16.msra.mxu0 %v1586
  %1871 = vmatprep.mubr.bf16.mxu0 0
  %1872 = vmatmul.mubr.bf16.gmra.mrb[0].mxu0 0
  %v1873 = vpop.f32.mrb[0].mxu0
  %v1874 = vadd.f32 0.0, %v1873
  %v1875 = vpop.f32.mrb[0].mxu0
  %v1876 = vadd.f32 0.0, %v1875
  %v1877 = vpop.f32.mrb[0].mxu0
  %v1878 = vpop.f32.mrb[0].mxu0
  %1879 = vdwg.mxu0
  %v1880 = vadd.f32 %v940, %v1751
  %v1881 = vadd.f32 %v941, %v1753
  %v1882 = vadd.f32 %v942, %v1792
  %v1883 = vadd.f32 %v943, %v1794
  %v1884 = vadd.f32 %v944, %v1833
  %v1885 = vadd.f32 %v945, %v1835
  %v1886 = vadd.f32 %v946, %v1874
  %v1887 = vadd.f32 %v947, %v1876
  %v1888 = vtanh.pop %v1880
  %v1889 = vtanh.pop %v1881
  %v1890 = vmul.f32 %v1888, 0.5
  %v1891 = vmul.f32 %v1889, 0.5
  %v1892 = vadd.f32 %v1890, 0.5
  %v1893 = vadd.f32 %v1891, 0.5
  %v1894 = vtanh.pop %v1882
  %v1895 = vtanh.pop %v1883
  %v1896 = vmul.f32 %v1894, 0.5
  %v1897 = vmul.f32 %v1895, 0.5
  %v1898 = vadd.f32 %v1896, 0.5
  %v1899 = vadd.f32 %v1897, 0.5
  %v1900 = vtanh.pop %v1884
  %v1901 = vtanh.pop %v1885
  %v1902 = vtanh.pop %v1886
  %v1903 = vtanh.pop %v1887
  %v1904 = vmul.f32 %v1902, 0.5
  %v1905 = vmul.f32 %v1903, 0.5
  %v1906 = vadd.f32 %v1904, 0.5
  %v1907 = vadd.f32 %v1905, 0.5
  %v1908 = vmul.f32 %v1898, 0.0
  %v1909 = vmul.f32 %v1899, 0.0
  %v1910 = vmul.f32 %v1892, %v1900
  %v1911 = vmul.f32 %v1893, %v1901
  %v1912 = vadd.f32 %v1908, %v1910
  %v1913 = vadd.f32 %v1909, %v1911
  %v1914 = vtanh.pop %v1912
  %v1915 = vtanh.pop %v1913
  %v1916 = vmul.f32 %v1906, %v1914
  %v1917 = vmul.f32 %v1907, %v1915
  %vm1918 = vcmp.gt.s32.totalorder %v939, 0
  %v1919 = vsel %vm1918, 1, 0
  %1920 = vset.pattern.permute.xlu0 0
  %1921 = vperm.xlu0 %1920, %v1919
  %v1922 = vpop.permute.xlu0 %1921
  %vm1923 = vcmp.eq.s32.totalorder %v1922, 1
  %v1924 = vsel %vm1923, %v1916, 0.0
  %v1925 = vsel %vm1923, %v1917, 0.0
  %v1926 = vsel %vm1923, %v1912, 0.0
  %v1927 = vsel %vm1923, %v1913, 0.0
  %s1928 = scalar_lea.vmem [#allocation2], 64
  %v1929 = vld [vmem:[%s1928] sm:$0xff]
  %v1930 = vld [vmem:[%s1928 + $0x8] sm:$0xff]
  %v1931 = vld [vmem:[%s1928 + $0x10] sm:$0xff]
  %v1932 = vld [vmem:[%s1928 + $0x18] sm:$0xff]
  %v1933 = vld [vmem:[%s1928 + $0x20] sm:$0xff]
  %v1934 = vld [vmem:[%s1928 + $0x28] sm:$0xff]
  %v1935 = vld [vmem:[%s1928 + $0x30] sm:$0xff]
  %v1936 = vld [vmem:[%s1928 + $0x38] sm:$0xff]
  %v1937 = vpack.c.bf16 %v1924, %v1924
  %v1938 = vpack.c.bf16 %v1925, %v1925
  %1939 = vmatprep.subr.bf16.mxu0 %v1461
  %1940 = vmatpush1.bf16.msra.mxu0 %v1460
  %1941 = vmatprep.subr.bf16.mxu0 %v1469
  %1942 = vmatpush1.bf16.msra.mxu0 %v1468
  %1943 = vmatprep.subr.bf16.mxu0 %v1477
  %1944 = vmatpush1.bf16.msra.mxu0 %v1476
  %1945 = vmatprep.subr.bf16.mxu0 %v1485
  %1946 = vmatpush1.bf16.msra.mxu0 %v1484
  %1947 = vmatprep.subr.bf16.mxu0 %v1493
  %1948 = vmatpush1.bf16.msra.mxu0 %v1492
  %1949 = vmatprep.subr.bf16.mxu0 %v1501
  %1950 = vmatpush1.bf16.msra.mxu0 %v1500
  %1951 = vmatprep.subr.bf16.mxu0 %v1509
  %1952 = vmatpush1.bf16.msra.mxu0 %v1508
  %1953 = vmatprep.subr.bf16.mxu0 %v1517
  %1954 = vmatpush1.bf16.msra.mxu0 %v1516
  %1955 = vmatprep.subr.bf16.mxu0 %v1525
  %1956 = vmatpush1.bf16.msra.mxu0 %v1524
  %1957 = vmatprep.subr.bf16.mxu0 %v1533
  %1958 = vmatpush1.bf16.msra.mxu0 %v1532
  %1959 = vmatprep.subr.bf16.mxu0 %v1541
  %1960 = vmatpush1.bf16.msra.mxu0 %v1540
  %1961 = vmatprep.subr.bf16.mxu0 %v1549
  %1962 = vmatpush1.bf16.msra.mxu0 %v1548
  %1963 = vmatprep.subr.bf16.mxu0 %v1557
  %1964 = vmatpush1.bf16.msra.mxu0 %v1556
  %1965 = vmatprep.subr.bf16.mxu0 %v1565
  %1966 = vmatpush1.bf16.msra.mxu0 %v1564
  %1967 = vmatprep.subr.bf16.mxu0 %v1573
  %1968 = vmatpush1.bf16.msra.mxu0 %v1572
  %1969 = vmatprep.subr.bf16.mxu0 %v1581
  %1970 = vmatpush1.bf16.msra.mxu0 %v1580
  %1971 = vmatprep.mubr.bf16.mxu0 %v1938
  %1972 = vmatmul.mubr.bf16.gmra.mrb[0].mxu0 %v1937
  %v1973 = vpop.f32.mrb[0].mxu0
  %v1974 = vadd.f32 0.0, %v1973
  %v1975 = vpop.f32.mrb[0].mxu0
  %v1976 = vadd.f32 0.0, %v1975
  %v1977 = vpop.f32.mrb[0].mxu0
  %v1978 = vpop.f32.mrb[0].mxu0
  %1979 = vdwg.mxu0
  %1980 = vmatprep.subr.bf16.mxu0 %v1463
  %1981 = vmatpush1.bf16.msra.mxu0 %v1462
  %1982 = vmatprep.subr.bf16.mxu0 %v1471
  %1983 = vmatpush1.bf16.msra.mxu0 %v1470
  %1984 = vmatprep.subr.bf16.mxu0 %v1479
  %1985 = vmatpush1.bf16.msra.mxu0 %v1478
  %1986 = vmatprep.subr.bf16.mxu0 %v1487
  %1987 = vmatpush1.bf16.msra.mxu0 %v1486
  %1988 = vmatprep.subr.bf16.mxu0 %v1495
  %1989 = vmatpush1.bf16.msra.mxu0 %v1494
  %1990 = vmatprep.subr.bf16.mxu0 %v1503
  %1991 = vmatpush1.bf16.msra.mxu0 %v1502
  %1992 = vmatprep.subr.bf16.mxu0 %v1511
  %1993 = vmatpush1.bf16.msra.mxu0 %v1510
  %1994 = vmatprep.subr.bf16.mxu0 %v1519
  %1995 = vmatpush1.bf16.msra.mxu0 %v1518
  %1996 = vmatprep.subr.bf16.mxu0 %v1527
  %1997 = vmatpush1.bf16.msra.mxu0 %v1526
  %1998 = vmatprep.subr.bf16.mxu0 %v1535
  %1999 = vmatpush1.bf16.msra.mxu0 %v1534
  %2000 = vmatprep.subr.bf16.mxu0 %v1543
  %2001 = vmatpush1.bf16.msra.mxu0 %v1542
  %2002 = vmatprep.subr.bf16.mxu0 %v1551
  %2003 = vmatpush1.bf16.msra.mxu0 %v1550
  %2004 = vmatprep.subr.bf16.mxu0 %v1559
  %2005 = vmatpush1.bf16.msra.mxu0 %v1558
  %2006 = vmatprep.subr.bf16.mxu0 %v1567
  %2007 = vmatpush1.bf16.msra.mxu0 %v1566
  %2008 = vmatprep.subr.bf16.mxu0 %v1575
  %2009 = vmatpush1.bf16.msra.mxu0 %v1574
  %2010 = vmatprep.subr.bf16.mxu0 %v1583
  %2011 = vmatpush1.bf16.msra.mxu0 %v1582
  %2012 = vmatprep.mubr.bf16.mxu0 %v1938
  %2013 = vmatmul.mubr.bf16.gmra.mrb[0].mxu0 %v1937
  %v2014 = vpop.f32.mrb[0].mxu0
  %v2015 = vadd.f32 0.0, %v2014
  %v2016 = vpop.f32.mrb[0].mxu0
  %v2017 = vadd.f32 0.0, %v2016
  %v2018 = vpop.f32.mrb[0].mxu0
  %v2019 = vpop.f32.mrb[0].mxu0
  %2020 = vdwg.mxu0
  %2021 = vmatprep.subr.bf16.mxu0 %v1465
  %2022 = vmatpush1.bf16.msra.mxu0 %v1464
  %2023 = vmatprep.subr.bf16.mxu0 %v1473
  %2024 = vmatpush1.bf16.msra.mxu0 %v1472
  %2025 = vmatprep.subr.bf16.mxu0 %v1481
  %2026 = vmatpush1.bf16.msra.mxu0 %v1480
  %2027 = vmatprep.subr.bf16.mxu0 %v1489
  %2028 = vmatpush1.bf16.msra.mxu0 %v1488
  %2029 = vmatprep.subr.bf16.mxu0 %v1497
  %2030 = vmatpush1.bf16.msra.mxu0 %v1496
  %2031 = vmatprep.subr.bf16.mxu0 %v1505
  %2032 = vmatpush1.bf16.msra.mxu0 %v1504
  %2033 = vmatprep.subr.bf16.mxu0 %v1513
  %2034 = vmatpush1.bf16.msra.mxu0 %v1512
  %2035 = vmatprep.subr.bf16.mxu0 %v1521
  %2036 = vmatpush1.bf16.msra.mxu0 %v1520
  %2037 = vmatprep.subr.bf16.mxu0 %v1529
  %2038 = vmatpush1.bf16.msra.mxu0 %v1528
  %2039 = vmatprep.subr.bf16.mxu0 %v1537
  %2040 = vmatpush1.bf16.msra.mxu0 %v1536
  %2041 = vmatprep.subr.bf16.mxu0 %v1545
  %2042 = vmatpush1.bf16.msra.mxu0 %v1544
  %2043 = vmatprep.subr.bf16.mxu0 %v1553
  %2044 = vmatpush1.bf16.msra.mxu0 %v1552
  %2045 = vmatprep.subr.bf16.mxu0 %v1561
  %2046 = vmatpush1.bf16.msra.mxu0 %v1560
  %2047 = vmatprep.subr.bf16.mxu0 %v1569
  %2048 = vmatpush1.bf16.msra.mxu0 %v1568
  %2049 = vmatprep.subr.bf16.mxu0 %v1577
  %2050 = vmatpush1.bf16.msra.mxu0 %v1576
  %2051 = vmatprep.subr.bf16.mxu0 %v1585
  %2052 = vmatpush1.bf16.msra.mxu0 %v1584
  %2053 = vmatprep.mubr.bf16.mxu0 %v1938
  %2054 = vmatmul.mubr.bf16.gmra.mrb[0].mxu0 %v1937
  %v2055 = vpop.f32.mrb[0].mxu0
  %v2056 = vadd.f32 0.0, %v2055
  %v2057 = vpop.f32.mrb[0].mxu0
  %v2058 = vadd.f32 0.0, %v2057
  %v2059 = vpop.f32.mrb[0].mxu0
  %v2060 = vpop.f32.mrb[0].mxu0
  %2061 = vdwg.mxu0
  %2062 = vmatprep.subr.bf16.mxu0 %v1467
  %2063 = vmatpush1.bf16.msra.mxu0 %v1466
  %2064 = vmatprep.subr.bf16.mxu0 %v1475
  %2065 = vmatpush1.bf16.msra.mxu0 %v1474
  %2066 = vmatprep.subr.bf16.mxu0 %v1483
  %2067 = vmatpush1.bf16.msra.mxu0 %v1482
  %2068 = vmatprep.subr.bf16.mxu0 %v1491
  %2069 = vmatpush1.bf16.msra.mxu0 %v1490
  %2070 = vmatprep.subr.bf16.mxu0 %v1499
  %2071 = vmatpush1.bf16.msra.mxu0 %v1498
  %2072 = vmatprep.subr.bf16.mxu0 %v1507
  %2073 = vmatpush1.bf16.msra.mxu0 %v1506
  %2074 = vmatprep.subr.bf16.mxu0 %v1515
  %2075 = vmatpush1.bf16.msra.mxu0 %v1514
  %2076 = vmatprep.subr.bf16.mxu0 %v1523
  %2077 = vmatpush1.bf16.msra.mxu0 %v1522
  %2078 = vmatprep.subr.bf16.mxu0 %v1531
  %2079 = vmatpush1.bf16.msra.mxu0 %v1530
  %2080 = vmatprep.subr.bf16.mxu0 %v1539
  %2081 = vmatpush1.bf16.msra.mxu0 %v1538
  %2082 = vmatprep.subr.bf16.mxu0 %v1547
  %2083 = vmatpush1.bf16.msra.mxu0 %v1546
  %2084 = vmatprep.subr.bf16.mxu0 %v1555
  %2085 = vmatpush1.bf16.msra.mxu0 %v1554
  %2086 = vmatprep.subr.bf16.mxu0 %v1563
  %2087 = vmatpush1.bf16.msra.mxu0 %v1562
  %2088 = vmatprep.subr.bf16.mxu0 %v1571
  %2089 = vmatpush1.bf16.msra.mxu0 %v1570
  %2090 = vmatprep.subr.bf16.mxu0 %v1579
  %2091 = vmatpush1.bf16.msra.mxu0 %v1578
  %2092 = vmatprep.subr.bf16.mxu0 %v1587
  %2093 = vmatpush1.bf16.msra.mxu0 %v1586
  %2094 = vmatprep.mubr.bf16.mxu0 %v1938
  %2095 = vmatmul.mubr.bf16.gmra.mrb[0].mxu0 %v1937
  %v2096 = vpop.f32.mrb[0].mxu0
  %v2097 = vadd.f32 0.0, %v2096
  %v2098 = vpop.f32.mrb[0].mxu0
  %v2099 = vadd.f32 0.0, %v2098
  %v2100 = vpop.f32.mrb[0].mxu0
  %v2101 = vpop.f32.mrb[0].mxu0
  %2102 = vdwg.mxu0
  %v2103 = vadd.f32 %v1929, %v1974
  %v2104 = vadd.f32 %v1930, %v1976
  %v2105 = vadd.f32 %v1931, %v2015
  %v2106 = vadd.f32 %v1932, %v2017
  %v2107 = vadd.f32 %v1933, %v2056
  %v2108 = vadd.f32 %v1934, %v2058
  %v2109 = vadd.f32 %v1935, %v2097
  %v2110 = vadd.f32 %v1936, %v2099
  %v2111 = vtanh.pop %v2103
  %v2112 = vtanh.pop %v2104
  %v2113 = vmul.f32 %v2111, 0.5
  %v2114 = vmul.f32 %v2112, 0.5
  %v2115 = vadd.f32 %v2113, 0.5
  %v2116 = vadd.f32 %v2114, 0.5
  %v2117 = vtanh.pop %v2105
  %v2118 = vtanh.pop %v2106
  %v2119 = vmul.f32 %v2117, 0.5
  %v2120 = vmul.f32 %v2118, 0.5
  %v2121 = vadd.f32 %v2119, 0.5
  %v2122 = vadd.f32 %v2120, 0.5
  %v2123 = vtanh.pop %v2107
  %v2124 = vtanh.pop %v2108
  %v2125 = vtanh.pop %v2109
  %v2126 = vtanh.pop %v2110
  %v2127 = vmul.f32 %v2125, 0.5
  %v2128 = vmul.f32 %v2126, 0.5
  %v2129 = vadd.f32 %v2127, 0.5
  %v2130 = vadd.f32 %v2128, 0.5
  %v2131 = vmul.f32 %v2121, %v1926
  %v2132 = vmul.f32 %v2122, %v1927
  %v2133 = vmul.f32 %v2115, %v2123
  %v2134 = vmul.f32 %v2116, %v2124
  %v2135 = vadd.f32 %v2131, %v2133
  %v2136 = vadd.f32 %v2132, %v2134
  %v2137 = vtanh.pop %v2135
  %v2138 = vtanh.pop %v2136
  %v2139 = vmul.f32 %v2129, %v2137
  %v2140 = vmul.f32 %v2130, %v2138
  %vm2141 = vcmp.gt.s32.totalorder %v939, 1
  %v2142 = vsel %vm2141, 1, 0
  %2143 = vset.pattern.permute.xlu0 0
  %2144 = vperm.xlu0 %2143, %v2142
  %v2145 = vpop.permute.xlu0 %2144
  %vm2146 = vcmp.eq.s32.totalorder %v2145, 1
  %v2147 = vsel %vm2146, %v2139, %v1924
  %v2148 = vsel %vm2146, %v2140, %v1925
  %v2149 = vsel %vm2146, %v2135, %v1926
  %v2150 = vsel %vm2146, %v2136, %v1927
  %s2151 = scalar_lea.vmem [#allocation2], 128
  %v2152 = vld [vmem:[%s2151] sm:$0xff]
  %v2153 = vld [vmem:[%s2151 + $0x8] sm:$0xff]
  %v2154 = vld [vmem:[%s2151 + $0x10] sm:$0xff]
  %v2155 = vld [vmem:[%s2151 + $0x18] sm:$0xff]
  %v2156 = vld [vmem:[%s2151 + $0x20] sm:$0xff]
  %v2157 = vld [vmem:[%s2151 + $0x28] sm:$0xff]
  %v2158 = vld [vmem:[%s2151 + $0x30] sm:$0xff]
  %v2159 = vld [vmem:[%s2151 + $0x38] sm:$0xff]
  %v2160 = vpack.c.bf16 %v2147, %v2147
  %v2161 = vpack.c.bf16 %v2148, %v2148
  %2162 = vmatprep.subr.bf16.mxu0 %v1461
  %2163 = vmatpush1.bf16.msra.mxu0 %v1460
  %2164 = vmatprep.subr.bf16.mxu0 %v1469
  %2165 = vmatpush1.bf16.msra.mxu0 %v1468
  %2166 = vmatprep.subr.bf16.mxu0 %v1477
  %2167 = vmatpush1.bf16.msra.mxu0 %v1476
  %2168 = vmatprep.subr.bf16.mxu0 %v1485
  %2169 = vmatpush1.bf16.msra.mxu0 %v1484
  %2170 = vmatprep.subr.bf16.mxu0 %v1493
  %2171 = vmatpush1.bf16.msra.mxu0 %v1492
  %2172 = vmatprep.subr.bf16.mxu0 %v1501
  %2173 = vmatpush1.bf16.msra.mxu0 %v1500
  %2174 = vmatprep.subr.bf16.mxu0 %v1509
  %2175 = vmatpush1.bf16.msra.mxu0 %v1508
  %2176 = vmatprep.subr.bf16.mxu0 %v1517
  %2177 = vmatpush1.bf16.msra.mxu0 %v1516
  %2178 = vmatprep.subr.bf16.mxu0 %v1525
  %2179 = vmatpush1.bf16.msra.mxu0 %v1524
  %2180 = vmatprep.subr.bf16.mxu0 %v1533
  %2181 = vmatpush1.bf16.msra.mxu0 %v1532
  %2182 = vmatprep.subr.bf16.mxu0 %v1541
  %2183 = vmatpush1.bf16.msra.mxu0 %v1540
  %2184 = vmatprep.subr.bf16.mxu0 %v1549
  %2185 = vmatpush1.bf16.msra.mxu0 %v1548
  %2186 = vmatprep.subr.bf16.mxu0 %v1557
  %2187 = vmatpush1.bf16.msra.mxu0 %v1556
  %2188 = vmatprep.subr.bf16.mxu0 %v1565
  %2189 = vmatpush1.bf16.msra.mxu0 %v1564
  %2190 = vmatprep.subr.bf16.mxu0 %v1573
  %2191 = vmatpush1.bf16.msra.mxu0 %v1572
  %2192 = vmatprep.subr.bf16.mxu0 %v1581
  %2193 = vmatpush1.bf16.msra.mxu0 %v1580
  %2194 = vmatprep.mubr.bf16.mxu0 %v2161
  %2195 = vmatmul.mubr.bf16.gmra.mrb[0].mxu0 %v2160
  %v2196 = vpop.f32.mrb[0].mxu0
  %v2197 = vadd.f32 0.0, %v2196
  %v2198 = vpop.f32.mrb[0].mxu0
  %v2199 = vadd.f32 0.0, %v2198
  %v2200 = vpop.f32.mrb[0].mxu0
  %v2201 = vpop.f32.mrb[0].mxu0
  %2202 = vdwg.mxu0
  %2203 = vmatprep.subr.bf16.mxu0 %v1463
  %2204 = vmatpush1.bf16.msra.mxu0 %v1462
  %2205 = vmatprep.subr.bf16.mxu0 %v1471
  %2206 = vmatpush1.bf16.msra.mxu0 %v1470
  %2207 = vmatprep.subr.bf16.mxu0 %v1479
  %2208 = vmatpush1.bf16.msra.mxu0 %v1478
  %2209 = vmatprep.subr.bf16.mxu0 %v1487
  %2210 = vmatpush1.bf16.msra.mxu0 %v1486
  %2211 = vmatprep.subr.bf16.mxu0 %v1495
  %2212 = vmatpush1.bf16.msra.mxu0 %v1494
  %2213 = vmatprep.subr.bf16.mxu0 %v1503
  %2214 = vmatpush1.bf16.msra.mxu0 %v1502
  %2215 = vmatprep.subr.bf16.mxu0 %v1511
  %2216 = vmatpush1.bf16.msra.mxu0 %v1510
  %2217 = vmatprep.subr.bf16.mxu0 %v1519
  %2218 = vmatpush1.bf16.msra.mxu0 %v1518
  %2219 = vmatprep.subr.bf16.mxu0 %v1527
  %2220 = vmatpush1.bf16.msra.mxu0 %v1526
  %2221 = vmatprep.subr.bf16.mxu0 %v1535
  %2222 = vmatpush1.bf16.msra.mxu0 %v1534
  %2223 = vmatprep.subr.bf16.mxu0 %v1543
  %2224 = vmatpush1.bf16.msra.mxu0 %v1542
  %2225 = vmatprep.subr.bf16.mxu0 %v1551
  %2226 = vmatpush1.bf16.msra.mxu0 %v1550
  %2227 = vmatprep.subr.bf16.mxu0 %v1559
  %2228 = vmatpush1.bf16.msra.mxu0 %v1558
  %2229 = vmatprep.subr.bf16.mxu0 %v1567
  %2230 = vmatpush1.bf16.msra.mxu0 %v1566
  %2231 = vmatprep.subr.bf16.mxu0 %v1575
  %2232 = vmatpush1.bf16.msra.mxu0 %v1574
  %2233 = vmatprep.subr.bf16.mxu0 %v1583
  %2234 = vmatpush1.bf16.msra.mxu0 %v1582
  %2235 = vmatprep.mubr.bf16.mxu0 %v2161
  %2236 = vmatmul.mubr.bf16.gmra.mrb[0].mxu0 %v2160
  %v2237 = vpop.f32.mrb[0].mxu0
  %v2238 = vadd.f32 0.0, %v2237
  %v2239 = vpop.f32.mrb[0].mxu0
  %v2240 = vadd.f32 0.0, %v2239
  %v2241 = vpop.f32.mrb[0].mxu0
  %v2242 = vpop.f32.mrb[0].mxu0
  %2243 = vdwg.mxu0
  %2244 = vmatprep.subr.bf16.mxu0 %v1465
  %2245 = vmatpush1.bf16.msra.mxu0 %v1464
  %2246 = vmatprep.subr.bf16.mxu0 %v1473
  %2247 = vmatpush1.bf16.msra.mxu0 %v1472
  %2248 = vmatprep.subr.bf16.mxu0 %v1481
  %2249 = vmatpush1.bf16.msra.mxu0 %v1480
  %2250 = vmatprep.subr.bf16.mxu0 %v1489
  %2251 = vmatpush1.bf16.msra.mxu0 %v1488
  %2252 = vmatprep.subr.bf16.mxu0 %v1497
  %2253 = vmatpush1.bf16.msra.mxu0 %v1496
  %2254 = vmatprep.subr.bf16.mxu0 %v1505
  %2255 = vmatpush1.bf16.msra.mxu0 %v1504
  %2256 = vmatprep.subr.bf16.mxu0 %v1513
  %2257 = vmatpush1.bf16.msra.mxu0 %v1512
  %2258 = vmatprep.subr.bf16.mxu0 %v1521
  %2259 = vmatpush1.bf16.msra.mxu0 %v1520
  %2260 = vmatprep.subr.bf16.mxu0 %v1529
  %2261 = vmatpush1.bf16.msra.mxu0 %v1528
  %2262 = vmatprep.subr.bf16.mxu0 %v1537
  %2263 = vmatpush1.bf16.msra.mxu0 %v1536
  %2264 = vmatprep.subr.bf16.mxu0 %v1545
  %2265 = vmatpush1.bf16.msra.mxu0 %v1544
  %2266 = vmatprep.subr.bf16.mxu0 %v1553
  %2267 = vmatpush1.bf16.msra.mxu0 %v1552
  %2268 = vmatprep.subr.bf16.mxu0 %v1561
  %2269 = vmatpush1.bf16.msra.mxu0 %v1560
  %2270 = vmatprep.subr.bf16.mxu0 %v1569
  %2271 = vmatpush1.bf16.msra.mxu0 %v1568
  %2272 = vmatprep.subr.bf16.mxu0 %v1577
  %2273 = vmatpush1.bf16.msra.mxu0 %v1576
  %2274 = vmatprep.subr.bf16.mxu0 %v1585
  %2275 = vmatpush1.bf16.msra.mxu0 %v1584
  %2276 = vmatprep.mubr.bf16.mxu0 %v2161
  %2277 = vmatmul.mubr.bf16.gmra.mrb[0].mxu0 %v2160
  %v2278 = vpop.f32.mrb[0].mxu0
  %v2279 = vadd.f32 0.0, %v2278
  %v2280 = vpop.f32.mrb[0].mxu0
  %v2281 = vadd.f32 0.0, %v2280
  %v2282 = vpop.f32.mrb[0].mxu0
  %v2283 = vpop.f32.mrb[0].mxu0
  %2284 = vdwg.mxu0
  %2285 = vmatprep.subr.bf16.mxu0 %v1467
  %2286 = vmatpush1.bf16.msra.mxu0 %v1466
  %2287 = vmatprep.subr.bf16.mxu0 %v1475
  %2288 = vmatpush1.bf16.msra.mxu0 %v1474
  %2289 = vmatprep.subr.bf16.mxu0 %v1483
  %2290 = vmatpush1.bf16.msra.mxu0 %v1482
  %2291 = vmatprep.subr.bf16.mxu0 %v1491
  %2292 = vmatpush1.bf16.msra.mxu0 %v1490
  %2293 = vmatprep.subr.bf16.mxu0 %v1499
  %2294 = vmatpush1.bf16.msra.mxu0 %v1498
  %2295 = vmatprep.subr.bf16.mxu0 %v1507
  %2296 = vmatpush1.bf16.msra.mxu0 %v1506
  %2297 = vmatprep.subr.bf16.mxu0 %v1515
  %2298 = vmatpush1.bf16.msra.mxu0 %v1514
  %2299 = vmatprep.subr.bf16.mxu0 %v1523
  %2300 = vmatpush1.bf16.msra.mxu0 %v1522
  %2301 = vmatprep.subr.bf16.mxu0 %v1531
  %2302 = vmatpush1.bf16.msra.mxu0 %v1530
  %2303 = vmatprep.subr.bf16.mxu0 %v1539
  %2304 = vmatpush1.bf16.msra.mxu0 %v1538
  %2305 = vmatprep.subr.bf16.mxu0 %v1547
  %2306 = vmatpush1.bf16.msra.mxu0 %v1546
  %2307 = vmatprep.subr.bf16.mxu0 %v1555
  %2308 = vmatpush1.bf16.msra.mxu0 %v1554
  %2309 = vmatprep.subr.bf16.mxu0 %v1563
  %2310 = vmatpush1.bf16.msra.mxu0 %v1562
  %2311 = vmatprep.subr.bf16.mxu0 %v1571
  %2312 = vmatpush1.bf16.msra.mxu0 %v1570
  %2313 = vmatprep.subr.bf16.mxu0 %v1579
  %2314 = vmatpush1.bf16.msra.mxu0 %v1578
  %2315 = vmatprep.subr.bf16.mxu0 %v1587
  %2316 = vmatpush1.bf16.msra.mxu0 %v1586
  %2317 = vmatprep.mubr.bf16.mxu0 %v2161
  %2318 = vmatmul.mubr.bf16.gmra.mrb[0].mxu0 %v2160
  %v2319 = vpop.f32.mrb[0].mxu0
  %v2320 = vadd.f32 0.0, %v2319
  %v2321 = vpop.f32.mrb[0].mxu0
  %v2322 = vadd.f32 0.0, %v2321
  %v2323 = vpop.f32.mrb[0].mxu0
  %v2324 = vpop.f32.mrb[0].mxu0
  %2325 = vdwg.mxu0
  %v2326 = vadd.f32 %v2152, %v2197
  %v2327 = vadd.f32 %v2153, %v2199
  %v2328 = vadd.f32 %v2154, %v2238
  %v2329 = vadd.f32 %v2155, %v2240
  %v2330 = vadd.f32 %v2156, %v2279
  %v2331 = vadd.f32 %v2157, %v2281
  %v2332 = vadd.f32 %v2158, %v2320
  %v2333 = vadd.f32 %v2159, %v2322
  %v2334 = vtanh.pop %v2326
  %v2335 = vtanh.pop %v2327
  %v2336 = vmul.f32 %v2334, 0.5
  %v2337 = vmul.f32 %v2335, 0.5
  %v2338 = vadd.f32 %v2336, 0.5
  %v2339 = vadd.f32 %v2337, 0.5
  %v2340 = vtanh.pop %v2328
  %v2341 = vtanh.pop %v2329
  %v2342 = vmul.f32 %v2340, 0.5
  %v2343 = vmul.f32 %v2341, 0.5
  %v2344 = vadd.f32 %v2342, 0.5
  %v2345 = vadd.f32 %v2343, 0.5
  %v2346 = vtanh.pop %v2330
  %v2347 = vtanh.pop %v2331
  %v2348 = vtanh.pop %v2332
  %v2349 = vtanh.pop %v2333
  %v2350 = vmul.f32 %v2348, 0.5
  %v2351 = vmul.f32 %v2349, 0.5
  %v2352 = vadd.f32 %v2350, 0.5
  %v2353 = vadd.f32 %v2351, 0.5
  %v2354 = vmul.f32 %v2344, %v2149
  %v2355 = vmul.f32 %v2345, %v2150
  %v2356 = vmul.f32 %v2338, %v2346
  %v2357 = vmul.f32 %v2339, %v2347
  %v2358 = vadd.f32 %v2354, %v2356
  %v2359 = vadd.f32 %v2355, %v2357
  %v2360 = vtanh.pop %v2358
  %v2361 = vtanh.pop %v2359
  %v2362 = vmul.f32 %v2352, %v2360
  %v2363 = vmul.f32 %v2353, %v2361
  %vm2364 = vcmp.gt.s32.totalorder %v939, 2
  %v2365 = vsel %vm2364, 1, 0
  %2366 = vset.pattern.permute.xlu0 0
  %2367 = vperm.xlu0 %2366, %v2365
  %v2368 = vpop.permute.xlu0 %2367
  %vm2369 = vcmp.eq.s32.totalorder %v2368, 1
  %v2370 = vsel %vm2369, %v2362, %v2147
  %v2371 = vsel %vm2369, %v2363, %v2148
  %v2372 = vsel %vm2369, %v2358, %v2149
  %v2373 = vsel %vm2369, %v2359, %v2150
  %s2374 = scalar_lea.vmem [#allocation2], 192
  %v2375 = vld [vmem:[%s2374] sm:$0xff]
  %v2376 = vld [vmem:[%s2374 + $0x8] sm:$0xff]
  %v2377 = vld [vmem:[%s2374 + $0x10] sm:$0xff]
  %v2378 = vld [vmem:[%s2374 + $0x18] sm:$0xff]
  %v2379 = vld [vmem:[%s2374 + $0x20] sm:$0xff]
  %v2380 = vld [vmem:[%s2374 + $0x28] sm:$0xff]
  %v2381 = vld [vmem:[%s2374 + $0x30] sm:$0xff]
  %v2382 = vld [vmem:[%s2374 + $0x38] sm:$0xff]
  %v2383 = vpack.c.bf16 %v2370, %v2370
  %v2384 = vpack.c.bf16 %v2371, %v2371
  %2385 = vmatprep.subr.bf16.mxu0 %v1461
  %2386 = vmatpush1.bf16.msra.mxu0 %v1460
  %2387 = vmatprep.subr.bf16.mxu0 %v1469
  %2388 = vmatpush1.bf16.msra.mxu0 %v1468
  %2389 = vmatprep.subr.bf16.mxu0 %v1477
  %2390 = vmatpush1.bf16.msra.mxu0 %v1476
  %2391 = vmatprep.subr.bf16.mxu0 %v1485
  %2392 = vmatpush1.bf16.msra.mxu0 %v1484
  %2393 = vmatprep.subr.bf16.mxu0 %v1493
  %2394 = vmatpush1.bf16.msra.mxu0 %v1492
  %2395 = vmatprep.subr.bf16.mxu0 %v1501
  %2396 = vmatpush1.bf16.msra.mxu0 %v1500
  %2397 = vmatprep.subr.bf16.mxu0 %v1509
  %2398 = vmatpush1.bf16.msra.mxu0 %v1508
  %2399 = vmatprep.subr.bf16.mxu0 %v1517
  %2400 = vmatpush1.bf16.msra.mxu0 %v1516
  %2401 = vmatprep.subr.bf16.mxu0 %v1525
  %2402 = vmatpush1.bf16.msra.mxu0 %v1524
  %2403 = vmatprep.subr.bf16.mxu0 %v1533
  %2404 = vmatpush1.bf16.msra.mxu0 %v1532
  %2405 = vmatprep.subr.bf16.mxu0 %v1541
  %2406 = vmatpush1.bf16.msra.mxu0 %v1540
  %2407 = vmatprep.subr.bf16.mxu0 %v1549
  %2408 = vmatpush1.bf16.msra.mxu0 %v1548
  %2409 = vmatprep.subr.bf16.mxu0 %v1557
  %2410 = vmatpush1.bf16.msra.mxu0 %v1556
  %2411 = vmatprep.subr.bf16.mxu0 %v1565
  %2412 = vmatpush1.bf16.msra.mxu0 %v1564
  %2413 = vmatprep.subr.bf16.mxu0 %v1573
  %2414 = vmatpush1.bf16.msra.mxu0 %v1572
  %2415 = vmatprep.subr.bf16.mxu0 %v1581
  %2416 = vmatpush1.bf16.msra.mxu0 %v1580
  %2417 = vmatprep.mubr.bf16.mxu0 %v2384
  %2418 = vmatmul.mubr.bf16.gmra.mrb[0].mxu0 %v2383
  %v2419 = vpop.f32.mrb[0].mxu0
  %v2420 = vadd.f32 0.0, %v2419
  %v2421 = vpop.f32.mrb[0].mxu0
  %v2422 = vadd.f32 0.0, %v2421
  %v2423 = vpop.f32.mrb[0].mxu0
  %v2424 = vpop.f32.mrb[0].mxu0
  %2425 = vdwg.mxu0
  %2426 = vmatprep.subr.bf16.mxu0 %v1463
  %2427 = vmatpush1.bf16.msra.mxu0 %v1462
  %2428 = vmatprep.subr.bf16.mxu0 %v1471
  %2429 = vmatpush1.bf16.msra.mxu0 %v1470
  %2430 = vmatprep.subr.bf16.mxu0 %v1479
  %2431 = vmatpush1.bf16.msra.mxu0 %v1478
  %2432 = vmatprep.subr.bf16.mxu0 %v1487
  %2433 = vmatpush1.bf16.msra.mxu0 %v1486
  %2434 = vmatprep.subr.bf16.mxu0 %v1495
  %2435 = vmatpush1.bf16.msra.mxu0 %v1494
  %2436 = vmatprep.subr.bf16.mxu0 %v1503
  %2437 = vmatpush1.bf16.msra.mxu0 %v1502
  %2438 = vmatprep.subr.bf16.mxu0 %v1511
  %2439 = vmatpush1.bf16.msra.mxu0 %v1510
  %2440 = vmatprep.subr.bf16.mxu0 %v1519
  %2441 = vmatpush1.bf16.msra.mxu0 %v1518
  %2442 = vmatprep.subr.bf16.mxu0 %v1527
  %2443 = vmatpush1.bf16.msra.mxu0 %v1526
  %2444 = vmatprep.subr.bf16.mxu0 %v1535
  %2445 = vmatpush1.bf16.msra.mxu0 %v1534
  %2446 = vmatprep.subr.bf16.mxu0 %v1543
  %2447 = vmatpush1.bf16.msra.mxu0 %v1542
  %2448 = vmatprep.subr.bf16.mxu0 %v1551
  %2449 = vmatpush1.bf16.msra.mxu0 %v1550
  %2450 = vmatprep.subr.bf16.mxu0 %v1559
  %2451 = vmatpush1.bf16.msra.mxu0 %v1558
  %2452 = vmatprep.subr.bf16.mxu0 %v1567
  %2453 = vmatpush1.bf16.msra.mxu0 %v1566
  %2454 = vmatprep.subr.bf16.mxu0 %v1575
  %2455 = vmatpush1.bf16.msra.mxu0 %v1574
  %2456 = vmatprep.subr.bf16.mxu0 %v1583
  %2457 = vmatpush1.bf16.msra.mxu0 %v1582
  %2458 = vmatprep.mubr.bf16.mxu0 %v2384
  %2459 = vmatmul.mubr.bf16.gmra.mrb[0].mxu0 %v2383
  %v2460 = vpop.f32.mrb[0].mxu0
  %v2461 = vadd.f32 0.0, %v2460
  %v2462 = vpop.f32.mrb[0].mxu0
  %v2463 = vadd.f32 0.0, %v2462
  %v2464 = vpop.f32.mrb[0].mxu0
  %v2465 = vpop.f32.mrb[0].mxu0
  %2466 = vdwg.mxu0
  %2467 = vmatprep.subr.bf16.mxu0 %v1465
  %2468 = vmatpush1.bf16.msra.mxu0 %v1464
  %2469 = vmatprep.subr.bf16.mxu0 %v1473
  %2470 = vmatpush1.bf16.msra.mxu0 %v1472
  %2471 = vmatprep.subr.bf16.mxu0 %v1481
  %2472 = vmatpush1.bf16.msra.mxu0 %v1480
  %2473 = vmatprep.subr.bf16.mxu0 %v1489
  %2474 = vmatpush1.bf16.msra.mxu0 %v1488
  %2475 = vmatprep.subr.bf16.mxu0 %v1497
  %2476 = vmatpush1.bf16.msra.mxu0 %v1496
  %2477 = vmatprep.subr.bf16.mxu0 %v1505
  %2478 = vmatpush1.bf16.msra.mxu0 %v1504
  %2479 = vmatprep.subr.bf16.mxu0 %v1513
  %2480 = vmatpush1.bf16.msra.mxu0 %v1512
  %2481 = vmatprep.subr.bf16.mxu0 %v1521
  %2482 = vmatpush1.bf16.msra.mxu0 %v1520
  %2483 = vmatprep.subr.bf16.mxu0 %v1529
  %2484 = vmatpush1.bf16.msra.mxu0 %v1528
  %2485 = vmatprep.subr.bf16.mxu0 %v1537
  %2486 = vmatpush1.bf16.msra.mxu0 %v1536
  %2487 = vmatprep.subr.bf16.mxu0 %v1545
  %2488 = vmatpush1.bf16.msra.mxu0 %v1544
  %2489 = vmatprep.subr.bf16.mxu0 %v1553
  %2490 = vmatpush1.bf16.msra.mxu0 %v1552
  %2491 = vmatprep.subr.bf16.mxu0 %v1561
  %2492 = vmatpush1.bf16.msra.mxu0 %v1560
  %2493 = vmatprep.subr.bf16.mxu0 %v1569
  %2494 = vmatpush1.bf16.msra.mxu0 %v1568
  %2495 = vmatprep.subr.bf16.mxu0 %v1577
  %2496 = vmatpush1.bf16.msra.mxu0 %v1576
  %2497 = vmatprep.subr.bf16.mxu0 %v1585
  %2498 = vmatpush1.bf16.msra.mxu0 %v1584
  %2499 = vmatprep.mubr.bf16.mxu0 %v2384
  %2500 = vmatmul.mubr.bf16.gmra.mrb[0].mxu0 %v2383
  %v2501 = vpop.f32.mrb[0].mxu0
  %v2502 = vadd.f32 0.0, %v2501
  %v2503 = vpop.f32.mrb[0].mxu0
  %v2504 = vadd.f32 0.0, %v2503
  %v2505 = vpop.f32.mrb[0].mxu0
  %v2506 = vpop.f32.mrb[0].mxu0
  %2507 = vdwg.mxu0
  %2508 = vmatprep.subr.bf16.mxu0 %v1467
  %2509 = vmatpush1.bf16.msra.mxu0 %v1466
  %2510 = vmatprep.subr.bf16.mxu0 %v1475
  %2511 = vmatpush1.bf16.msra.mxu0 %v1474
  %2512 = vmatprep.subr.bf16.mxu0 %v1483
  %2513 = vmatpush1.bf16.msra.mxu0 %v1482
  %2514 = vmatprep.subr.bf16.mxu0 %v1491
  %2515 = vmatpush1.bf16.msra.mxu0 %v1490
  %2516 = vmatprep.subr.bf16.mxu0 %v1499
  %2517 = vmatpush1.bf16.msra.mxu0 %v1498
  %2518 = vmatprep.subr.bf16.mxu0 %v1507
  %2519 = vmatpush1.bf16.msra.mxu0 %v1506
  %2520 = vmatprep.subr.bf16.mxu0 %v1515
  %2521 = vmatpush1.bf16.msra.mxu0 %v1514
  %2522 = vmatprep.subr.bf16.mxu0 %v1523
  %2523 = vmatpush1.bf16.msra.mxu0 %v1522
  %2524 = vmatprep.subr.bf16.mxu0 %v1531
  %2525 = vmatpush1.bf16.msra.mxu0 %v1530
  %2526 = vmatprep.subr.bf16.mxu0 %v1539
  %2527 = vmatpush1.bf16.msra.mxu0 %v1538
  %2528 = vmatprep.subr.bf16.mxu0 %v1547
  %2529 = vmatpush1.bf16.msra.mxu0 %v1546
  %2530 = vmatprep.subr.bf16.mxu0 %v1555
  %2531 = vmatpush1.bf16.msra.mxu0 %v1554
  %2532 = vmatprep.subr.bf16.mxu0 %v1563
  %2533 = vmatpush1.bf16.msra.mxu0 %v1562
  %2534 = vmatprep.subr.bf16.mxu0 %v1571
  %2535 = vmatpush1.bf16.msra.mxu0 %v1570
  %2536 = vmatprep.subr.bf16.mxu0 %v1579
  %2537 = vmatpush1.bf16.msra.mxu0 %v1578
  %2538 = vmatprep.subr.bf16.mxu0 %v1587
  %2539 = vmatpush1.bf16.msra.mxu0 %v1586
  %2540 = vmatprep.mubr.bf16.mxu0 %v2384
  %2541 = vmatmul.mubr.bf16.gmra.mrb[0].mxu0 %v2383
  %v2542 = vpop.f32.mrb[0].mxu0
  %v2543 = vadd.f32 0.0, %v2542
  %v2544 = vpop.f32.mrb[0].mxu0
  %v2545 = vadd.f32 0.0, %v2544
  %v2546 = vpop.f32.mrb[0].mxu0
  %v2547 = vpop.f32.mrb[0].mxu0
  %2548 = vdwg.mxu0
  %v2549 = vadd.f32 %v2375, %v2420
  %v2550 = vadd.f32 %v2376, %v2422
  %v2551 = vadd.f32 %v2377, %v2461
  %v2552 = vadd.f32 %v2378, %v2463
  %v2553 = vadd.f32 %v2379, %v2502
  %v2554 = vadd.f32 %v2380, %v2504
  %v2555 = vadd.f32 %v2381, %v2543
  %v2556 = vadd.f32 %v2382, %v2545
  %v2557 = vtanh.pop %v2549
  %v2558 = vtanh.pop %v2550
  %v2559 = vmul.f32 %v2557, 0.5
  %v2560 = vmul.f32 %v2558, 0.5
  %v2561 = vadd.f32 %v2559, 0.5
  %v2562 = vadd.f32 %v2560, 0.5
  %v2563 = vtanh.pop %v2551
  %v2564 = vtanh.pop %v2552
  %v2565 = vmul.f32 %v2563, 0.5
  %v2566 = vmul.f32 %v2564, 0.5
  %v2567 = vadd.f32 %v2565, 0.5
  %v2568 = vadd.f32 %v2566, 0.5
  %v2569 = vtanh.pop %v2553
  %v2570 = vtanh.pop %v2554
  %v2571 = vtanh.pop %v2555
  %v2572 = vtanh.pop %v2556
  %v2573 = vmul.f32 %v2571, 0.5
  %v2574 = vmul.f32 %v2572, 0.5
  %v2575 = vadd.f32 %v2573, 0.5
  %v2576 = vadd.f32 %v2574, 0.5
  %v2577 = vmul.f32 %v2567, %v2372
  %v2578 = vmul.f32 %v2568, %v2373
  %v2579 = vmul.f32 %v2561, %v2569
  %v2580 = vmul.f32 %v2562, %v2570
  %v2581 = vadd.f32 %v2577, %v2579
  %v2582 = vadd.f32 %v2578, %v2580
  %v2583 = vtanh.pop %v2581
  %v2584 = vtanh.pop %v2582
  %v2585 = vmul.f32 %v2575, %v2583
  %v2586 = vmul.f32 %v2576, %v2584
  %vm2587 = vcmp.gt.s32.totalorder %v939, 3
  %v2588 = vsel %vm2587, 1, 0
  %2589 = vset.pattern.permute.xlu0 0
  %2590 = vperm.xlu0 %2589, %v2588
  %v2591 = vpop.permute.xlu0 %2590
  %vm2592 = vcmp.eq.s32.totalorder %v2591, 1
  %v2593 = vsel %vm2592, %v2585, %v2370
  %v2594 = vsel %vm2592, %v2586, %v2371
  %v2595 = vsel %vm2592, %v2581, %v2372
  %v2596 = vsel %vm2592, %v2582, %v2373
  %s2597 = scalar_lea.vmem [#allocation2], 256
  %v2598 = vld [vmem:[%s2597] sm:$0xff]
  %v2599 = vld [vmem:[%s2597 + $0x8] sm:$0xff]
  %v2600 = vld [vmem:[%s2597 + $0x10] sm:$0xff]
  %v2601 = vld [vmem:[%s2597 + $0x18] sm:$0xff]
  %v2602 = vld [vmem:[%s2597 + $0x20] sm:$0xff]
  %v2603 = vld [vmem:[%s2597 + $0x28] sm:$0xff]
  %v2604 = vld [vmem:[%s2597 + $0x30] sm:$0xff]
  %v2605 = vld [vmem:[%s2597 + $0x38] sm:$0xff]
  %v2606 = vpack.c.bf16 %v2593, %v2593
  %v2607 = vpack.c.bf16 %v2594, %v2594
  %2608 = vmatprep.subr.bf16.mxu0 %v1461
  %2609 = vmatpush1.bf16.msra.mxu0 %v1460
  %2610 = vmatprep.subr.bf16.mxu0 %v1469
  %2611 = vmatpush1.bf16.msra.mxu0 %v1468
  %2612 = vmatprep.subr.bf16.mxu0 %v1477
  %2613 = vmatpush1.bf16.msra.mxu0 %v1476
  %2614 = vmatprep.subr.bf16.mxu0 %v1485
  %2615 = vmatpush1.bf16.msra.mxu0 %v1484
  %2616 = vmatprep.subr.bf16.mxu0 %v1493
  %2617 = vmatpush1.bf16.msra.mxu0 %v1492
  %2618 = vmatprep.subr.bf16.mxu0 %v1501
  %2619 = vmatpush1.bf16.msra.mxu0 %v1500
  %2620 = vmatprep.subr.bf16.mxu0 %v1509
  %2621 = vmatpush1.bf16.msra.mxu0 %v1508
  %2622 = vmatprep.subr.bf16.mxu0 %v1517
  %2623 = vmatpush1.bf16.msra.mxu0 %v1516
  %2624 = vmatprep.subr.bf16.mxu0 %v1525
  %2625 = vmatpush1.bf16.msra.mxu0 %v1524
  %2626 = vmatprep.subr.bf16.mxu0 %v1533
  %2627 = vmatpush1.bf16.msra.mxu0 %v1532
  %2628 = vmatprep.subr.bf16.mxu0 %v1541
  %2629 = vmatpush1.bf16.msra.mxu0 %v1540
  %2630 = vmatprep.subr.bf16.mxu0 %v1549
  %2631 = vmatpush1.bf16.msra.mxu0 %v1548
  %2632 = vmatprep.subr.bf16.mxu0 %v1557
  %2633 = vmatpush1.bf16.msra.mxu0 %v1556
  %2634 = vmatprep.subr.bf16.mxu0 %v1565
  %2635 = vmatpush1.bf16.msra.mxu0 %v1564
  %2636 = vmatprep.subr.bf16.mxu0 %v1573
  %2637 = vmatpush1.bf16.msra.mxu0 %v1572
  %2638 = vmatprep.subr.bf16.mxu0 %v1581
  %2639 = vmatpush1.bf16.msra.mxu0 %v1580
  %2640 = vmatprep.mubr.bf16.mxu0 %v2607
  %2641 = vmatmul.mubr.bf16.gmra.mrb[0].mxu0 %v2606
  %v2642 = vpop.f32.mrb[0].mxu0
  %v2643 = vadd.f32 0.0, %v2642
  %v2644 = vpop.f32.mrb[0].mxu0
  %v2645 = vadd.f32 0.0, %v2644
  %v2646 = vpop.f32.mrb[0].mxu0
  %v2647 = vpop.f32.mrb[0].mxu0
  %2648 = vdwg.mxu0
  %2649 = vmatprep.subr.bf16.mxu0 %v1463
  %2650 = vmatpush1.bf16.msra.mxu0 %v1462
  %2651 = vmatprep.subr.bf16.mxu0 %v1471
  %2652 = vmatpush1.bf16.msra.mxu0 %v1470
  %2653 = vmatprep.subr.bf16.mxu0 %v1479
  %2654 = vmatpush1.bf16.msra.mxu0 %v1478
  %2655 = vmatprep.subr.bf16.mxu0 %v1487
  %2656 = vmatpush1.bf16.msra.mxu0 %v1486
  %2657 = vmatprep.subr.bf16.mxu0 %v1495
  %2658 = vmatpush1.bf16.msra.mxu0 %v1494
  %2659 = vmatprep.subr.bf16.mxu0 %v1503
  %2660 = vmatpush1.bf16.msra.mxu0 %v1502
  %2661 = vmatprep.subr.bf16.mxu0 %v1511
  %2662 = vmatpush1.bf16.msra.mxu0 %v1510
  %2663 = vmatprep.subr.bf16.mxu0 %v1519
  %2664 = vmatpush1.bf16.msra.mxu0 %v1518
  %2665 = vmatprep.subr.bf16.mxu0 %v1527
  %2666 = vmatpush1.bf16.msra.mxu0 %v1526
  %2667 = vmatprep.subr.bf16.mxu0 %v1535
  %2668 = vmatpush1.bf16.msra.mxu0 %v1534
  %2669 = vmatprep.subr.bf16.mxu0 %v1543
  %2670 = vmatpush1.bf16.msra.mxu0 %v1542
  %2671 = vmatprep.subr.bf16.mxu0 %v1551
  %2672 = vmatpush1.bf16.msra.mxu0 %v1550
  %2673 = vmatprep.subr.bf16.mxu0 %v1559
  %2674 = vmatpush1.bf16.msra.mxu0 %v1558
  %2675 = vmatprep.subr.bf16.mxu0 %v1567
  %2676 = vmatpush1.bf16.msra.mxu0 %v1566
  %2677 = vmatprep.subr.bf16.mxu0 %v1575
  %2678 = vmatpush1.bf16.msra.mxu0 %v1574
  %2679 = vmatprep.subr.bf16.mxu0 %v1583
  %2680 = vmatpush1.bf16.msra.mxu0 %v1582
  %2681 = vmatprep.mubr.bf16.mxu0 %v2607
  %2682 = vmatmul.mubr.bf16.gmra.mrb[0].mxu0 %v2606
  %v2683 = vpop.f32.mrb[0].mxu0
  %v2684 = vadd.f32 0.0, %v2683
  %v2685 = vpop.f32.mrb[0].mxu0
  %v2686 = vadd.f32 0.0, %v2685
  %v2687 = vpop.f32.mrb[0].mxu0
  %v2688 = vpop.f32.mrb[0].mxu0
  %2689 = vdwg.mxu0
  %2690 = vmatprep.subr.bf16.mxu0 %v1465
  %2691 = vmatpush1.bf16.msra.mxu0 %v1464
  %2692 = vmatprep.subr.bf16.mxu0 %v1473
  %2693 = vmatpush1.bf16.msra.mxu0 %v1472
  %2694 = vmatprep.subr.bf16.mxu0 %v1481
  %2695 = vmatpush1.bf16.msra.mxu0 %v1480
  %2696 = vmatprep.subr.bf16.mxu0 %v1489
  %2697 = vmatpush1.bf16.msra.mxu0 %v1488
  %2698 = vmatprep.subr.bf16.mxu0 %v1497
  %2699 = vmatpush1.bf16.msra.mxu0 %v1496
  %2700 = vmatprep.subr.bf16.mxu0 %v1505
  %2701 = vmatpush1.bf16.msra.mxu0 %v1504
  %2702 = vmatprep.subr.bf16.mxu0 %v1513
  %2703 = vmatpush1.bf16.msra.mxu0 %v1512
  %2704 = vmatprep.subr.bf16.mxu0 %v1521
  %2705 = vmatpush1.bf16.msra.mxu0 %v1520
  %2706 = vmatprep.subr.bf16.mxu0 %v1529
  %2707 = vmatpush1.bf16.msra.mxu0 %v1528
  %2708 = vmatprep.subr.bf16.mxu0 %v1537
  %2709 = vmatpush1.bf16.msra.mxu0 %v1536
  %2710 = vmatprep.subr.bf16.mxu0 %v1545
  %2711 = vmatpush1.bf16.msra.mxu0 %v1544
  %2712 = vmatprep.subr.bf16.mxu0 %v1553
  %2713 = vmatpush1.bf16.msra.mxu0 %v1552
  %2714 = vmatprep.subr.bf16.mxu0 %v1561
  %2715 = vmatpush1.bf16.msra.mxu0 %v1560
  %2716 = vmatprep.subr.bf16.mxu0 %v1569
  %2717 = vmatpush1.bf16.msra.mxu0 %v1568
  %2718 = vmatprep.subr.bf16.mxu0 %v1577
  %2719 = vmatpush1.bf16.msra.mxu0 %v1576
  %2720 = vmatprep.subr.bf16.mxu0 %v1585
  %2721 = vmatpush1.bf16.msra.mxu0 %v1584
  %2722 = vmatprep.mubr.bf16.mxu0 %v2607
  %2723 = vmatmul.mubr.bf16.gmra.mrb[0].mxu0 %v2606
  %v2724 = vpop.f32.mrb[0].mxu0
  %v2725 = vadd.f32 0.0, %v2724
  %v2726 = vpop.f32.mrb[0].mxu0
  %v2727 = vadd.f32 0.0, %v2726
  %v2728 = vpop.f32.mrb[0].mxu0
  %v2729 = vpop.f32.mrb[0].mxu0
  %2730 = vdwg.mxu0
  %2731 = vmatprep.subr.bf16.mxu0 %v1467
  %2732 = vmatpush1.bf16.msra.mxu0 %v1466
  %2733 = vmatprep.subr.bf16.mxu0 %v1475
  %2734 = vmatpush1.bf16.msra.mxu0 %v1474
  %2735 = vmatprep.subr.bf16.mxu0 %v1483
  %2736 = vmatpush1.bf16.msra.mxu0 %v1482
  %2737 = vmatprep.subr.bf16.mxu0 %v1491
  %2738 = vmatpush1.bf16.msra.mxu0 %v1490
  %2739 = vmatprep.subr.bf16.mxu0 %v1499
  %2740 = vmatpush1.bf16.msra.mxu0 %v1498
  %2741 = vmatprep.subr.bf16.mxu0 %v1507
  %2742 = vmatpush1.bf16.msra.mxu0 %v1506
  %2743 = vmatprep.subr.bf16.mxu0 %v1515
  %2744 = vmatpush1.bf16.msra.mxu0 %v1514
  %2745 = vmatprep.subr.bf16.mxu0 %v1523
  %2746 = vmatpush1.bf16.msra.mxu0 %v1522
  %2747 = vmatprep.subr.bf16.mxu0 %v1531
  %2748 = vmatpush1.bf16.msra.mxu0 %v1530
  %2749 = vmatprep.subr.bf16.mxu0 %v1539
  %2750 = vmatpush1.bf16.msra.mxu0 %v1538
  %2751 = vmatprep.subr.bf16.mxu0 %v1547
  %2752 = vmatpush1.bf16.msra.mxu0 %v1546
  %2753 = vmatprep.subr.bf16.mxu0 %v1555
  %2754 = vmatpush1.bf16.msra.mxu0 %v1554
  %2755 = vmatprep.subr.bf16.mxu0 %v1563
  %2756 = vmatpush1.bf16.msra.mxu0 %v1562
  %2757 = vmatprep.subr.bf16.mxu0 %v1571
  %2758 = vmatpush1.bf16.msra.mxu0 %v1570
  %2759 = vmatprep.subr.bf16.mxu0 %v1579
  %2760 = vmatpush1.bf16.msra.mxu0 %v1578
  %2761 = vmatprep.subr.bf16.mxu0 %v1587
  %2762 = vmatpush1.bf16.msra.mxu0 %v1586
  %2763 = vmatprep.mubr.bf16.mxu0 %v2607
  %2764 = vmatmul.mubr.bf16.gmra.mrb[0].mxu0 %v2606
  %v2765 = vpop.f32.mrb[0].mxu0
  %v2766 = vadd.f32 0.0, %v2765
  %v2767 = vpop.f32.mrb[0].mxu0
  %v2768 = vadd.f32 0.0, %v2767
  %v2769 = vpop.f32.mrb[0].mxu0
  %v2770 = vpop.f32.mrb[0].mxu0
  %2771 = vdwg.mxu0
  %v2772 = vadd.f32 %v2598, %v2643
  %v2773 = vadd.f32 %v2599, %v2645
  %v2774 = vadd.f32 %v2600, %v2684
  %v2775 = vadd.f32 %v2601, %v2686
  %v2776 = vadd.f32 %v2602, %v2725
  %v2777 = vadd.f32 %v2603, %v2727
  %v2778 = vadd.f32 %v2604, %v2766
  %v2779 = vadd.f32 %v2605, %v2768
  %v2780 = vtanh.pop %v2772
  %v2781 = vtanh.pop %v2773
  %v2782 = vmul.f32 %v2780, 0.5
  %v2783 = vmul.f32 %v2781, 0.5
  %v2784 = vadd.f32 %v2782, 0.5
  %v2785 = vadd.f32 %v2783, 0.5
  %v2786 = vtanh.pop %v2774
  %v2787 = vtanh.pop %v2775
  %v2788 = vmul.f32 %v2786, 0.5
  %v2789 = vmul.f32 %v2787, 0.5
  %v2790 = vadd.f32 %v2788, 0.5
  %v2791 = vadd.f32 %v2789, 0.5
  %v2792 = vtanh.pop %v2776
  %v2793 = vtanh.pop %v2777
  %v2794 = vtanh.pop %v2778
  %v2795 = vtanh.pop %v2779
  %v2796 = vmul.f32 %v2794, 0.5
  %v2797 = vmul.f32 %v2795, 0.5
  %v2798 = vadd.f32 %v2796, 0.5
  %v2799 = vadd.f32 %v2797, 0.5
  %v2800 = vmul.f32 %v2790, %v2595
  %v2801 = vmul.f32 %v2791, %v2596
  %v2802 = vmul.f32 %v2784, %v2792
  %v2803 = vmul.f32 %v2785, %v2793
  %v2804 = vadd.f32 %v2800, %v2802
  %v2805 = vadd.f32 %v2801, %v2803
  %v2806 = vtanh.pop %v2804
  %v2807 = vtanh.pop %v2805
  %v2808 = vmul.f32 %v2798, %v2806
  %v2809 = vmul.f32 %v2799, %v2807
  %vm2810 = vcmp.gt.s32.totalorder %v939, 4
  %v2811 = vsel %vm2810, 1, 0
  %2812 = vset.pattern.permute.xlu0 0
  %2813 = vperm.xlu0 %2812, %v2811
  %v2814 = vpop.permute.xlu0 %2813
  %vm2815 = vcmp.eq.s32.totalorder %v2814, 1
  %v2816 = vsel %vm2815, %v2808, %v2593
  %v2817 = vsel %vm2815, %v2809, %v2594
  %v2818 = vsel %vm2815, %v2804, %v2595
  %v2819 = vsel %vm2815, %v2805, %v2596
  %s2820 = scalar_lea.vmem [#allocation2], 320
  %v2821 = vld [vmem:[%s2820] sm:$0xff]
  %v2822 = vld [vmem:[%s2820 + $0x8] sm:$0xff]
  %v2823 = vld [vmem:[%s2820 + $0x10] sm:$0xff]
  %v2824 = vld [vmem:[%s2820 + $0x18] sm:$0xff]
  %v2825 = vld [vmem:[%s2820 + $0x20] sm:$0xff]
  %v2826 = vld [vmem:[%s2820 + $0x28] sm:$0xff]
  %v2827 = vld [vmem:[%s2820 + $0x30] sm:$0xff]
  %v2828 = vld [vmem:[%s2820 + $0x38] sm:$0xff]
  %v2829 = vpack.c.bf16 %v2816, %v2816
  %v2830 = vpack.c.bf16 %v2817, %v2817
  %2831 = vmatprep.subr.bf16.mxu0 %v1461
  %2832 = vmatpush1.bf16.msra.mxu0 %v1460
  %2833 = vmatprep.subr.bf16.mxu0 %v1469
  %2834 = vmatpush1.bf16.msra.mxu0 %v1468
  %2835 = vmatprep.subr.bf16.mxu0 %v1477
  %2836 = vmatpush1.bf16.msra.mxu0 %v1476
  %2837 = vmatprep.subr.bf16.mxu0 %v1485
  %2838 = vmatpush1.bf16.msra.mxu0 %v1484
  %2839 = vmatprep.subr.bf16.mxu0 %v1493
  %2840 = vmatpush1.bf16.msra.mxu0 %v1492
  %2841 = vmatprep.subr.bf16.mxu0 %v1501
  %2842 = vmatpush1.bf16.msra.mxu0 %v1500
  %2843 = vmatprep.subr.bf16.mxu0 %v1509
  %2844 = vmatpush1.bf16.msra.mxu0 %v1508
  %2845 = vmatprep.subr.bf16.mxu0 %v1517
  %2846 = vmatpush1.bf16.msra.mxu0 %v1516
  %2847 = vmatprep.subr.bf16.mxu0 %v1525
  %2848 = vmatpush1.bf16.msra.mxu0 %v1524
  %2849 = vmatprep.subr.bf16.mxu0 %v1533
  %2850 = vmatpush1.bf16.msra.mxu0 %v1532
  %2851 = vmatprep.subr.bf16.mxu0 %v1541
  %2852 = vmatpush1.bf16.msra.mxu0 %v1540
  %2853 = vmatprep.subr.bf16.mxu0 %v1549
  %2854 = vmatpush1.bf16.msra.mxu0 %v1548
  %2855 = vmatprep.subr.bf16.mxu0 %v1557
  %2856 = vmatpush1.bf16.msra.mxu0 %v1556
  %2857 = vmatprep.subr.bf16.mxu0 %v1565
  %2858 = vmatpush1.bf16.msra.mxu0 %v1564
  %2859 = vmatprep.subr.bf16.mxu0 %v1573
  %2860 = vmatpush1.bf16.msra.mxu0 %v1572
  %2861 = vmatprep.subr.bf16.mxu0 %v1581
  %2862 = vmatpush1.bf16.msra.mxu0 %v1580
  %2863 = vmatprep.mubr.bf16.mxu0 %v2830
  %2864 = vmatmul.mubr.bf16.gmra.mrb[0].mxu0 %v2829
  %v2865 = vpop.f32.mrb[0].mxu0
  %v2866 = vadd.f32 0.0, %v2865
  %v2867 = vpop.f32.mrb[0].mxu0
  %v2868 = vadd.f32 0.0, %v2867
  %v2869 = vpop.f32.mrb[0].mxu0
  %v2870 = vpop.f32.mrb[0].mxu0
  %2871 = vdwg.mxu0
  %2872 = vmatprep.subr.bf16.mxu0 %v1463
  %2873 = vmatpush1.bf16.msra.mxu0 %v1462
  %2874 = vmatprep.subr.bf16.mxu0 %v1471
  %2875 = vmatpush1.bf16.msra.mxu0 %v1470
  %2876 = vmatprep.subr.bf16.mxu0 %v1479
  %2877 = vmatpush1.bf16.msra.mxu0 %v1478
  %2878 = vmatprep.subr.bf16.mxu0 %v1487
  %2879 = vmatpush1.bf16.msra.mxu0 %v1486
  %2880 = vmatprep.subr.bf16.mxu0 %v1495
  %2881 = vmatpush1.bf16.msra.mxu0 %v1494
  %2882 = vmatprep.subr.bf16.mxu0 %v1503
  %2883 = vmatpush1.bf16.msra.mxu0 %v1502
  %2884 = vmatprep.subr.bf16.mxu0 %v1511
  %2885 = vmatpush1.bf16.msra.mxu0 %v1510
  %2886 = vmatprep.subr.bf16.mxu0 %v1519
  %2887 = vmatpush1.bf16.msra.mxu0 %v1518
  %2888 = vmatprep.subr.bf16.mxu0 %v1527
  %2889 = vmatpush1.bf16.msra.mxu0 %v1526
  %2890 = vmatprep.subr.bf16.mxu0 %v1535
  %2891 = vmatpush1.bf16.msra.mxu0 %v1534
  %2892 = vmatprep.subr.bf16.mxu0 %v1543
  %2893 = vmatpush1.bf16.msra.mxu0 %v1542
  %2894 = vmatprep.subr.bf16.mxu0 %v1551
  %2895 = vmatpush1.bf16.msra.mxu0 %v1550
  %2896 = vmatprep.subr.bf16.mxu0 %v1559
  %2897 = vmatpush1.bf16.msra.mxu0 %v1558
  %2898 = vmatprep.subr.bf16.mxu0 %v1567
  %2899 = vmatpush1.bf16.msra.mxu0 %v1566
  %2900 = vmatprep.subr.bf16.mxu0 %v1575
  %2901 = vmatpush1.bf16.msra.mxu0 %v1574
  %2902 = vmatprep.subr.bf16.mxu0 %v1583
  %2903 = vmatpush1.bf16.msra.mxu0 %v1582
  %2904 = vmatprep.mubr.bf16.mxu0 %v2830
  %2905 = vmatmul.mubr.bf16.gmra.mrb[0].mxu0 %v2829
  %v2906 = vpop.f32.mrb[0].mxu0
  %v2907 = vadd.f32 0.0, %v2906
  %v2908 = vpop.f32.mrb[0].mxu0
  %v2909 = vadd.f32 0.0, %v2908
  %v2910 = vpop.f32.mrb[0].mxu0
  %v2911 = vpop.f32.mrb[0].mxu0
  %2912 = vdwg.mxu0
  %2913 = vmatprep.subr.bf16.mxu0 %v1465
  %2914 = vmatpush1.bf16.msra.mxu0 %v1464
  %2915 = vmatprep.subr.bf16.mxu0 %v1473
  %2916 = vmatpush1.bf16.msra.mxu0 %v1472
  %2917 = vmatprep.subr.bf16.mxu0 %v1481
  %2918 = vmatpush1.bf16.msra.mxu0 %v1480
  %2919 = vmatprep.subr.bf16.mxu0 %v1489
  %2920 = vmatpush1.bf16.msra.mxu0 %v1488
  %2921 = vmatprep.subr.bf16.mxu0 %v1497
  %2922 = vmatpush1.bf16.msra.mxu0 %v1496
  %2923 = vmatprep.subr.bf16.mxu0 %v1505
  %2924 = vmatpush1.bf16.msra.mxu0 %v1504
  %2925 = vmatprep.subr.bf16.mxu0 %v1513
  %2926 = vmatpush1.bf16.msra.mxu0 %v1512
  %2927 = vmatprep.subr.bf16.mxu0 %v1521
  %2928 = vmatpush1.bf16.msra.mxu0 %v1520
  %2929 = vmatprep.subr.bf16.mxu0 %v1529
  %2930 = vmatpush1.bf16.msra.mxu0 %v1528
  %2931 = vmatprep.subr.bf16.mxu0 %v1537
  %2932 = vmatpush1.bf16.msra.mxu0 %v1536
  %2933 = vmatprep.subr.bf16.mxu0 %v1545
  %2934 = vmatpush1.bf16.msra.mxu0 %v1544
  %2935 = vmatprep.subr.bf16.mxu0 %v1553
  %2936 = vmatpush1.bf16.msra.mxu0 %v1552
  %2937 = vmatprep.subr.bf16.mxu0 %v1561
  %2938 = vmatpush1.bf16.msra.mxu0 %v1560
  %2939 = vmatprep.subr.bf16.mxu0 %v1569
  %2940 = vmatpush1.bf16.msra.mxu0 %v1568
  %2941 = vmatprep.subr.bf16.mxu0 %v1577
  %2942 = vmatpush1.bf16.msra.mxu0 %v1576
  %2943 = vmatprep.subr.bf16.mxu0 %v1585
  %2944 = vmatpush1.bf16.msra.mxu0 %v1584
  %2945 = vmatprep.mubr.bf16.mxu0 %v2830
  %2946 = vmatmul.mubr.bf16.gmra.mrb[0].mxu0 %v2829
  %v2947 = vpop.f32.mrb[0].mxu0
  %v2948 = vadd.f32 0.0, %v2947
  %v2949 = vpop.f32.mrb[0].mxu0
  %v2950 = vadd.f32 0.0, %v2949
  %v2951 = vpop.f32.mrb[0].mxu0
  %v2952 = vpop.f32.mrb[0].mxu0
  %2953 = vdwg.mxu0
  %2954 = vmatprep.subr.bf16.mxu0 %v1467
  %2955 = vmatpush1.bf16.msra.mxu0 %v1466
  %2956 = vmatprep.subr.bf16.mxu0 %v1475
  %2957 = vmatpush1.bf16.msra.mxu0 %v1474
  %2958 = vmatprep.subr.bf16.mxu0 %v1483
  %2959 = vmatpush1.bf16.msra.mxu0 %v1482
  %2960 = vmatprep.subr.bf16.mxu0 %v1491
  %2961 = vmatpush1.bf16.msra.mxu0 %v1490
  %2962 = vmatprep.subr.bf16.mxu0 %v1499
  %2963 = vmatpush1.bf16.msra.mxu0 %v1498
  %2964 = vmatprep.subr.bf16.mxu0 %v1507
  %2965 = vmatpush1.bf16.msra.mxu0 %v1506
  %2966 = vmatprep.subr.bf16.mxu0 %v1515
  %2967 = vmatpush1.bf16.msra.mxu0 %v1514
  %2968 = vmatprep.subr.bf16.mxu0 %v1523
  %2969 = vmatpush1.bf16.msra.mxu0 %v1522
  %2970 = vmatprep.subr.bf16.mxu0 %v1531
  %2971 = vmatpush1.bf16.msra.mxu0 %v1530
  %2972 = vmatprep.subr.bf16.mxu0 %v1539
  %2973 = vmatpush1.bf16.msra.mxu0 %v1538
  %2974 = vmatprep.subr.bf16.mxu0 %v1547
  %2975 = vmatpush1.bf16.msra.mxu0 %v1546
  %2976 = vmatprep.subr.bf16.mxu0 %v1555
  %2977 = vmatpush1.bf16.msra.mxu0 %v1554
  %2978 = vmatprep.subr.bf16.mxu0 %v1563
  %2979 = vmatpush1.bf16.msra.mxu0 %v1562
  %2980 = vmatprep.subr.bf16.mxu0 %v1571
  %2981 = vmatpush1.bf16.msra.mxu0 %v1570
  %2982 = vmatprep.subr.bf16.mxu0 %v1579
  %2983 = vmatpush1.bf16.msra.mxu0 %v1578
  %2984 = vmatprep.subr.bf16.mxu0 %v1587
  %2985 = vmatpush1.bf16.msra.mxu0 %v1586
  %2986 = vmatprep.mubr.bf16.mxu0 %v2830
  %2987 = vmatmul.mubr.bf16.gmra.mrb[0].mxu0 %v2829
  %v2988 = vpop.f32.mrb[0].mxu0
  %v2989 = vadd.f32 0.0, %v2988
  %v2990 = vpop.f32.mrb[0].mxu0
  %v2991 = vadd.f32 0.0, %v2990
  %v2992 = vpop.f32.mrb[0].mxu0
  %v2993 = vpop.f32.mrb[0].mxu0
  %2994 = vdwg.mxu0
  %v2995 = vadd.f32 %v2821, %v2866
  %v2996 = vadd.f32 %v2822, %v2868
  %v2997 = vadd.f32 %v2823, %v2907
  %v2998 = vadd.f32 %v2824, %v2909
  %v2999 = vadd.f32 %v2825, %v2948
  %v3000 = vadd.f32 %v2826, %v2950
  %v3001 = vadd.f32 %v2827, %v2989
  %v3002 = vadd.f32 %v2828, %v2991
  %v3003 = vtanh.pop %v2995
  %v3004 = vtanh.pop %v2996
  %v3005 = vmul.f32 %v3003, 0.5
  %v3006 = vmul.f32 %v3004, 0.5
  %v3007 = vadd.f32 %v3005, 0.5
  %v3008 = vadd.f32 %v3006, 0.5
  %v3009 = vtanh.pop %v2997
  %v3010 = vtanh.pop %v2998
  %v3011 = vmul.f32 %v3009, 0.5
  %v3012 = vmul.f32 %v3010, 0.5
  %v3013 = vadd.f32 %v3011, 0.5
  %v3014 = vadd.f32 %v3012, 0.5
  %v3015 = vtanh.pop %v2999
  %v3016 = vtanh.pop %v3000
  %v3017 = vtanh.pop %v3001
  %v3018 = vtanh.pop %v3002
  %v3019 = vmul.f32 %v3017, 0.5
  %v3020 = vmul.f32 %v3018, 0.5
  %v3021 = vadd.f32 %v3019, 0.5
  %v3022 = vadd.f32 %v3020, 0.5
  %v3023 = vmul.f32 %v3013, %v2818
  %v3024 = vmul.f32 %v3014, %v2819
  %v3025 = vmul.f32 %v3007, %v3015
  %v3026 = vmul.f32 %v3008, %v3016
  %v3027 = vadd.f32 %v3023, %v3025
  %v3028 = vadd.f32 %v3024, %v3026
  %v3029 = vtanh.pop %v3027
  %v3030 = vtanh.pop %v3028
  %v3031 = vmul.f32 %v3021, %v3029
  %v3032 = vmul.f32 %v3022, %v3030
  %vm3033 = vcmp.gt.s32.totalorder %v939, 5
  %v3034 = vsel %vm3033, 1, 0
  %3035 = vset.pattern.permute.xlu0 0
  %3036 = vperm.xlu0 %3035, %v3034
  %v3037 = vpop.permute.xlu0 %3036
  %vm3038 = vcmp.eq.s32.totalorder %v3037, 1
  %v3039 = vsel %vm3038, %v3031, %v2816
  %v3040 = vsel %vm3038, %v3032, %v2817
  %v3041 = vsel %vm3038, %v3027, %v2818
  %v3042 = vsel %vm3038, %v3028, %v2819
  %s3043 = scalar_lea.vmem [#allocation2], 384
  %v3044 = vld [vmem:[%s3043] sm:$0xff]
  %v3045 = vld [vmem:[%s3043 + $0x8] sm:$0xff]
  %v3046 = vld [vmem:[%s3043 + $0x10] sm:$0xff]
  %v3047 = vld [vmem:[%s3043 + $0x18] sm:$0xff]
  %v3048 = vld [vmem:[%s3043 + $0x20] sm:$0xff]
  %v3049 = vld [vmem:[%s3043 + $0x28] sm:$0xff]
  %v3050 = vld [vmem:[%s3043 + $0x30] sm:$0xff]
  %v3051 = vld [vmem:[%s3043 + $0x38] sm:$0xff]
  %v3052 = vpack.c.bf16 %v3039, %v3039
  %v3053 = vpack.c.bf16 %v3040, %v3040
  %3054 = vmatprep.subr.bf16.mxu0 %v1461
  %3055 = vmatpush1.bf16.msra.mxu0 %v1460
  %3056 = vmatprep.subr.bf16.mxu0 %v1469
  %3057 = vmatpush1.bf16.msra.mxu0 %v1468
  %3058 = vmatprep.subr.bf16.mxu0 %v1477
  %3059 = vmatpush1.bf16.msra.mxu0 %v1476
  %3060 = vmatprep.subr.bf16.mxu0 %v1485
  %3061 = vmatpush1.bf16.msra.mxu0 %v1484
  %3062 = vmatprep.subr.bf16.mxu0 %v1493
  %3063 = vmatpush1.bf16.msra.mxu0 %v1492
  %3064 = vmatprep.subr.bf16.mxu0 %v1501
  %3065 = vmatpush1.bf16.msra.mxu0 %v1500
  %3066 = vmatprep.subr.bf16.mxu0 %v1509
  %3067 = vmatpush1.bf16.msra.mxu0 %v1508
  %3068 = vmatprep.subr.bf16.mxu0 %v1517
  %3069 = vmatpush1.bf16.msra.mxu0 %v1516
  %3070 = vmatprep.subr.bf16.mxu0 %v1525
  %3071 = vmatpush1.bf16.msra.mxu0 %v1524
  %3072 = vmatprep.subr.bf16.mxu0 %v1533
  %3073 = vmatpush1.bf16.msra.mxu0 %v1532
  %3074 = vmatprep.subr.bf16.mxu0 %v1541
  %3075 = vmatpush1.bf16.msra.mxu0 %v1540
  %3076 = vmatprep.subr.bf16.mxu0 %v1549
  %3077 = vmatpush1.bf16.msra.mxu0 %v1548
  %3078 = vmatprep.subr.bf16.mxu0 %v1557
  %3079 = vmatpush1.bf16.msra.mxu0 %v1556
  %3080 = vmatprep.subr.bf16.mxu0 %v1565
  %3081 = vmatpush1.bf16.msra.mxu0 %v1564
  %3082 = vmatprep.subr.bf16.mxu0 %v1573
  %3083 = vmatpush1.bf16.msra.mxu0 %v1572
  %3084 = vmatprep.subr.bf16.mxu0 %v1581
  %3085 = vmatpush1.bf16.msra.mxu0 %v1580
  %3086 = vmatprep.mubr.bf16.mxu0 %v3053
  %3087 = vmatmul.mubr.bf16.gmra.mrb[0].mxu0 %v3052
  %v3088 = vpop.f32.mrb[0].mxu0
  %v3089 = vadd.f32 0.0, %v3088
  %v3090 = vpop.f32.mrb[0].mxu0
  %v3091 = vadd.f32 0.0, %v3090
  %v3092 = vpop.f32.mrb[0].mxu0
  %v3093 = vpop.f32.mrb[0].mxu0
  %3094 = vdwg.mxu0
  %3095 = vmatprep.subr.bf16.mxu0 %v1463
  %3096 = vmatpush1.bf16.msra.mxu0 %v1462
  %3097 = vmatprep.subr.bf16.mxu0 %v1471
  %3098 = vmatpush1.bf16.msra.mxu0 %v1470
  %3099 = vmatprep.subr.bf16.mxu0 %v1479
  %3100 = vmatpush1.bf16.msra.mxu0 %v1478
  %3101 = vmatprep.subr.bf16.mxu0 %v1487
  %3102 = vmatpush1.bf16.msra.mxu0 %v1486
  %3103 = vmatprep.subr.bf16.mxu0 %v1495
  %3104 = vmatpush1.bf16.msra.mxu0 %v1494
  %3105 = vmatprep.subr.bf16.mxu0 %v1503
  %3106 = vmatpush1.bf16.msra.mxu0 %v1502
  %3107 = vmatprep.subr.bf16.mxu0 %v1511
  %3108 = vmatpush1.bf16.msra.mxu0 %v1510
  %3109 = vmatprep.subr.bf16.mxu0 %v1519
  %3110 = vmatpush1.bf16.msra.mxu0 %v1518
  %3111 = vmatprep.subr.bf16.mxu0 %v1527
  %3112 = vmatpush1.bf16.msra.mxu0 %v1526
  %3113 = vmatprep.subr.bf16.mxu0 %v1535
  %3114 = vmatpush1.bf16.msra.mxu0 %v1534
  %3115 = vmatprep.subr.bf16.mxu0 %v1543
  %3116 = vmatpush1.bf16.msra.mxu0 %v1542
  %3117 = vmatprep.subr.bf16.mxu0 %v1551
  %3118 = vmatpush1.bf16.msra.mxu0 %v1550
  %3119 = vmatprep.subr.bf16.mxu0 %v1559
  %3120 = vmatpush1.bf16.msra.mxu0 %v1558
  %3121 = vmatprep.subr.bf16.mxu0 %v1567
  %3122 = vmatpush1.bf16.msra.mxu0 %v1566
  %3123 = vmatprep.subr.bf16.mxu0 %v1575
  %3124 = vmatpush1.bf16.msra.mxu0 %v1574
  %3125 = vmatprep.subr.bf16.mxu0 %v1583
  %3126 = vmatpush1.bf16.msra.mxu0 %v1582
  %3127 = vmatprep.mubr.bf16.mxu0 %v3053
  %3128 = vmatmul.mubr.bf16.gmra.mrb[0].mxu0 %v3052
  %v3129 = vpop.f32.mrb[0].mxu0
  %v3130 = vadd.f32 0.0, %v3129
  %v3131 = vpop.f32.mrb[0].mxu0
  %v3132 = vadd.f32 0.0, %v3131
  %v3133 = vpop.f32.mrb[0].mxu0
  %v3134 = vpop.f32.mrb[0].mxu0
  %3135 = vdwg.mxu0
  %3136 = vmatprep.subr.bf16.mxu0 %v1465
  %3137 = vmatpush1.bf16.msra.mxu0 %v1464
  %3138 = vmatprep.subr.bf16.mxu0 %v1473
  %3139 = vmatpush1.bf16.msra.mxu0 %v1472
  %3140 = vmatprep.subr.bf16.mxu0 %v1481
  %3141 = vmatpush1.bf16.msra.mxu0 %v1480
  %3142 = vmatprep.subr.bf16.mxu0 %v1489
  %3143 = vmatpush1.bf16.msra.mxu0 %v1488
  %3144 = vmatprep.subr.bf16.mxu0 %v1497
  %3145 = vmatpush1.bf16.msra.mxu0 %v1496
  %3146 = vmatprep.subr.bf16.mxu0 %v1505
  %3147 = vmatpush1.bf16.msra.mxu0 %v1504
  %3148 = vmatprep.subr.bf16.mxu0 %v1513
  %3149 = vmatpush1.bf16.msra.mxu0 %v1512
  %3150 = vmatprep.subr.bf16.mxu0 %v1521
  %3151 = vmatpush1.bf16.msra.mxu0 %v1520
  %3152 = vmatprep.subr.bf16.mxu0 %v1529
  %3153 = vmatpush1.bf16.msra.mxu0 %v1528
  %3154 = vmatprep.subr.bf16.mxu0 %v1537
  %3155 = vmatpush1.bf16.msra.mxu0 %v1536
  %3156 = vmatprep.subr.bf16.mxu0 %v1545
  %3157 = vmatpush1.bf16.msra.mxu0 %v1544
  %3158 = vmatprep.subr.bf16.mxu0 %v1553
  %3159 = vmatpush1.bf16.msra.mxu0 %v1552
  %3160 = vmatprep.subr.bf16.mxu0 %v1561
  %3161 = vmatpush1.bf16.msra.mxu0 %v1560
  %3162 = vmatprep.subr.bf16.mxu0 %v1569
  %3163 = vmatpush1.bf16.msra.mxu0 %v1568
  %3164 = vmatprep.subr.bf16.mxu0 %v1577
  %3165 = vmatpush1.bf16.msra.mxu0 %v1576
  %3166 = vmatprep.subr.bf16.mxu0 %v1585
  %3167 = vmatpush1.bf16.msra.mxu0 %v1584
  %3168 = vmatprep.mubr.bf16.mxu0 %v3053
  %3169 = vmatmul.mubr.bf16.gmra.mrb[0].mxu0 %v3052
  %v3170 = vpop.f32.mrb[0].mxu0
  %v3171 = vadd.f32 0.0, %v3170
  %v3172 = vpop.f32.mrb[0].mxu0
  %v3173 = vadd.f32 0.0, %v3172
  %v3174 = vpop.f32.mrb[0].mxu0
  %v3175 = vpop.f32.mrb[0].mxu0
  %3176 = vdwg.mxu0
  %3177 = vmatprep.subr.bf16.mxu0 %v1467
  %3178 = vmatpush1.bf16.msra.mxu0 %v1466
  %3179 = vmatprep.subr.bf16.mxu0 %v1475
  %3180 = vmatpush1.bf16.msra.mxu0 %v1474
  %3181 = vmatprep.subr.bf16.mxu0 %v1483
  %3182 = vmatpush1.bf16.msra.mxu0 %v1482
  %3183 = vmatprep.subr.bf16.mxu0 %v1491
  %3184 = vmatpush1.bf16.msra.mxu0 %v1490
  %3185 = vmatprep.subr.bf16.mxu0 %v1499
  %3186 = vmatpush1.bf16.msra.mxu0 %v1498
  %3187 = vmatprep.subr.bf16.mxu0 %v1507
  %3188 = vmatpush1.bf16.msra.mxu0 %v1506
  %3189 = vmatprep.subr.bf16.mxu0 %v1515
  %3190 = vmatpush1.bf16.msra.mxu0 %v1514
  %3191 = vmatprep.subr.bf16.mxu0 %v1523
  %3192 = vmatpush1.bf16.msra.mxu0 %v1522
  %3193 = vmatprep.subr.bf16.mxu0 %v1531
  %3194 = vmatpush1.bf16.msra.mxu0 %v1530
  %3195 = vmatprep.subr.bf16.mxu0 %v1539
  %3196 = vmatpush1.bf16.msra.mxu0 %v1538
  %3197 = vmatprep.subr.bf16.mxu0 %v1547
  %3198 = vmatpush1.bf16.msra.mxu0 %v1546
  %3199 = vmatprep.subr.bf16.mxu0 %v1555
  %3200 = vmatpush1.bf16.msra.mxu0 %v1554
  %3201 = vmatprep.subr.bf16.mxu0 %v1563
  %3202 = vmatpush1.bf16.msra.mxu0 %v1562
  %3203 = vmatprep.subr.bf16.mxu0 %v1571
  %3204 = vmatpush1.bf16.msra.mxu0 %v1570
  %3205 = vmatprep.subr.bf16.mxu0 %v1579
  %3206 = vmatpush1.bf16.msra.mxu0 %v1578
  %3207 = vmatprep.subr.bf16.mxu0 %v1587
  %3208 = vmatpush1.bf16.msra.mxu0 %v1586
  %3209 = vmatprep.mubr.bf16.mxu0 %v3053
  %3210 = vmatmul.mubr.bf16.gmra.mrb[0].mxu0 %v3052
  %v3211 = vpop.f32.mrb[0].mxu0
  %v3212 = vadd.f32 0.0, %v3211
  %v3213 = vpop.f32.mrb[0].mxu0
  %v3214 = vadd.f32 0.0, %v3213
  %v3215 = vpop.f32.mrb[0].mxu0
  %v3216 = vpop.f32.mrb[0].mxu0
  %3217 = vdwg.mxu0
  %v3218 = vadd.f32 %v3044, %v3089
  %v3219 = vadd.f32 %v3045, %v3091
  %v3220 = vadd.f32 %v3046, %v3130
  %v3221 = vadd.f32 %v3047, %v3132
  %v3222 = vadd.f32 %v3048, %v3171
  %v3223 = vadd.f32 %v3049, %v3173
  %v3224 = vadd.f32 %v3050, %v3212
  %v3225 = vadd.f32 %v3051, %v3214
  %v3226 = vtanh.pop %v3218
  %v3227 = vtanh.pop %v3219
  %v3228 = vmul.f32 %v3226, 0.5
  %v3229 = vmul.f32 %v3227, 0.5
  %v3230 = vadd.f32 %v3228, 0.5
  %v3231 = vadd.f32 %v3229, 0.5
  %v3232 = vtanh.pop %v3220
  %v3233 = vtanh.pop %v3221
  %v3234 = vmul.f32 %v3232, 0.5
  %v3235 = vmul.f32 %v3233, 0.5
  %v3236 = vadd.f32 %v3234, 0.5
  %v3237 = vadd.f32 %v3235, 0.5
  %v3238 = vtanh.pop %v3222
  %v3239 = vtanh.pop %v3223
  %v3240 = vtanh.pop %v3224
  %v3241 = vtanh.pop %v3225
  %v3242 = vmul.f32 %v3240, 0.5
  %v3243 = vmul.f32 %v3241, 0.5
  %v3244 = vadd.f32 %v3242, 0.5
  %v3245 = vadd.f32 %v3243, 0.5
  %v3246 = vmul.f32 %v3236, %v3041
  %v3247 = vmul.f32 %v3237, %v3042
  %v3248 = vmul.f32 %v3230, %v3238
  %v3249 = vmul.f32 %v3231, %v3239
  %v3250 = vadd.f32 %v3246, %v3248
  %v3251 = vadd.f32 %v3247, %v3249
  %v3252 = vtanh.pop %v3250
  %v3253 = vtanh.pop %v3251
  %v3254 = vmul.f32 %v3244, %v3252
  %v3255 = vmul.f32 %v3245, %v3253
  %vm3256 = vcmp.gt.s32.totalorder %v939, 6
  %v3257 = vsel %vm3256, 1, 0
  %3258 = vset.pattern.permute.xlu0 0
  %3259 = vperm.xlu0 %3258, %v3257
  %v3260 = vpop.permute.xlu0 %3259
  %vm3261 = vcmp.eq.s32.totalorder %v3260, 1
  %v3262 = vsel %vm3261, %v3254, %v3039
  %v3263 = vsel %vm3261, %v3255, %v3040
  %v3264 = vsel %vm3261, %v3250, %v3041
  %v3265 = vsel %vm3261, %v3251, %v3042
  %s3266 = scalar_lea.vmem [#allocation2], 448
  %v3267 = vld [vmem:[%s3266] sm:$0xff]
  %v3268 = vld [vmem:[%s3266 + $0x8] sm:$0xff]
  %v3269 = vld [vmem:[%s3266 + $0x10] sm:$0xff]
  %v3270 = vld [vmem:[%s3266 + $0x18] sm:$0xff]
  %v3271 = vld [vmem:[%s3266 + $0x20] sm:$0xff]
  %v3272 = vld [vmem:[%s3266 + $0x28] sm:$0xff]
  %v3273 = vld [vmem:[%s3266 + $0x30] sm:$0xff]
  %v3274 = vld [vmem:[%s3266 + $0x38] sm:$0xff]
  %v3275 = vpack.c.bf16 %v3262, %v3262
  %v3276 = vpack.c.bf16 %v3263, %v3263
  %3277 = vmatprep.subr.bf16.mxu0 %v1461
  %3278 = vmatpush1.bf16.msra.mxu0 %v1460
  %3279 = vmatprep.subr.bf16.mxu0 %v1469
  %3280 = vmatpush1.bf16.msra.mxu0 %v1468
  %3281 = vmatprep.subr.bf16.mxu0 %v1477
  %3282 = vmatpush1.bf16.msra.mxu0 %v1476
  %3283 = vmatprep.subr.bf16.mxu0 %v1485
  %3284 = vmatpush1.bf16.msra.mxu0 %v1484
  %3285 = vmatprep.subr.bf16.mxu0 %v1493
  %3286 = vmatpush1.bf16.msra.mxu0 %v1492
  %3287 = vmatprep.subr.bf16.mxu0 %v1501
  %3288 = vmatpush1.bf16.msra.mxu0 %v1500
  %3289 = vmatprep.subr.bf16.mxu0 %v1509
  %3290 = vmatpush1.bf16.msra.mxu0 %v1508
  %3291 = vmatprep.subr.bf16.mxu0 %v1517
  %3292 = vmatpush1.bf16.msra.mxu0 %v1516
  %3293 = vmatprep.subr.bf16.mxu0 %v1525
  %3294 = vmatpush1.bf16.msra.mxu0 %v1524
  %3295 = vmatprep.subr.bf16.mxu0 %v1533
  %3296 = vmatpush1.bf16.msra.mxu0 %v1532
  %3297 = vmatprep.subr.bf16.mxu0 %v1541
  %3298 = vmatpush1.bf16.msra.mxu0 %v1540
  %3299 = vmatprep.subr.bf16.mxu0 %v1549
  %3300 = vmatpush1.bf16.msra.mxu0 %v1548
  %3301 = vmatprep.subr.bf16.mxu0 %v1557
  %3302 = vmatpush1.bf16.msra.mxu0 %v1556
  %3303 = vmatprep.subr.bf16.mxu0 %v1565
  %3304 = vmatpush1.bf16.msra.mxu0 %v1564
  %3305 = vmatprep.subr.bf16.mxu0 %v1573
  %3306 = vmatpush1.bf16.msra.mxu0 %v1572
  %3307 = vmatprep.subr.bf16.mxu0 %v1581
  %3308 = vmatpush1.bf16.msra.mxu0 %v1580
  %3309 = vmatprep.mubr.bf16.mxu0 %v3276
  %3310 = vmatmul.mubr.bf16.gmra.mrb[0].mxu0 %v3275
  %v3311 = vpop.f32.mrb[0].mxu0
  %v3312 = vadd.f32 0.0, %v3311
  %v3313 = vpop.f32.mrb[0].mxu0
  %v3314 = vadd.f32 0.0, %v3313
  %v3315 = vpop.f32.mrb[0].mxu0
  %v3316 = vpop.f32.mrb[0].mxu0
  %3317 = vdwg.mxu0
  %3318 = vmatprep.subr.bf16.mxu0 %v1463
  %3319 = vmatpush1.bf16.msra.mxu0 %v1462
  %3320 = vmatprep.subr.bf16.mxu0 %v1471
  %3321 = vmatpush1.bf16.msra.mxu0 %v1470
  %3322 = vmatprep.subr.bf16.mxu0 %v1479
  %3323 = vmatpush1.bf16.msra.mxu0 %v1478
  %3324 = vmatprep.subr.bf16.mxu0 %v1487
  %3325 = vmatpush1.bf16.msra.mxu0 %v1486
  %3326 = vmatprep.subr.bf16.mxu0 %v1495
  %3327 = vmatpush1.bf16.msra.mxu0 %v1494
  %3328 = vmatprep.subr.bf16.mxu0 %v1503
  %3329 = vmatpush1.bf16.msra.mxu0 %v1502
  %3330 = vmatprep.subr.bf16.mxu0 %v1511
  %3331 = vmatpush1.bf16.msra.mxu0 %v1510
  %3332 = vmatprep.subr.bf16.mxu0 %v1519
  %3333 = vmatpush1.bf16.msra.mxu0 %v1518
  %3334 = vmatprep.subr.bf16.mxu0 %v1527
  %3335 = vmatpush1.bf16.msra.mxu0 %v1526
  %3336 = vmatprep.subr.bf16.mxu0 %v1535
  %3337 = vmatpush1.bf16.msra.mxu0 %v1534
  %3338 = vmatprep.subr.bf16.mxu0 %v1543
  %3339 = vmatpush1.bf16.msra.mxu0 %v1542
  %3340 = vmatprep.subr.bf16.mxu0 %v1551
  %3341 = vmatpush1.bf16.msra.mxu0 %v1550
  %3342 = vmatprep.subr.bf16.mxu0 %v1559
  %3343 = vmatpush1.bf16.msra.mxu0 %v1558
  %3344 = vmatprep.subr.bf16.mxu0 %v1567
  %3345 = vmatpush1.bf16.msra.mxu0 %v1566
  %3346 = vmatprep.subr.bf16.mxu0 %v1575
  %3347 = vmatpush1.bf16.msra.mxu0 %v1574
  %3348 = vmatprep.subr.bf16.mxu0 %v1583
  %3349 = vmatpush1.bf16.msra.mxu0 %v1582
  %3350 = vmatprep.mubr.bf16.mxu0 %v3276
  %3351 = vmatmul.mubr.bf16.gmra.mrb[0].mxu0 %v3275
  %v3352 = vpop.f32.mrb[0].mxu0
  %v3353 = vadd.f32 0.0, %v3352
  %v3354 = vpop.f32.mrb[0].mxu0
  %v3355 = vadd.f32 0.0, %v3354
  %v3356 = vpop.f32.mrb[0].mxu0
  %v3357 = vpop.f32.mrb[0].mxu0
  %3358 = vdwg.mxu0
  %3359 = vmatprep.subr.bf16.mxu0 %v1465
  %3360 = vmatpush1.bf16.msra.mxu0 %v1464
  %3361 = vmatprep.subr.bf16.mxu0 %v1473
  %3362 = vmatpush1.bf16.msra.mxu0 %v1472
  %3363 = vmatprep.subr.bf16.mxu0 %v1481
  %3364 = vmatpush1.bf16.msra.mxu0 %v1480
  %3365 = vmatprep.subr.bf16.mxu0 %v1489
  %3366 = vmatpush1.bf16.msra.mxu0 %v1488
  %3367 = vmatprep.subr.bf16.mxu0 %v1497
  %3368 = vmatpush1.bf16.msra.mxu0 %v1496
  %3369 = vmatprep.subr.bf16.mxu0 %v1505
  %3370 = vmatpush1.bf16.msra.mxu0 %v1504
  %3371 = vmatprep.subr.bf16.mxu0 %v1513
  %3372 = vmatpush1.bf16.msra.mxu0 %v1512
  %3373 = vmatprep.subr.bf16.mxu0 %v1521
  %3374 = vmatpush1.bf16.msra.mxu0 %v1520
  %3375 = vmatprep.subr.bf16.mxu0 %v1529
  %3376 = vmatpush1.bf16.msra.mxu0 %v1528
  %3377 = vmatprep.subr.bf16.mxu0 %v1537
  %3378 = vmatpush1.bf16.msra.mxu0 %v1536
  %3379 = vmatprep.subr.bf16.mxu0 %v1545
  %3380 = vmatpush1.bf16.msra.mxu0 %v1544
  %3381 = vmatprep.subr.bf16.mxu0 %v1553
  %3382 = vmatpush1.bf16.msra.mxu0 %v1552
  %3383 = vmatprep.subr.bf16.mxu0 %v1561
  %3384 = vmatpush1.bf16.msra.mxu0 %v1560
  %3385 = vmatprep.subr.bf16.mxu0 %v1569
  %3386 = vmatpush1.bf16.msra.mxu0 %v1568
  %3387 = vmatprep.subr.bf16.mxu0 %v1577
  %3388 = vmatpush1.bf16.msra.mxu0 %v1576
  %3389 = vmatprep.subr.bf16.mxu0 %v1585
  %3390 = vmatpush1.bf16.msra.mxu0 %v1584
  %3391 = vmatprep.mubr.bf16.mxu0 %v3276
  %3392 = vmatmul.mubr.bf16.gmra.mrb[0].mxu0 %v3275
  %v3393 = vpop.f32.mrb[0].mxu0
  %v3394 = vadd.f32 0.0, %v3393
  %v3395 = vpop.f32.mrb[0].mxu0
  %v3396 = vadd.f32 0.0, %v3395
  %v3397 = vpop.f32.mrb[0].mxu0
  %v3398 = vpop.f32.mrb[0].mxu0
  %3399 = vdwg.mxu0
  %3400 = vmatprep.subr.bf16.mxu0 %v1467
  %3401 = vmatpush1.bf16.msra.mxu0 %v1466
  %3402 = vmatprep.subr.bf16.mxu0 %v1475
  %3403 = vmatpush1.bf16.msra.mxu0 %v1474
  %3404 = vmatprep.subr.bf16.mxu0 %v1483
  %3405 = vmatpush1.bf16.msra.mxu0 %v1482
  %3406 = vmatprep.subr.bf16.mxu0 %v1491
  %3407 = vmatpush1.bf16.msra.mxu0 %v1490
  %3408 = vmatprep.subr.bf16.mxu0 %v1499
  %3409 = vmatpush1.bf16.msra.mxu0 %v1498
  %3410 = vmatprep.subr.bf16.mxu0 %v1507
  %3411 = vmatpush1.bf16.msra.mxu0 %v1506
  %3412 = vmatprep.subr.bf16.mxu0 %v1515
  %3413 = vmatpush1.bf16.msra.mxu0 %v1514
  %3414 = vmatprep.subr.bf16.mxu0 %v1523
  %3415 = vmatpush1.bf16.msra.mxu0 %v1522
  %3416 = vmatprep.subr.bf16.mxu0 %v1531
  %3417 = vmatpush1.bf16.msra.mxu0 %v1530
  %3418 = vmatprep.subr.bf16.mxu0 %v1539
  %3419 = vmatpush1.bf16.msra.mxu0 %v1538
  %3420 = vmatprep.subr.bf16.mxu0 %v1547
  %3421 = vmatpush1.bf16.msra.mxu0 %v1546
  %3422 = vmatprep.subr.bf16.mxu0 %v1555
  %3423 = vmatpush1.bf16.msra.mxu0 %v1554
  %3424 = vmatprep.subr.bf16.mxu0 %v1563
  %3425 = vmatpush1.bf16.msra.mxu0 %v1562
  %3426 = vmatprep.subr.bf16.mxu0 %v1571
  %3427 = vmatpush1.bf16.msra.mxu0 %v1570
  %3428 = vmatprep.subr.bf16.mxu0 %v1579
  %3429 = vmatpush1.bf16.msra.mxu0 %v1578
  %3430 = vmatprep.subr.bf16.mxu0 %v1587
  %3431 = vmatpush1.bf16.msra.mxu0 %v1586
  %3432 = vmatprep.mubr.bf16.mxu0 %v3276
  %3433 = vmatmul.mubr.bf16.gmra.mrb[0].mxu0 %v3275
  %v3434 = vpop.f32.mrb[0].mxu0
  %v3435 = vadd.f32 0.0, %v3434
  %v3436 = vpop.f32.mrb[0].mxu0
  %v3437 = vadd.f32 0.0, %v3436
  %v3438 = vpop.f32.mrb[0].mxu0
  %v3439 = vpop.f32.mrb[0].mxu0
  %3440 = vdwg.mxu0
  %v3441 = vadd.f32 %v3267, %v3312
  %v3442 = vadd.f32 %v3268, %v3314
  %v3443 = vadd.f32 %v3269, %v3353
  %v3444 = vadd.f32 %v3270, %v3355
  %v3445 = vadd.f32 %v3271, %v3394
  %v3446 = vadd.f32 %v3272, %v3396
  %v3447 = vadd.f32 %v3273, %v3435
  %v3448 = vadd.f32 %v3274, %v3437
  %v3449 = vtanh.pop %v3441
  %v3450 = vtanh.pop %v3442
  %v3451 = vmul.f32 %v3449, 0.5
  %v3452 = vmul.f32 %v3450, 0.5
  %v3453 = vadd.f32 %v3451, 0.5
  %v3454 = vadd.f32 %v3452, 0.5
  %v3455 = vtanh.pop %v3443
  %v3456 = vtanh.pop %v3444
  %v3457 = vmul.f32 %v3455, 0.5
  %v3458 = vmul.f32 %v3456, 0.5
  %v3459 = vadd.f32 %v3457, 0.5
  %v3460 = vadd.f32 %v3458, 0.5
  %v3461 = vtanh.pop %v3445
  %v3462 = vtanh.pop %v3446
  %v3463 = vtanh.pop %v3447
  %v3464 = vtanh.pop %v3448
  %v3465 = vmul.f32 %v3463, 0.5
  %v3466 = vmul.f32 %v3464, 0.5
  %v3467 = vadd.f32 %v3465, 0.5
  %v3468 = vadd.f32 %v3466, 0.5
  %v3469 = vmul.f32 %v3459, %v3264
  %v3470 = vmul.f32 %v3460, %v3265
  %v3471 = vmul.f32 %v3453, %v3461
  %v3472 = vmul.f32 %v3454, %v3462
  %v3473 = vadd.f32 %v3469, %v3471
  %v3474 = vadd.f32 %v3470, %v3472
  %v3475 = vtanh.pop %v3473
  %v3476 = vtanh.pop %v3474
  %v3477 = vmul.f32 %v3467, %v3475
  %v3478 = vmul.f32 %v3468, %v3476
  %vm3479 = vcmp.gt.s32.totalorder %v939, 7
  %v3480 = vsel %vm3479, 1, 0
  %3481 = vset.pattern.permute.xlu0 0
  %3482 = vperm.xlu0 %3481, %v3480
  %v3483 = vpop.permute.xlu0 %3482
  %vm3484 = vcmp.eq.s32.totalorder %v3483, 1
  %v3485 = vsel %vm3484, %v3477, %v3262
  %v3486 = vsel %vm3484, %v3478, %v3263
  %v3487 = vsel %vm3484, %v3473, %v3264
  %v3488 = vsel %vm3484, %v3474, %v3265
  %s3489 = scalar_lea.vmem [#allocation2], 512
  %v3490 = vld [vmem:[%s3489] sm:$0xff]
  %v3491 = vld [vmem:[%s3489 + $0x8] sm:$0xff]
  %v3492 = vld [vmem:[%s3489 + $0x10] sm:$0xff]
  %v3493 = vld [vmem:[%s3489 + $0x18] sm:$0xff]
  %v3494 = vld [vmem:[%s3489 + $0x20] sm:$0xff]
  %v3495 = vld [vmem:[%s3489 + $0x28] sm:$0xff]
  %v3496 = vld [vmem:[%s3489 + $0x30] sm:$0xff]
  %v3497 = vld [vmem:[%s3489 + $0x38] sm:$0xff]
  %v3498 = vpack.c.bf16 %v3485, %v3485
  %v3499 = vpack.c.bf16 %v3486, %v3486
  %3500 = vmatprep.subr.bf16.mxu0 %v1461
  %3501 = vmatpush1.bf16.msra.mxu0 %v1460
  %3502 = vmatprep.subr.bf16.mxu0 %v1469
  %3503 = vmatpush1.bf16.msra.mxu0 %v1468
  %3504 = vmatprep.subr.bf16.mxu0 %v1477
  %3505 = vmatpush1.bf16.msra.mxu0 %v1476
  %3506 = vmatprep.subr.bf16.mxu0 %v1485
  %3507 = vmatpush1.bf16.msra.mxu0 %v1484
  %3508 = vmatprep.subr.bf16.mxu0 %v1493
  %3509 = vmatpush1.bf16.msra.mxu0 %v1492
  %3510 = vmatprep.subr.bf16.mxu0 %v1501
  %3511 = vmatpush1.bf16.msra.mxu0 %v1500
  %3512 = vmatprep.subr.bf16.mxu0 %v1509
  %3513 = vmatpush1.bf16.msra.mxu0 %v1508
  %3514 = vmatprep.subr.bf16.mxu0 %v1517
  %3515 = vmatpush1.bf16.msra.mxu0 %v1516
  %3516 = vmatprep.subr.bf16.mxu0 %v1525
  %3517 = vmatpush1.bf16.msra.mxu0 %v1524
  %3518 = vmatprep.subr.bf16.mxu0 %v1533
  %3519 = vmatpush1.bf16.msra.mxu0 %v1532
  %3520 = vmatprep.subr.bf16.mxu0 %v1541
  %3521 = vmatpush1.bf16.msra.mxu0 %v1540
  %3522 = vmatprep.subr.bf16.mxu0 %v1549
  %3523 = vmatpush1.bf16.msra.mxu0 %v1548
  %3524 = vmatprep.subr.bf16.mxu0 %v1557
  %3525 = vmatpush1.bf16.msra.mxu0 %v1556
  %3526 = vmatprep.subr.bf16.mxu0 %v1565
  %3527 = vmatpush1.bf16.msra.mxu0 %v1564
  %3528 = vmatprep.subr.bf16.mxu0 %v1573
  %3529 = vmatpush1.bf16.msra.mxu0 %v1572
  %3530 = vmatprep.subr.bf16.mxu0 %v1581
  %3531 = vmatpush1.bf16.msra.mxu0 %v1580
  %3532 = vmatprep.mubr.bf16.mxu0 %v3499
  %3533 = vmatmul.mubr.bf16.gmra.mrb[0].mxu0 %v3498
  %v3534 = vpop.f32.mrb[0].mxu0
  %v3535 = vadd.f32 0.0, %v3534
  %v3536 = vpop.f32.mrb[0].mxu0
  %v3537 = vadd.f32 0.0, %v3536
  %v3538 = vpop.f32.mrb[0].mxu0
  %v3539 = vpop.f32.mrb[0].mxu0
  %3540 = vdwg.mxu0
  %3541 = vmatprep.subr.bf16.mxu0 %v1463
  %3542 = vmatpush1.bf16.msra.mxu0 %v1462
  %3543 = vmatprep.subr.bf16.mxu0 %v1471
  %3544 = vmatpush1.bf16.msra.mxu0 %v1470
  %3545 = vmatprep.subr.bf16.mxu0 %v1479
  %3546 = vmatpush1.bf16.msra.mxu0 %v1478
  %3547 = vmatprep.subr.bf16.mxu0 %v1487
  %3548 = vmatpush1.bf16.msra.mxu0 %v1486
  %3549 = vmatprep.subr.bf16.mxu0 %v1495
  %3550 = vmatpush1.bf16.msra.mxu0 %v1494
  %3551 = vmatprep.subr.bf16.mxu0 %v1503
  %3552 = vmatpush1.bf16.msra.mxu0 %v1502
  %3553 = vmatprep.subr.bf16.mxu0 %v1511
  %3554 = vmatpush1.bf16.msra.mxu0 %v1510
  %3555 = vmatprep.subr.bf16.mxu0 %v1519
  %3556 = vmatpush1.bf16.msra.mxu0 %v1518
  %3557 = vmatprep.subr.bf16.mxu0 %v1527
  %3558 = vmatpush1.bf16.msra.mxu0 %v1526
  %3559 = vmatprep.subr.bf16.mxu0 %v1535
  %3560 = vmatpush1.bf16.msra.mxu0 %v1534
  %3561 = vmatprep.subr.bf16.mxu0 %v1543
  %3562 = vmatpush1.bf16.msra.mxu0 %v1542
  %3563 = vmatprep.subr.bf16.mxu0 %v1551
  %3564 = vmatpush1.bf16.msra.mxu0 %v1550
  %3565 = vmatprep.subr.bf16.mxu0 %v1559
  %3566 = vmatpush1.bf16.msra.mxu0 %v1558
  %3567 = vmatprep.subr.bf16.mxu0 %v1567
  %3568 = vmatpush1.bf16.msra.mxu0 %v1566
  %3569 = vmatprep.subr.bf16.mxu0 %v1575
  %3570 = vmatpush1.bf16.msra.mxu0 %v1574
  %3571 = vmatprep.subr.bf16.mxu0 %v1583
  %3572 = vmatpush1.bf16.msra.mxu0 %v1582
  %3573 = vmatprep.mubr.bf16.mxu0 %v3499
  %3574 = vmatmul.mubr.bf16.gmra.mrb[0].mxu0 %v3498
  %v3575 = vpop.f32.mrb[0].mxu0
  %v3576 = vadd.f32 0.0, %v3575
  %v3577 = vpop.f32.mrb[0].mxu0
  %v3578 = vadd.f32 0.0, %v3577
  %v3579 = vpop.f32.mrb[0].mxu0
  %v3580 = vpop.f32.mrb[0].mxu0
  %3581 = vdwg.mxu0
  %3582 = vmatprep.subr.bf16.mxu0 %v1465
  %3583 = vmatpush1.bf16.msra.mxu0 %v1464
  %3584 = vmatprep.subr.bf16.mxu0 %v1473
  %3585 = vmatpush1.bf16.msra.mxu0 %v1472
  %3586 = vmatprep.subr.bf16.mxu0 %v1481
  %3587 = vmatpush1.bf16.msra.mxu0 %v1480
  %3588 = vmatprep.subr.bf16.mxu0 %v1489
  %3589 = vmatpush1.bf16.msra.mxu0 %v1488
  %3590 = vmatprep.subr.bf16.mxu0 %v1497
  %3591 = vmatpush1.bf16.msra.mxu0 %v1496
  %3592 = vmatprep.subr.bf16.mxu0 %v1505
  %3593 = vmatpush1.bf16.msra.mxu0 %v1504
  %3594 = vmatprep.subr.bf16.mxu0 %v1513
  %3595 = vmatpush1.bf16.msra.mxu0 %v1512
  %3596 = vmatprep.subr.bf16.mxu0 %v1521
  %3597 = vmatpush1.bf16.msra.mxu0 %v1520
  %3598 = vmatprep.subr.bf16.mxu0 %v1529
  %3599 = vmatpush1.bf16.msra.mxu0 %v1528
  %3600 = vmatprep.subr.bf16.mxu0 %v1537
  %3601 = vmatpush1.bf16.msra.mxu0 %v1536
  %3602 = vmatprep.subr.bf16.mxu0 %v1545
  %3603 = vmatpush1.bf16.msra.mxu0 %v1544
  %3604 = vmatprep.subr.bf16.mxu0 %v1553
  %3605 = vmatpush1.bf16.msra.mxu0 %v1552
  %3606 = vmatprep.subr.bf16.mxu0 %v1561
  %3607 = vmatpush1.bf16.msra.mxu0 %v1560
  %3608 = vmatprep.subr.bf16.mxu0 %v1569
  %3609 = vmatpush1.bf16.msra.mxu0 %v1568
  %3610 = vmatprep.subr.bf16.mxu0 %v1577
  %3611 = vmatpush1.bf16.msra.mxu0 %v1576
  %3612 = vmatprep.subr.bf16.mxu0 %v1585
  %3613 = vmatpush1.bf16.msra.mxu0 %v1584
  %3614 = vmatprep.mubr.bf16.mxu0 %v3499
  %3615 = vmatmul.mubr.bf16.gmra.mrb[0].mxu0 %v3498
  %v3616 = vpop.f32.mrb[0].mxu0
  %v3617 = vadd.f32 0.0, %v3616
  %v3618 = vpop.f32.mrb[0].mxu0
  %v3619 = vadd.f32 0.0, %v3618
  %v3620 = vpop.f32.mrb[0].mxu0
  %v3621 = vpop.f32.mrb[0].mxu0
  %3622 = vdwg.mxu0
  %3623 = vmatprep.subr.bf16.mxu0 %v1467
  %3624 = vmatpush1.bf16.msra.mxu0 %v1466
  %3625 = vmatprep.subr.bf16.mxu0 %v1475
  %3626 = vmatpush1.bf16.msra.mxu0 %v1474
  %3627 = vmatprep.subr.bf16.mxu0 %v1483
  %3628 = vmatpush1.bf16.msra.mxu0 %v1482
  %3629 = vmatprep.subr.bf16.mxu0 %v1491
  %3630 = vmatpush1.bf16.msra.mxu0 %v1490
  %3631 = vmatprep.subr.bf16.mxu0 %v1499
  %3632 = vmatpush1.bf16.msra.mxu0 %v1498
  %3633 = vmatprep.subr.bf16.mxu0 %v1507
  %3634 = vmatpush1.bf16.msra.mxu0 %v1506
  %3635 = vmatprep.subr.bf16.mxu0 %v1515
  %3636 = vmatpush1.bf16.msra.mxu0 %v1514
  %3637 = vmatprep.subr.bf16.mxu0 %v1523
  %3638 = vmatpush1.bf16.msra.mxu0 %v1522
  %3639 = vmatprep.subr.bf16.mxu0 %v1531
  %3640 = vmatpush1.bf16.msra.mxu0 %v1530
  %3641 = vmatprep.subr.bf16.mxu0 %v1539
  %3642 = vmatpush1.bf16.msra.mxu0 %v1538
  %3643 = vmatprep.subr.bf16.mxu0 %v1547
  %3644 = vmatpush1.bf16.msra.mxu0 %v1546
  %3645 = vmatprep.subr.bf16.mxu0 %v1555
  %3646 = vmatpush1.bf16.msra.mxu0 %v1554
  %3647 = vmatprep.subr.bf16.mxu0 %v1563
  %3648 = vmatpush1.bf16.msra.mxu0 %v1562
  %3649 = vmatprep.subr.bf16.mxu0 %v1571
  %3650 = vmatpush1.bf16.msra.mxu0 %v1570
  %3651 = vmatprep.subr.bf16.mxu0 %v1579
  %3652 = vmatpush1.bf16.msra.mxu0 %v1578
  %3653 = vmatprep.subr.bf16.mxu0 %v1587
  %3654 = vmatpush1.bf16.msra.mxu0 %v1586
  %3655 = vmatprep.mubr.bf16.mxu0 %v3499
  %3656 = vmatmul.mubr.bf16.gmra.mrb[0].mxu0 %v3498
  %v3657 = vpop.f32.mrb[0].mxu0
  %v3658 = vadd.f32 0.0, %v3657
  %v3659 = vpop.f32.mrb[0].mxu0
  %v3660 = vadd.f32 0.0, %v3659
  %v3661 = vpop.f32.mrb[0].mxu0
  %v3662 = vpop.f32.mrb[0].mxu0
  %3663 = vdwg.mxu0
  %v3664 = vadd.f32 %v3490, %v3535
  %v3665 = vadd.f32 %v3491, %v3537
  %v3666 = vadd.f32 %v3492, %v3576
  %v3667 = vadd.f32 %v3493, %v3578
  %v3668 = vadd.f32 %v3494, %v3617
  %v3669 = vadd.f32 %v3495, %v3619
  %v3670 = vadd.f32 %v3496, %v3658
  %v3671 = vadd.f32 %v3497, %v3660
  %v3672 = vtanh.pop %v3664
  %v3673 = vtanh.pop %v3665
  %v3674 = vmul.f32 %v3672, 0.5
  %v3675 = vmul.f32 %v3673, 0.5
  %v3676 = vadd.f32 %v3674, 0.5
  %v3677 = vadd.f32 %v3675, 0.5
  %v3678 = vtanh.pop %v3666
  %v3679 = vtanh.pop %v3667
  %v3680 = vmul.f32 %v3678, 0.5
  %v3681 = vmul.f32 %v3679, 0.5
  %v3682 = vadd.f32 %v3680, 0.5
  %v3683 = vadd.f32 %v3681, 0.5
  %v3684 = vtanh.pop %v3668
  %v3685 = vtanh.pop %v3669
  %v3686 = vtanh.pop %v3670
  %v3687 = vtanh.pop %v3671
  %v3688 = vmul.f32 %v3686, 0.5
  %v3689 = vmul.f32 %v3687, 0.5
  %v3690 = vadd.f32 %v3688, 0.5
  %v3691 = vadd.f32 %v3689, 0.5
  %v3692 = vmul.f32 %v3682, %v3487
  %v3693 = vmul.f32 %v3683, %v3488
  %v3694 = vmul.f32 %v3676, %v3684
  %v3695 = vmul.f32 %v3677, %v3685
  %v3696 = vadd.f32 %v3692, %v3694
  %v3697 = vadd.f32 %v3693, %v3695
  %v3698 = vtanh.pop %v3696
  %v3699 = vtanh.pop %v3697
  %v3700 = vmul.f32 %v3690, %v3698
  %v3701 = vmul.f32 %v3691, %v3699
  %vm3702 = vcmp.gt.s32.totalorder %v939, 8
  %v3703 = vsel %vm3702, 1, 0
  %3704 = vset.pattern.permute.xlu0 0
  %3705 = vperm.xlu0 %3704, %v3703
  %v3706 = vpop.permute.xlu0 %3705
  %vm3707 = vcmp.eq.s32.totalorder %v3706, 1
  %v3708 = vsel %vm3707, %v3700, %v3485
  %v3709 = vsel %vm3707, %v3701, %v3486
  %v3710 = vsel %vm3707, %v3696, %v3487
  %v3711 = vsel %vm3707, %v3697, %v3488
  %s3712 = scalar_lea.vmem [#allocation2], 576
  %v3713 = vld [vmem:[%s3712] sm:$0xff]
  %v3714 = vld [vmem:[%s3712 + $0x8] sm:$0xff]
  %v3715 = vld [vmem:[%s3712 + $0x10] sm:$0xff]
  %v3716 = vld [vmem:[%s3712 + $0x18] sm:$0xff]
  %v3717 = vld [vmem:[%s3712 + $0x20] sm:$0xff]
  %v3718 = vld [vmem:[%s3712 + $0x28] sm:$0xff]
  %v3719 = vld [vmem:[%s3712 + $0x30] sm:$0xff]
  %v3720 = vld [vmem:[%s3712 + $0x38] sm:$0xff]
  %v3721 = vpack.c.bf16 %v3708, %v3708
  %v3722 = vpack.c.bf16 %v3709, %v3709
  %3723 = vmatprep.subr.bf16.mxu0 %v1461
  %3724 = vmatpush1.bf16.msra.mxu0 %v1460
  %3725 = vmatprep.subr.bf16.mxu0 %v1469
  %3726 = vmatpush1.bf16.msra.mxu0 %v1468
  %3727 = vmatprep.subr.bf16.mxu0 %v1477
  %3728 = vmatpush1.bf16.msra.mxu0 %v1476
  %3729 = vmatprep.subr.bf16.mxu0 %v1485
  %3730 = vmatpush1.bf16.msra.mxu0 %v1484
  %3731 = vmatprep.subr.bf16.mxu0 %v1493
  %3732 = vmatpush1.bf16.msra.mxu0 %v1492
  %3733 = vmatprep.subr.bf16.mxu0 %v1501
  %3734 = vmatpush1.bf16.msra.mxu0 %v1500
  %3735 = vmatprep.subr.bf16.mxu0 %v1509
  %3736 = vmatpush1.bf16.msra.mxu0 %v1508
  %3737 = vmatprep.subr.bf16.mxu0 %v1517
  %3738 = vmatpush1.bf16.msra.mxu0 %v1516
  %3739 = vmatprep.subr.bf16.mxu0 %v1525
  %3740 = vmatpush1.bf16.msra.mxu0 %v1524
  %3741 = vmatprep.subr.bf16.mxu0 %v1533
  %3742 = vmatpush1.bf16.msra.mxu0 %v1532
  %3743 = vmatprep.subr.bf16.mxu0 %v1541
  %3744 = vmatpush1.bf16.msra.mxu0 %v1540
  %3745 = vmatprep.subr.bf16.mxu0 %v1549
  %3746 = vmatpush1.bf16.msra.mxu0 %v1548
  %3747 = vmatprep.subr.bf16.mxu0 %v1557
  %3748 = vmatpush1.bf16.msra.mxu0 %v1556
  %3749 = vmatprep.subr.bf16.mxu0 %v1565
  %3750 = vmatpush1.bf16.msra.mxu0 %v1564
  %3751 = vmatprep.subr.bf16.mxu0 %v1573
  %3752 = vmatpush1.bf16.msra.mxu0 %v1572
  %3753 = vmatprep.subr.bf16.mxu0 %v1581
  %3754 = vmatpush1.bf16.msra.mxu0 %v1580
  %3755 = vmatprep.mubr.bf16.mxu0 %v3722
  %3756 = vmatmul.mubr.bf16.gmra.mrb[0].mxu0 %v3721
  %v3757 = vpop.f32.mrb[0].mxu0
  %v3758 = vadd.f32 0.0, %v3757
  %v3759 = vpop.f32.mrb[0].mxu0
  %v3760 = vadd.f32 0.0, %v3759
  %v3761 = vpop.f32.mrb[0].mxu0
  %v3762 = vpop.f32.mrb[0].mxu0
  %3763 = vdwg.mxu0
  %3764 = vmatprep.subr.bf16.mxu0 %v1463
  %3765 = vmatpush1.bf16.msra.mxu0 %v1462
  %3766 = vmatprep.subr.bf16.mxu0 %v1471
  %3767 = vmatpush1.bf16.msra.mxu0 %v1470
  %3768 = vmatprep.subr.bf16.mxu0 %v1479
  %3769 = vmatpush1.bf16.msra.mxu0 %v1478
  %3770 = vmatprep.subr.bf16.mxu0 %v1487
  %3771 = vmatpush1.bf16.msra.mxu0 %v1486
  %3772 = vmatprep.subr.bf16.mxu0 %v1495
  %3773 = vmatpush1.bf16.msra.mxu0 %v1494
  %3774 = vmatprep.subr.bf16.mxu0 %v1503
  %3775 = vmatpush1.bf16.msra.mxu0 %v1502
  %3776 = vmatprep.subr.bf16.mxu0 %v1511
  %3777 = vmatpush1.bf16.msra.mxu0 %v1510
  %3778 = vmatprep.subr.bf16.mxu0 %v1519
  %3779 = vmatpush1.bf16.msra.mxu0 %v1518
  %3780 = vmatprep.subr.bf16.mxu0 %v1527
  %3781 = vmatpush1.bf16.msra.mxu0 %v1526
  %3782 = vmatprep.subr.bf16.mxu0 %v1535
  %3783 = vmatpush1.bf16.msra.mxu0 %v1534
  %3784 = vmatprep.subr.bf16.mxu0 %v1543
  %3785 = vmatpush1.bf16.msra.mxu0 %v1542
  %3786 = vmatprep.subr.bf16.mxu0 %v1551
  %3787 = vmatpush1.bf16.msra.mxu0 %v1550
  %3788 = vmatprep.subr.bf16.mxu0 %v1559
  %3789 = vmatpush1.bf16.msra.mxu0 %v1558
  %3790 = vmatprep.subr.bf16.mxu0 %v1567
  %3791 = vmatpush1.bf16.msra.mxu0 %v1566
  %3792 = vmatprep.subr.bf16.mxu0 %v1575
  %3793 = vmatpush1.bf16.msra.mxu0 %v1574
  %3794 = vmatprep.subr.bf16.mxu0 %v1583
  %3795 = vmatpush1.bf16.msra.mxu0 %v1582
  %3796 = vmatprep.mubr.bf16.mxu0 %v3722
  %3797 = vmatmul.mubr.bf16.gmra.mrb[0].mxu0 %v3721
  %v3798 = vpop.f32.mrb[0].mxu0
  %v3799 = vadd.f32 0.0, %v3798
  %v3800 = vpop.f32.mrb[0].mxu0
  %v3801 = vadd.f32 0.0, %v3800
  %v3802 = vpop.f32.mrb[0].mxu0
  %v3803 = vpop.f32.mrb[0].mxu0
  %3804 = vdwg.mxu0
  %3805 = vmatprep.subr.bf16.mxu0 %v1465
  %3806 = vmatpush1.bf16.msra.mxu0 %v1464
  %3807 = vmatprep.subr.bf16.mxu0 %v1473
  %3808 = vmatpush1.bf16.msra.mxu0 %v1472
  %3809 = vmatprep.subr.bf16.mxu0 %v1481
  %3810 = vmatpush1.bf16.msra.mxu0 %v1480
  %3811 = vmatprep.subr.bf16.mxu0 %v1489
  %3812 = vmatpush1.bf16.msra.mxu0 %v1488
  %3813 = vmatprep.subr.bf16.mxu0 %v1497
  %3814 = vmatpush1.bf16.msra.mxu0 %v1496
  %3815 = vmatprep.subr.bf16.mxu0 %v1505
  %3816 = vmatpush1.bf16.msra.mxu0 %v1504
  %3817 = vmatprep.subr.bf16.mxu0 %v1513
  %3818 = vmatpush1.bf16.msra.mxu0 %v1512
  %3819 = vmatprep.subr.bf16.mxu0 %v1521
  %3820 = vmatpush1.bf16.msra.mxu0 %v1520
  %3821 = vmatprep.subr.bf16.mxu0 %v1529
  %3822 = vmatpush1.bf16.msra.mxu0 %v1528
  %3823 = vmatprep.subr.bf16.mxu0 %v1537
  %3824 = vmatpush1.bf16.msra.mxu0 %v1536
  %3825 = vmatprep.subr.bf16.mxu0 %v1545
  %3826 = vmatpush1.bf16.msra.mxu0 %v1544
  %3827 = vmatprep.subr.bf16.mxu0 %v1553
  %3828 = vmatpush1.bf16.msra.mxu0 %v1552
  %3829 = vmatprep.subr.bf16.mxu0 %v1561
  %3830 = vmatpush1.bf16.msra.mxu0 %v1560
  %3831 = vmatprep.subr.bf16.mxu0 %v1569
  %3832 = vmatpush1.bf16.msra.mxu0 %v1568
  %3833 = vmatprep.subr.bf16.mxu0 %v1577
  %3834 = vmatpush1.bf16.msra.mxu0 %v1576
  %3835 = vmatprep.subr.bf16.mxu0 %v1585
  %3836 = vmatpush1.bf16.msra.mxu0 %v1584
  %3837 = vmatprep.mubr.bf16.mxu0 %v3722
  %3838 = vmatmul.mubr.bf16.gmra.mrb[0].mxu0 %v3721
  %v3839 = vpop.f32.mrb[0].mxu0
  %v3840 = vadd.f32 0.0, %v3839
  %v3841 = vpop.f32.mrb[0].mxu0
  %v3842 = vadd.f32 0.0, %v3841
  %v3843 = vpop.f32.mrb[0].mxu0
  %v3844 = vpop.f32.mrb[0].mxu0
  %3845 = vdwg.mxu0
  %3846 = vmatprep.subr.bf16.mxu0 %v1467
  %3847 = vmatpush1.bf16.msra.mxu0 %v1466
  %3848 = vmatprep.subr.bf16.mxu0 %v1475
  %3849 = vmatpush1.bf16.msra.mxu0 %v1474
  %3850 = vmatprep.subr.bf16.mxu0 %v1483
  %3851 = vmatpush1.bf16.msra.mxu0 %v1482
  %3852 = vmatprep.subr.bf16.mxu0 %v1491
  %3853 = vmatpush1.bf16.msra.mxu0 %v1490
  %3854 = vmatprep.subr.bf16.mxu0 %v1499
  %3855 = vmatpush1.bf16.msra.mxu0 %v1498
  %3856 = vmatprep.subr.bf16.mxu0 %v1507
  %3857 = vmatpush1.bf16.msra.mxu0 %v1506
  %3858 = vmatprep.subr.bf16.mxu0 %v1515
  %3859 = vmatpush1.bf16.msra.mxu0 %v1514
  %3860 = vmatprep.subr.bf16.mxu0 %v1523
  %3861 = vmatpush1.bf16.msra.mxu0 %v1522
  %3862 = vmatprep.subr.bf16.mxu0 %v1531
  %3863 = vmatpush1.bf16.msra.mxu0 %v1530
  %3864 = vmatprep.subr.bf16.mxu0 %v1539
  %3865 = vmatpush1.bf16.msra.mxu0 %v1538
  %3866 = vmatprep.subr.bf16.mxu0 %v1547
  %3867 = vmatpush1.bf16.msra.mxu0 %v1546
  %3868 = vmatprep.subr.bf16.mxu0 %v1555
  %3869 = vmatpush1.bf16.msra.mxu0 %v1554
  %3870 = vmatprep.subr.bf16.mxu0 %v1563
  %3871 = vmatpush1.bf16.msra.mxu0 %v1562
  %3872 = vmatprep.subr.bf16.mxu0 %v1571
  %3873 = vmatpush1.bf16.msra.mxu0 %v1570
  %3874 = vmatprep.subr.bf16.mxu0 %v1579
  %3875 = vmatpush1.bf16.msra.mxu0 %v1578
  %3876 = vmatprep.subr.bf16.mxu0 %v1587
  %3877 = vmatpush1.bf16.msra.mxu0 %v1586
  %3878 = vmatprep.mubr.bf16.mxu0 %v3722
  %3879 = vmatmul.mubr.bf16.gmra.mrb[0].mxu0 %v3721
  %v3880 = vpop.f32.mrb[0].mxu0
  %v3881 = vadd.f32 0.0, %v3880
  %v3882 = vpop.f32.mrb[0].mxu0
  %v3883 = vadd.f32 0.0, %v3882
  %v3884 = vpop.f32.mrb[0].mxu0
  %v3885 = vpop.f32.mrb[0].mxu0
  %3886 = vdwg.mxu0
  %v3887 = vadd.f32 %v3713, %v3758
  %v3888 = vadd.f32 %v3714, %v3760
  %v3889 = vadd.f32 %v3715, %v3799
  %v3890 = vadd.f32 %v3716, %v3801
  %v3891 = vadd.f32 %v3717, %v3840
  %v3892 = vadd.f32 %v3718, %v3842
  %v3893 = vadd.f32 %v3719, %v3881
  %v3894 = vadd.f32 %v3720, %v3883
  %v3895 = vtanh.pop %v3887
  %v3896 = vtanh.pop %v3888
  %v3897 = vmul.f32 %v3895, 0.5
  %v3898 = vmul.f32 %v3896, 0.5
  %v3899 = vadd.f32 %v3897, 0.5
  %v3900 = vadd.f32 %v3898, 0.5
  %v3901 = vtanh.pop %v3889
  %v3902 = vtanh.pop %v3890
  %v3903 = vmul.f32 %v3901, 0.5
  %v3904 = vmul.f32 %v3902, 0.5
  %v3905 = vadd.f32 %v3903, 0.5
  %v3906 = vadd.f32 %v3904, 0.5
  %v3907 = vtanh.pop %v3891
  %v3908 = vtanh.pop %v3892
  %v3909 = vtanh.pop %v3893
  %v3910 = vtanh.pop %v3894
  %v3911 = vmul.f32 %v3909, 0.5
  %v3912 = vmul.f32 %v3910, 0.5
  %v3913 = vadd.f32 %v3911, 0.5
  %v3914 = vadd.f32 %v3912, 0.5
  %v3915 = vmul.f32 %v3905, %v3710
  %v3916 = vmul.f32 %v3906, %v3711
  %v3917 = vmul.f32 %v3899, %v3907
  %v3918 = vmul.f32 %v3900, %v3908
  %v3919 = vadd.f32 %v3915, %v3917
  %v3920 = vadd.f32 %v3916, %v3918
  %v3921 = vtanh.pop %v3919
  %v3922 = vtanh.pop %v3920
  %v3923 = vmul.f32 %v3913, %v3921
  %v3924 = vmul.f32 %v3914, %v3922
  %vm3925 = vcmp.gt.s32.totalorder %v939, 9
  %v3926 = vsel %vm3925, 1, 0
  %3927 = vset.pattern.permute.xlu0 0
  %3928 = vperm.xlu0 %3927, %v3926
  %v3929 = vpop.permute.xlu0 %3928
  %vm3930 = vcmp.eq.s32.totalorder %v3929, 1
  %v3931 = vsel %vm3930, %v3923, %v3708
  %v3932 = vsel %vm3930, %v3924, %v3709
  %v3933 = vsel %vm3930, %v3919, %v3710
  %v3934 = vsel %vm3930, %v3920, %v3711
  %s3935 = scalar_lea.vmem [#allocation2], 640
  %v3936 = vld [vmem:[%s3935] sm:$0xff]
  %v3937 = vld [vmem:[%s3935 + $0x8] sm:$0xff]
  %v3938 = vld [vmem:[%s3935 + $0x10] sm:$0xff]
  %v3939 = vld [vmem:[%s3935 + $0x18] sm:$0xff]
  %v3940 = vld [vmem:[%s3935 + $0x20] sm:$0xff]
  %v3941 = vld [vmem:[%s3935 + $0x28] sm:$0xff]
  %v3942 = vld [vmem:[%s3935 + $0x30] sm:$0xff]
  %v3943 = vld [vmem:[%s3935 + $0x38] sm:$0xff]
  %v3944 = vpack.c.bf16 %v3931, %v3931
  %v3945 = vpack.c.bf16 %v3932, %v3932
  %3946 = vmatprep.subr.bf16.mxu0 %v1461
  %3947 = vmatpush1.bf16.msra.mxu0 %v1460
  %3948 = vmatprep.subr.bf16.mxu0 %v1469
  %3949 = vmatpush1.bf16.msra.mxu0 %v1468
  %3950 = vmatprep.subr.bf16.mxu0 %v1477
  %3951 = vmatpush1.bf16.msra.mxu0 %v1476
  %3952 = vmatprep.subr.bf16.mxu0 %v1485
  %3953 = vmatpush1.bf16.msra.mxu0 %v1484
  %3954 = vmatprep.subr.bf16.mxu0 %v1493
  %3955 = vmatpush1.bf16.msra.mxu0 %v1492
  %3956 = vmatprep.subr.bf16.mxu0 %v1501
  %3957 = vmatpush1.bf16.msra.mxu0 %v1500
  %3958 = vmatprep.subr.bf16.mxu0 %v1509
  %3959 = vmatpush1.bf16.msra.mxu0 %v1508
  %3960 = vmatprep.subr.bf16.mxu0 %v1517
  %3961 = vmatpush1.bf16.msra.mxu0 %v1516
  %3962 = vmatprep.subr.bf16.mxu0 %v1525
  %3963 = vmatpush1.bf16.msra.mxu0 %v1524
  %3964 = vmatprep.subr.bf16.mxu0 %v1533
  %3965 = vmatpush1.bf16.msra.mxu0 %v1532
  %3966 = vmatprep.subr.bf16.mxu0 %v1541
  %3967 = vmatpush1.bf16.msra.mxu0 %v1540
  %3968 = vmatprep.subr.bf16.mxu0 %v1549
  %3969 = vmatpush1.bf16.msra.mxu0 %v1548
  %3970 = vmatprep.subr.bf16.mxu0 %v1557
  %3971 = vmatpush1.bf16.msra.mxu0 %v1556
  %3972 = vmatprep.subr.bf16.mxu0 %v1565
  %3973 = vmatpush1.bf16.msra.mxu0 %v1564
  %3974 = vmatprep.subr.bf16.mxu0 %v1573
  %3975 = vmatpush1.bf16.msra.mxu0 %v1572
  %3976 = vmatprep.subr.bf16.mxu0 %v1581
  %3977 = vmatpush1.bf16.msra.mxu0 %v1580
  %3978 = vmatprep.mubr.bf16.mxu0 %v3945
  %3979 = vmatmul.mubr.bf16.gmra.mrb[0].mxu0 %v3944
  %v3980 = vpop.f32.mrb[0].mxu0
  %v3981 = vadd.f32 0.0, %v3980
  %v3982 = vpop.f32.mrb[0].mxu0
  %v3983 = vadd.f32 0.0, %v3982
  %v3984 = vpop.f32.mrb[0].mxu0
  %v3985 = vpop.f32.mrb[0].mxu0
  %3986 = vdwg.mxu0
  %3987 = vmatprep.subr.bf16.mxu0 %v1463
  %3988 = vmatpush1.bf16.msra.mxu0 %v1462
  %3989 = vmatprep.subr.bf16.mxu0 %v1471
  %3990 = vmatpush1.bf16.msra.mxu0 %v1470
  %3991 = vmatprep.subr.bf16.mxu0 %v1479
  %3992 = vmatpush1.bf16.msra.mxu0 %v1478
  %3993 = vmatprep.subr.bf16.mxu0 %v1487
  %3994 = vmatpush1.bf16.msra.mxu0 %v1486
  %3995 = vmatprep.subr.bf16.mxu0 %v1495
  %3996 = vmatpush1.bf16.msra.mxu0 %v1494
  %3997 = vmatprep.subr.bf16.mxu0 %v1503
  %3998 = vmatpush1.bf16.msra.mxu0 %v1502
  %3999 = vmatprep.subr.bf16.mxu0 %v1511
  %4000 = vmatpush1.bf16.msra.mxu0 %v1510
  %4001 = vmatprep.subr.bf16.mxu0 %v1519
  %4002 = vmatpush1.bf16.msra.mxu0 %v1518
  %4003 = vmatprep.subr.bf16.mxu0 %v1527
  %4004 = vmatpush1.bf16.msra.mxu0 %v1526
  %4005 = vmatprep.subr.bf16.mxu0 %v1535
  %4006 = vmatpush1.bf16.msra.mxu0 %v1534
  %4007 = vmatprep.subr.bf16.mxu0 %v1543
  %4008 = vmatpush1.bf16.msra.mxu0 %v1542
  %4009 = vmatprep.subr.bf16.mxu0 %v1551
  %4010 = vmatpush1.bf16.msra.mxu0 %v1550
  %4011 = vmatprep.subr.bf16.mxu0 %v1559
  %4012 = vmatpush1.bf16.msra.mxu0 %v1558
  %4013 = vmatprep.subr.bf16.mxu0 %v1567
  %4014 = vmatpush1.bf16.msra.mxu0 %v1566
  %4015 = vmatprep.subr.bf16.mxu0 %v1575
  %4016 = vmatpush1.bf16.msra.mxu0 %v1574
  %4017 = vmatprep.subr.bf16.mxu0 %v1583
  %4018 = vmatpush1.bf16.msra.mxu0 %v1582
  %4019 = vmatprep.mubr.bf16.mxu0 %v3945
  %4020 = vmatmul.mubr.bf16.gmra.mrb[0].mxu0 %v3944
  %v4021 = vpop.f32.mrb[0].mxu0
  %v4022 = vadd.f32 0.0, %v4021
  %v4023 = vpop.f32.mrb[0].mxu0
  %v4024 = vadd.f32 0.0, %v4023
  %v4025 = vpop.f32.mrb[0].mxu0
  %v4026 = vpop.f32.mrb[0].mxu0
  %4027 = vdwg.mxu0
  %4028 = vmatprep.subr.bf16.mxu0 %v1465
  %4029 = vmatpush1.bf16.msra.mxu0 %v1464
  %4030 = vmatprep.subr.bf16.mxu0 %v1473
  %4031 = vmatpush1.bf16.msra.mxu0 %v1472
  %4032 = vmatprep.subr.bf16.mxu0 %v1481
  %4033 = vmatpush1.bf16.msra.mxu0 %v1480
  %4034 = vmatprep.subr.bf16.mxu0 %v1489
  %4035 = vmatpush1.bf16.msra.mxu0 %v1488
  %4036 = vmatprep.subr.bf16.mxu0 %v1497
  %4037 = vmatpush1.bf16.msra.mxu0 %v1496
  %4038 = vmatprep.subr.bf16.mxu0 %v1505
  %4039 = vmatpush1.bf16.msra.mxu0 %v1504
  %4040 = vmatprep.subr.bf16.mxu0 %v1513
  %4041 = vmatpush1.bf16.msra.mxu0 %v1512
  %4042 = vmatprep.subr.bf16.mxu0 %v1521
  %4043 = vmatpush1.bf16.msra.mxu0 %v1520
  %4044 = vmatprep.subr.bf16.mxu0 %v1529
  %4045 = vmatpush1.bf16.msra.mxu0 %v1528
  %4046 = vmatprep.subr.bf16.mxu0 %v1537
  %4047 = vmatpush1.bf16.msra.mxu0 %v1536
  %4048 = vmatprep.subr.bf16.mxu0 %v1545
  %4049 = vmatpush1.bf16.msra.mxu0 %v1544
  %4050 = vmatprep.subr.bf16.mxu0 %v1553
  %4051 = vmatpush1.bf16.msra.mxu0 %v1552
  %4052 = vmatprep.subr.bf16.mxu0 %v1561
  %4053 = vmatpush1.bf16.msra.mxu0 %v1560
  %4054 = vmatprep.subr.bf16.mxu0 %v1569
  %4055 = vmatpush1.bf16.msra.mxu0 %v1568
  %4056 = vmatprep.subr.bf16.mxu0 %v1577
  %4057 = vmatpush1.bf16.msra.mxu0 %v1576
  %4058 = vmatprep.subr.bf16.mxu0 %v1585
  %4059 = vmatpush1.bf16.msra.mxu0 %v1584
  %4060 = vmatprep.mubr.bf16.mxu0 %v3945
  %4061 = vmatmul.mubr.bf16.gmra.mrb[0].mxu0 %v3944
  %v4062 = vpop.f32.mrb[0].mxu0
  %v4063 = vadd.f32 0.0, %v4062
  %v4064 = vpop.f32.mrb[0].mxu0
  %v4065 = vadd.f32 0.0, %v4064
  %v4066 = vpop.f32.mrb[0].mxu0
  %v4067 = vpop.f32.mrb[0].mxu0
  %4068 = vdwg.mxu0
  %4069 = vmatprep.subr.bf16.mxu0 %v1467
  %4070 = vmatpush1.bf16.msra.mxu0 %v1466
  %4071 = vmatprep.subr.bf16.mxu0 %v1475
  %4072 = vmatpush1.bf16.msra.mxu0 %v1474
  %4073 = vmatprep.subr.bf16.mxu0 %v1483
  %4074 = vmatpush1.bf16.msra.mxu0 %v1482
  %4075 = vmatprep.subr.bf16.mxu0 %v1491
  %4076 = vmatpush1.bf16.msra.mxu0 %v1490
  %4077 = vmatprep.subr.bf16.mxu0 %v1499
  %4078 = vmatpush1.bf16.msra.mxu0 %v1498
  %4079 = vmatprep.subr.bf16.mxu0 %v1507
  %4080 = vmatpush1.bf16.msra.mxu0 %v1506
  %4081 = vmatprep.subr.bf16.mxu0 %v1515
  %4082 = vmatpush1.bf16.msra.mxu0 %v1514
  %4083 = vmatprep.subr.bf16.mxu0 %v1523
  %4084 = vmatpush1.bf16.msra.mxu0 %v1522
  %4085 = vmatprep.subr.bf16.mxu0 %v1531
  %4086 = vmatpush1.bf16.msra.mxu0 %v1530
  %4087 = vmatprep.subr.bf16.mxu0 %v1539
  %4088 = vmatpush1.bf16.msra.mxu0 %v1538
  %4089 = vmatprep.subr.bf16.mxu0 %v1547
  %4090 = vmatpush1.bf16.msra.mxu0 %v1546
  %4091 = vmatprep.subr.bf16.mxu0 %v1555
  %4092 = vmatpush1.bf16.msra.mxu0 %v1554
  %4093 = vmatprep.subr.bf16.mxu0 %v1563
  %4094 = vmatpush1.bf16.msra.mxu0 %v1562
  %4095 = vmatprep.subr.bf16.mxu0 %v1571
  %4096 = vmatpush1.bf16.msra.mxu0 %v1570
  %4097 = vmatprep.subr.bf16.mxu0 %v1579
  %4098 = vmatpush1.bf16.msra.mxu0 %v1578
  %4099 = vmatprep.subr.bf16.mxu0 %v1587
  %4100 = vmatpush1.bf16.msra.mxu0 %v1586
  %4101 = vmatprep.mubr.bf16.mxu0 %v3945
  %4102 = vmatmul.mubr.bf16.gmra.mrb[0].mxu0 %v3944
  %v4103 = vpop.f32.mrb[0].mxu0
  %v4104 = vadd.f32 0.0, %v4103
  %v4105 = vpop.f32.mrb[0].mxu0
  %v4106 = vadd.f32 0.0, %v4105
  %v4107 = vpop.f32.mrb[0].mxu0
  %v4108 = vpop.f32.mrb[0].mxu0
  %4109 = vdwg.mxu0
  %v4110 = vadd.f32 %v3936, %v3981
  %v4111 = vadd.f32 %v3937, %v3983
  %v4112 = vadd.f32 %v3938, %v4022
  %v4113 = vadd.f32 %v3939, %v4024
  %v4114 = vadd.f32 %v3940, %v4063
  %v4115 = vadd.f32 %v3941, %v4065
  %v4116 = vadd.f32 %v3942, %v4104
  %v4117 = vadd.f32 %v3943, %v4106
  %v4118 = vtanh.pop %v4110
  %v4119 = vtanh.pop %v4111
  %v4120 = vmul.f32 %v4118, 0.5
  %v4121 = vmul.f32 %v4119, 0.5
  %v4122 = vadd.f32 %v4120, 0.5
  %v4123 = vadd.f32 %v4121, 0.5
  %v4124 = vtanh.pop %v4112
  %v4125 = vtanh.pop %v4113
  %v4126 = vmul.f32 %v4124, 0.5
  %v4127 = vmul.f32 %v4125, 0.5
  %v4128 = vadd.f32 %v4126, 0.5
  %v4129 = vadd.f32 %v4127, 0.5
  %v4130 = vtanh.pop %v4114
  %v4131 = vtanh.pop %v4115
  %v4132 = vtanh.pop %v4116
  %v4133 = vtanh.pop %v4117
  %v4134 = vmul.f32 %v4132, 0.5
  %v4135 = vmul.f32 %v4133, 0.5
  %v4136 = vadd.f32 %v4134, 0.5
  %v4137 = vadd.f32 %v4135, 0.5
  %v4138 = vmul.f32 %v4128, %v3933
  %v4139 = vmul.f32 %v4129, %v3934
  %v4140 = vmul.f32 %v4122, %v4130
  %v4141 = vmul.f32 %v4123, %v4131
  %v4142 = vadd.f32 %v4138, %v4140
  %v4143 = vadd.f32 %v4139, %v4141
  %v4144 = vtanh.pop %v4142
  %v4145 = vtanh.pop %v4143
  %v4146 = vmul.f32 %v4136, %v4144
  %v4147 = vmul.f32 %v4137, %v4145
  %vm4148 = vcmp.gt.s32.totalorder %v939, 10
  %v4149 = vsel %vm4148, 1, 0
  %4150 = vset.pattern.permute.xlu0 0
  %4151 = vperm.xlu0 %4150, %v4149
  %v4152 = vpop.permute.xlu0 %4151
  %vm4153 = vcmp.eq.s32.totalorder %v4152, 1
  %v4154 = vsel %vm4153, %v4146, %v3931
  %v4155 = vsel %vm4153, %v4147, %v3932
  %v4156 = vsel %vm4153, %v4142, %v3933
  %v4157 = vsel %vm4153, %v4143, %v3934
  %s4158 = scalar_lea.vmem [#allocation2], 704
  %v4159 = vld [vmem:[%s4158] sm:$0xff]
  %v4160 = vld [vmem:[%s4158 + $0x8] sm:$0xff]
  %v4161 = vld [vmem:[%s4158 + $0x10] sm:$0xff]
  %v4162 = vld [vmem:[%s4158 + $0x18] sm:$0xff]
  %v4163 = vld [vmem:[%s4158 + $0x20] sm:$0xff]
  %v4164 = vld [vmem:[%s4158 + $0x28] sm:$0xff]
  %v4165 = vld [vmem:[%s4158 + $0x30] sm:$0xff]
  %v4166 = vld [vmem:[%s4158 + $0x38] sm:$0xff]
  %v4167 = vpack.c.bf16 %v4154, %v4154
  %v4168 = vpack.c.bf16 %v4155, %v4155
  %4169 = vmatprep.subr.bf16.mxu0 %v1461
  %4170 = vmatpush1.bf16.msra.mxu0 %v1460
  %4171 = vmatprep.subr.bf16.mxu0 %v1469
  %4172 = vmatpush1.bf16.msra.mxu0 %v1468
  %4173 = vmatprep.subr.bf16.mxu0 %v1477
  %4174 = vmatpush1.bf16.msra.mxu0 %v1476
  %4175 = vmatprep.subr.bf16.mxu0 %v1485
  %4176 = vmatpush1.bf16.msra.mxu0 %v1484
  %4177 = vmatprep.subr.bf16.mxu0 %v1493
  %4178 = vmatpush1.bf16.msra.mxu0 %v1492
  %4179 = vmatprep.subr.bf16.mxu0 %v1501
  %4180 = vmatpush1.bf16.msra.mxu0 %v1500
  %4181 = vmatprep.subr.bf16.mxu0 %v1509
  %4182 = vmatpush1.bf16.msra.mxu0 %v1508
  %4183 = vmatprep.subr.bf16.mxu0 %v1517
  %4184 = vmatpush1.bf16.msra.mxu0 %v1516
  %4185 = vmatprep.subr.bf16.mxu0 %v1525
  %4186 = vmatpush1.bf16.msra.mxu0 %v1524
  %4187 = vmatprep.subr.bf16.mxu0 %v1533
  %4188 = vmatpush1.bf16.msra.mxu0 %v1532
  %4189 = vmatprep.subr.bf16.mxu0 %v1541
  %4190 = vmatpush1.bf16.msra.mxu0 %v1540
  %4191 = vmatprep.subr.bf16.mxu0 %v1549
  %4192 = vmatpush1.bf16.msra.mxu0 %v1548
  %4193 = vmatprep.subr.bf16.mxu0 %v1557
  %4194 = vmatpush1.bf16.msra.mxu0 %v1556
  %4195 = vmatprep.subr.bf16.mxu0 %v1565
  %4196 = vmatpush1.bf16.msra.mxu0 %v1564
  %4197 = vmatprep.subr.bf16.mxu0 %v1573
  %4198 = vmatpush1.bf16.msra.mxu0 %v1572
  %4199 = vmatprep.subr.bf16.mxu0 %v1581
  %4200 = vmatpush1.bf16.msra.mxu0 %v1580
  %4201 = vmatprep.mubr.bf16.mxu0 %v4168
  %4202 = vmatmul.mubr.bf16.gmra.mrb[0].mxu0 %v4167
  %v4203 = vpop.f32.mrb[0].mxu0
  %v4204 = vadd.f32 0.0, %v4203
  %v4205 = vpop.f32.mrb[0].mxu0
  %v4206 = vadd.f32 0.0, %v4205
  %v4207 = vpop.f32.mrb[0].mxu0
  %v4208 = vpop.f32.mrb[0].mxu0
  %4209 = vdwg.mxu0
  %4210 = vmatprep.subr.bf16.mxu0 %v1463
  %4211 = vmatpush1.bf16.msra.mxu0 %v1462
  %4212 = vmatprep.subr.bf16.mxu0 %v1471
  %4213 = vmatpush1.bf16.msra.mxu0 %v1470
  %4214 = vmatprep.subr.bf16.mxu0 %v1479
  %4215 = vmatpush1.bf16.msra.mxu0 %v1478
  %4216 = vmatprep.subr.bf16.mxu0 %v1487
  %4217 = vmatpush1.bf16.msra.mxu0 %v1486
  %4218 = vmatprep.subr.bf16.mxu0 %v1495
  %4219 = vmatpush1.bf16.msra.mxu0 %v1494
  %4220 = vmatprep.subr.bf16.mxu0 %v1503
  %4221 = vmatpush1.bf16.msra.mxu0 %v1502
  %4222 = vmatprep.subr.bf16.mxu0 %v1511
  %4223 = vmatpush1.bf16.msra.mxu0 %v1510
  %4224 = vmatprep.subr.bf16.mxu0 %v1519
  %4225 = vmatpush1.bf16.msra.mxu0 %v1518
  %4226 = vmatprep.subr.bf16.mxu0 %v1527
  %4227 = vmatpush1.bf16.msra.mxu0 %v1526
  %4228 = vmatprep.subr.bf16.mxu0 %v1535
  %4229 = vmatpush1.bf16.msra.mxu0 %v1534
  %4230 = vmatprep.subr.bf16.mxu0 %v1543
  %4231 = vmatpush1.bf16.msra.mxu0 %v1542
  %4232 = vmatprep.subr.bf16.mxu0 %v1551
  %4233 = vmatpush1.bf16.msra.mxu0 %v1550
  %4234 = vmatprep.subr.bf16.mxu0 %v1559
  %4235 = vmatpush1.bf16.msra.mxu0 %v1558
  %4236 = vmatprep.subr.bf16.mxu0 %v1567
  %4237 = vmatpush1.bf16.msra.mxu0 %v1566
  %4238 = vmatprep.subr.bf16.mxu0 %v1575
  %4239 = vmatpush1.bf16.msra.mxu0 %v1574
  %4240 = vmatprep.subr.bf16.mxu0 %v1583
  %4241 = vmatpush1.bf16.msra.mxu0 %v1582
  %4242 = vmatprep.mubr.bf16.mxu0 %v4168
  %4243 = vmatmul.mubr.bf16.gmra.mrb[0].mxu0 %v4167
  %v4244 = vpop.f32.mrb[0].mxu0
  %v4245 = vadd.f32 0.0, %v4244
  %v4246 = vpop.f32.mrb[0].mxu0
  %v4247 = vadd.f32 0.0, %v4246
  %v4248 = vpop.f32.mrb[0].mxu0
  %v4249 = vpop.f32.mrb[0].mxu0
  %4250 = vdwg.mxu0
  %4251 = vmatprep.subr.bf16.mxu0 %v1465
  %4252 = vmatpush1.bf16.msra.mxu0 %v1464
  %4253 = vmatprep.subr.bf16.mxu0 %v1473
  %4254 = vmatpush1.bf16.msra.mxu0 %v1472
  %4255 = vmatprep.subr.bf16.mxu0 %v1481
  %4256 = vmatpush1.bf16.msra.mxu0 %v1480
  %4257 = vmatprep.subr.bf16.mxu0 %v1489
  %4258 = vmatpush1.bf16.msra.mxu0 %v1488
  %4259 = vmatprep.subr.bf16.mxu0 %v1497
  %4260 = vmatpush1.bf16.msra.mxu0 %v1496
  %4261 = vmatprep.subr.bf16.mxu0 %v1505
  %4262 = vmatpush1.bf16.msra.mxu0 %v1504
  %4263 = vmatprep.subr.bf16.mxu0 %v1513
  %4264 = vmatpush1.bf16.msra.mxu0 %v1512
  %4265 = vmatprep.subr.bf16.mxu0 %v1521
  %4266 = vmatpush1.bf16.msra.mxu0 %v1520
  %4267 = vmatprep.subr.bf16.mxu0 %v1529
  %4268 = vmatpush1.bf16.msra.mxu0 %v1528
  %4269 = vmatprep.subr.bf16.mxu0 %v1537
  %4270 = vmatpush1.bf16.msra.mxu0 %v1536
  %4271 = vmatprep.subr.bf16.mxu0 %v1545
  %4272 = vmatpush1.bf16.msra.mxu0 %v1544
  %4273 = vmatprep.subr.bf16.mxu0 %v1553
  %4274 = vmatpush1.bf16.msra.mxu0 %v1552
  %4275 = vmatprep.subr.bf16.mxu0 %v1561
  %4276 = vmatpush1.bf16.msra.mxu0 %v1560
  %4277 = vmatprep.subr.bf16.mxu0 %v1569
  %4278 = vmatpush1.bf16.msra.mxu0 %v1568
  %4279 = vmatprep.subr.bf16.mxu0 %v1577
  %4280 = vmatpush1.bf16.msra.mxu0 %v1576
  %4281 = vmatprep.subr.bf16.mxu0 %v1585
  %4282 = vmatpush1.bf16.msra.mxu0 %v1584
  %4283 = vmatprep.mubr.bf16.mxu0 %v4168
  %4284 = vmatmul.mubr.bf16.gmra.mrb[0].mxu0 %v4167
  %v4285 = vpop.f32.mrb[0].mxu0
  %v4286 = vadd.f32 0.0, %v4285
  %v4287 = vpop.f32.mrb[0].mxu0
  %v4288 = vadd.f32 0.0, %v4287
  %v4289 = vpop.f32.mrb[0].mxu0
  %v4290 = vpop.f32.mrb[0].mxu0
  %4291 = vdwg.mxu0
  %4292 = vmatprep.subr.bf16.mxu0 %v1467
  %4293 = vmatpush1.bf16.msra.mxu0 %v1466
  %4294 = vmatprep.subr.bf16.mxu0 %v1475
  %4295 = vmatpush1.bf16.msra.mxu0 %v1474
  %4296 = vmatprep.subr.bf16.mxu0 %v1483
  %4297 = vmatpush1.bf16.msra.mxu0 %v1482
  %4298 = vmatprep.subr.bf16.mxu0 %v1491
  %4299 = vmatpush1.bf16.msra.mxu0 %v1490
  %4300 = vmatprep.subr.bf16.mxu0 %v1499
  %4301 = vmatpush1.bf16.msra.mxu0 %v1498
  %4302 = vmatprep.subr.bf16.mxu0 %v1507
  %4303 = vmatpush1.bf16.msra.mxu0 %v1506
  %4304 = vmatprep.subr.bf16.mxu0 %v1515
  %4305 = vmatpush1.bf16.msra.mxu0 %v1514
  %4306 = vmatprep.subr.bf16.mxu0 %v1523
  %4307 = vmatpush1.bf16.msra.mxu0 %v1522
  %4308 = vmatprep.subr.bf16.mxu0 %v1531
  %4309 = vmatpush1.bf16.msra.mxu0 %v1530
  %4310 = vmatprep.subr.bf16.mxu0 %v1539
  %4311 = vmatpush1.bf16.msra.mxu0 %v1538
  %4312 = vmatprep.subr.bf16.mxu0 %v1547
  %4313 = vmatpush1.bf16.msra.mxu0 %v1546
  %4314 = vmatprep.subr.bf16.mxu0 %v1555
  %4315 = vmatpush1.bf16.msra.mxu0 %v1554
  %4316 = vmatprep.subr.bf16.mxu0 %v1563
  %4317 = vmatpush1.bf16.msra.mxu0 %v1562
  %4318 = vmatprep.subr.bf16.mxu0 %v1571
  %4319 = vmatpush1.bf16.msra.mxu0 %v1570
  %4320 = vmatprep.subr.bf16.mxu0 %v1579
  %4321 = vmatpush1.bf16.msra.mxu0 %v1578
  %4322 = vmatprep.subr.bf16.mxu0 %v1587
  %4323 = vmatpush1.bf16.msra.mxu0 %v1586
  %4324 = vmatprep.mubr.bf16.mxu0 %v4168
  %4325 = vmatmul.mubr.bf16.gmra.mrb[0].mxu0 %v4167
  %v4326 = vpop.f32.mrb[0].mxu0
  %v4327 = vadd.f32 0.0, %v4326
  %v4328 = vpop.f32.mrb[0].mxu0
  %v4329 = vadd.f32 0.0, %v4328
  %v4330 = vpop.f32.mrb[0].mxu0
  %v4331 = vpop.f32.mrb[0].mxu0
  %4332 = vdwg.mxu0
  %v4333 = vadd.f32 %v4159, %v4204
  %v4334 = vadd.f32 %v4160, %v4206
  %v4335 = vadd.f32 %v4161, %v4245
  %v4336 = vadd.f32 %v4162, %v4247
  %v4337 = vadd.f32 %v4163, %v4286
  %v4338 = vadd.f32 %v4164, %v4288
  %v4339 = vadd.f32 %v4165, %v4327
  %v4340 = vadd.f32 %v4166, %v4329
  %v4341 = vtanh.pop %v4333
  %v4342 = vtanh.pop %v4334
  %v4343 = vmul.f32 %v4341, 0.5
  %v4344 = vmul.f32 %v4342, 0.5
  %v4345 = vadd.f32 %v4343, 0.5
  %v4346 = vadd.f32 %v4344, 0.5
  %v4347 = vtanh.pop %v4335
  %v4348 = vtanh.pop %v4336
  %v4349 = vmul.f32 %v4347, 0.5
  %v4350 = vmul.f32 %v4348, 0.5
  %v4351 = vadd.f32 %v4349, 0.5
  %v4352 = vadd.f32 %v4350, 0.5
  %v4353 = vtanh.pop %v4337
  %v4354 = vtanh.pop %v4338
  %v4355 = vtanh.pop %v4339
  %v4356 = vtanh.pop %v4340
  %v4357 = vmul.f32 %v4355, 0.5
  %v4358 = vmul.f32 %v4356, 0.5
  %v4359 = vadd.f32 %v4357, 0.5
  %v4360 = vadd.f32 %v4358, 0.5
  %v4361 = vmul.f32 %v4351, %v4156
  %v4362 = vmul.f32 %v4352, %v4157
  %v4363 = vmul.f32 %v4345, %v4353
  %v4364 = vmul.f32 %v4346, %v4354
  %v4365 = vadd.f32 %v4361, %v4363
  %v4366 = vadd.f32 %v4362, %v4364
  %v4367 = vtanh.pop %v4365
  %v4368 = vtanh.pop %v4366
  %v4369 = vmul.f32 %v4359, %v4367
  %v4370 = vmul.f32 %v4360, %v4368
  %vm4371 = vcmp.gt.s32.totalorder %v939, 11
  %v4372 = vsel %vm4371, 1, 0
  %4373 = vset.pattern.permute.xlu0 0
  %4374 = vperm.xlu0 %4373, %v4372
  %v4375 = vpop.permute.xlu0 %4374
  %vm4376 = vcmp.eq.s32.totalorder %v4375, 1
  %v4377 = vsel %vm4376, %v4369, %v4154
  %v4378 = vsel %vm4376, %v4370, %v4155
  %v4379 = vpack.c.bf16 %v4377, %v4377
  %v4380 = vpack.c.bf16 %v4378, %v4378
  %v4381 = vld [vmem:[%s5] sm:$0xf]
  %v4382 = vld [vmem:[%s5 + $0x4] sm:$0xf]
  %v4383 = vld [vmem:[%s5 + $0x8] sm:$0xf]
  %v4384 = vld [vmem:[%s5 + $0xc] sm:$0xf]
  %v4385 = vld [vmem:[%s5 + $0x10] sm:$0xf]
  %v4386 = vld [vmem:[%s5 + $0x14] sm:$0xf]
  %v4387 = vld [vmem:[%s5 + $0x18] sm:$0xf]
  %v4388 = vld [vmem:[%s5 + $0x1c] sm:$0xf]
  %v4389 = vld [vmem:[%s5 + $0x20] sm:$0xf]
  %v4390 = vld [vmem:[%s5 + $0x24] sm:$0xf]
  %v4391 = vld [vmem:[%s5 + $0x28] sm:$0xf]
  %v4392 = vld [vmem:[%s5 + $0x2c] sm:$0xf]
  %v4393 = vld [vmem:[%s5 + $0x30] sm:$0xf]
  %v4394 = vld [vmem:[%s5 + $0x34] sm:$0xf]
  %v4395 = vld [vmem:[%s5 + $0x38] sm:$0xf]
  %v4396 = vld [vmem:[%s5 + $0x3c] sm:$0xf]
  %v4397 = vld [vmem:[%s5 + $0x40] sm:$0xf]
  %v4398 = vld [vmem:[%s5 + $0x44] sm:$0xf]
  %v4399 = vld [vmem:[%s5 + $0x48] sm:$0xf]
  %v4400 = vld [vmem:[%s5 + $0x4c] sm:$0xf]
  %v4401 = vld [vmem:[%s5 + $0x50] sm:$0xf]
  %v4402 = vld [vmem:[%s5 + $0x54] sm:$0xf]
  %v4403 = vld [vmem:[%s5 + $0x58] sm:$0xf]
  %v4404 = vld [vmem:[%s5 + $0x5c] sm:$0xf]
  %v4405 = vld [vmem:[%s5 + $0x60] sm:$0xf]
  %v4406 = vld [vmem:[%s5 + $0x64] sm:$0xf]
  %v4407 = vld [vmem:[%s5 + $0x68] sm:$0xf]
  %v4408 = vld [vmem:[%s5 + $0x6c] sm:$0xf]
  %v4409 = vld [vmem:[%s5 + $0x70] sm:$0xf]
  %v4410 = vld [vmem:[%s5 + $0x74] sm:$0xf]
  %v4411 = vld [vmem:[%s5 + $0x78] sm:$0xf]
  %v4412 = vld [vmem:[%s5 + $0x7c] sm:$0xf]
  %v4413 = vld [vmem:[%s6] sm:$0x1]
  %v4415 = vlaneseq
  %v4416 = vshrl.u32 %v4415, 7
  %v4417 = vsub.s32 0, %v4416
  %v4418 = vrot.slane %v4413, %v4417
  %v4452 = vunpack.c.l.b16 %v4381
  %v4453 = vunpack.c.l.b16 %v4382
  %v4454 = vunpack.c.l.b16 %v4383
  %v4455 = vunpack.c.l.b16 %v4384
  %v4456 = vunpack.c.l.b16 %v4385
  %v4457 = vunpack.c.l.b16 %v4386
  %v4458 = vunpack.c.l.b16 %v4387
  %v4459 = vunpack.c.l.b16 %v4388
  %v4460 = vunpack.c.l.b16 %v4389
  %v4461 = vunpack.c.l.b16 %v4390
  %v4462 = vunpack.c.l.b16 %v4391
  %v4463 = vunpack.c.l.b16 %v4392
  %v4464 = vunpack.c.l.b16 %v4393
  %v4465 = vunpack.c.l.b16 %v4394
  %v4466 = vunpack.c.l.b16 %v4395
  %v4467 = vunpack.c.l.b16 %v4396
  %v4468 = vunpack.c.l.b16 %v4397
  %v4469 = vunpack.c.l.b16 %v4398
  %v4470 = vunpack.c.l.b16 %v4399
  %v4471 = vunpack.c.l.b16 %v4400
  %v4472 = vunpack.c.l.b16 %v4401
  %v4473 = vunpack.c.l.b16 %v4402
  %v4474 = vunpack.c.l.b16 %v4403
  %v4475 = vunpack.c.l.b16 %v4404
  %v4476 = vunpack.c.l.b16 %v4405
  %v4477 = vunpack.c.l.b16 %v4406
  %v4478 = vunpack.c.l.b16 %v4407
  %v4479 = vunpack.c.l.b16 %v4408
  %v4480 = vunpack.c.l.b16 %v4409
  %v4481 = vunpack.c.l.b16 %v4410
  %v4482 = vunpack.c.l.b16 %v4411
  %v4483 = vunpack.c.l.b16 %v4412
  %v4484 = vpack.c.b16 %v4453, %v4452
  %v4485 = vpack.c.b16 %v4455, %v4454
  %v4486 = vpack.c.b16 %v4457, %v4456
  %v4487 = vpack.c.b16 %v4459, %v4458
  %v4488 = vpack.c.b16 %v4461, %v4460
  %v4489 = vpack.c.b16 %v4463, %v4462
  %v4490 = vpack.c.b16 %v4465, %v4464
  %v4491 = vpack.c.b16 %v4467, %v4466
  %v4492 = vpack.c.b16 %v4469, %v4468
  %v4493 = vpack.c.b16 %v4471, %v4470
  %v4494 = vpack.c.b16 %v4473, %v4472
  %v4495 = vpack.c.b16 %v4475, %v4474
  %v4496 = vpack.c.b16 %v4477, %v4476
  %v4497 = vpack.c.b16 %v4479, %v4478
  %v4498 = vpack.c.b16 %v4481, %v4480
  %v4499 = vpack.c.b16 %v4483, %v4482
  %4516 = vmatprep.subr.bf16.mxu0 0
  %4517 = vmatpush1.bf16.msra.mxu0 %v4484
  %4518 = vmatprep.subr.bf16.mxu0 0
  %4519 = vmatpush1.bf16.msra.mxu0 %v4485
  %4520 = vmatprep.subr.bf16.mxu0 0
  %4521 = vmatpush1.bf16.msra.mxu0 %v4486
  %4522 = vmatprep.subr.bf16.mxu0 0
  %4523 = vmatpush1.bf16.msra.mxu0 %v4487
  %4524 = vmatprep.subr.bf16.mxu0 0
  %4525 = vmatpush1.bf16.msra.mxu0 %v4488
  %4526 = vmatprep.subr.bf16.mxu0 0
  %4527 = vmatpush1.bf16.msra.mxu0 %v4489
  %4528 = vmatprep.subr.bf16.mxu0 0
  %4529 = vmatpush1.bf16.msra.mxu0 %v4490
  %4530 = vmatprep.subr.bf16.mxu0 0
  %4531 = vmatpush1.bf16.msra.mxu0 %v4491
  %4532 = vmatprep.subr.bf16.mxu0 0
  %4533 = vmatpush1.bf16.msra.mxu0 %v4492
  %4534 = vmatprep.subr.bf16.mxu0 0
  %4535 = vmatpush1.bf16.msra.mxu0 %v4493
  %4536 = vmatprep.subr.bf16.mxu0 0
  %4537 = vmatpush1.bf16.msra.mxu0 %v4494
  %4538 = vmatprep.subr.bf16.mxu0 0
  %4539 = vmatpush1.bf16.msra.mxu0 %v4495
  %4540 = vmatprep.subr.bf16.mxu0 0
  %4541 = vmatpush1.bf16.msra.mxu0 %v4496
  %4542 = vmatprep.subr.bf16.mxu0 0
  %4543 = vmatpush1.bf16.msra.mxu0 %v4497
  %4544 = vmatprep.subr.bf16.mxu0 0
  %4545 = vmatpush1.bf16.msra.mxu0 %v4498
  %4546 = vmatprep.subr.bf16.mxu0 0
  %4547 = vmatpush1.bf16.msra.mxu0 %v4499
  %4548 = vmatprep.mubr.bf16.mxu0 %v4380
  %4549 = vmatmul.mubr.bf16.gmra.mrb[0].mxu0 %v4379
  %v4550 = vpop.f32.mrb[0].mxu0
  %v4551 = vadd.f32 %v4418, %v4550
  %v4552 = vpop.f32.mrb[0].mxu0
  %v4553 = vpop.f32.mrb[0].mxu0
  %v4554 = vpop.f32.mrb[0].mxu0
  %4555 = vdwg.mxu0
  %4556 = vmax.xlane.f32.xlu0 %v4551
  %v4557 = vpop.xlane.xlu0 %4556
  %v4558 = vsub.f32 %v4551, %v4557
  %v4559 = vmul.f32 %v4558, 1.442695
  %v4560 = vpow.pop %v4559
  %4561 = vadd.xlane.f32.xlu0 %v4560
  %v4562 = vpop.xlane.xlu0 %4561
  %v4563 = vlog2.pop %v4562
  %v4564 = vmul.f32 %v4563, 0.6931472
  %v4565 = vsub.f32 %v4558, %v4564
  %4566 = vst [vmem:[%s7] sm:$0xff] %v4565
  // Predicated region
  $region30: #{lstm_forward.1} parent=0 // pred_check
    _
  $region31: #{lstm_forward.1} parent=0 // pred_check_branch
    %4568 = sbr.rel (0) target = $region33
  $region32: #{lstm_forward.1} parent=0 // pred_region
    _
  $region33: #{lstm_forward.1} parent=0 // pred_fallthru
    _
  // Predicated region
  $region34: #{lstm_forward.1} parent=0 // pred_check
    _
  $region35: #{lstm_forward.1} parent=0 // pred_check_branch
    %4570 = sbr.rel (0) target = $region37
  $region36: #{lstm_forward.1} parent=0 // pred_region
    _
  $region37: #{lstm_forward.1} parent=0 // pred_fallthru
    _

</llo_original>
